<compile_context>
chip_gen: v7x
topology: tpu7x:2x2x1
jax: 0.10.0
libtpu: 0.0.40
codegen_flags: <defaults>
</compile_context>

<pallas_src>
import numpy as np
import jax
import jax.numpy as jnp
from jax import lax
from jax.experimental import pallas as pl
from jax.experimental.pallas import tpu as pltpu

# ----------------------------- model hyper-params ---------------------------
DIM = 32            # hidden dim
DIM_D = 16          # drug annotation feature dim
DIM_P = 16          # protein annotation feature dim
DIM_C = DIM         # drug relational node-feature dim
DIM_T = DIM         # protein relational node-feature dim
N_FINGERPRINT = 20
N_WORD = 20
N_C = 6             # number of compounds (global)
N_P = 6             # number of proteins (global)
N_ATOMS = 10        # atoms per compound
N_WORDS = 12        # words per protein
WINDOW = 2
KSIZE = 2 * WINDOW + 1
LAYER_GNN = 2
LAYER_CNN = 2
LAYER_GCN = 2
BATCH = 4

NCA = N_C * N_ATOMS   # 60 stacked atom rows
NPW = N_P * N_WORDS   # 72 stacked word rows

# ------------------- trace-time constants (numpy, constant-folded) ----------
_rC = np.arange(N_C)[:, None]
_cC = np.arange(NCA)[None, :]
POOL_C = (((_cC >= _rC * N_ATOMS) & (_cC < (_rC + 1) * N_ATOMS))
          / float(N_ATOMS)).astype(np.float32)                 # (N_C, NCA)

_rP = np.arange(N_P)[:, None]
_cP = np.arange(NPW)[None, :]
POOL_P = (((_cP >= _rP * N_WORDS) & (_cP < (_rP + 1) * N_WORDS))
          / float(N_WORDS)).astype(np.float32)                 # (N_P, NPW)

# per-shift row-validity mask: source row (i + a - WINDOW) must stay inside the
# same protein block (exact zero padding along the word axis, no bleed).
_wpos = np.arange(NPW) % N_WORDS
CMASK = np.stack(
    [((_wpos + a - WINDOW >= 0) & (_wpos + a - WINDOW < N_WORDS))
     for a in range(KSIZE)], axis=1).astype(np.float32)         # (NPW, KSIZE)

# banded feature-shift templates used to build the conv matrices in the wrapper
_k = np.arange(DIM)[:, None]
_j = np.arange(DIM)[None, :]
COL_SHIFT = np.stack([(_k - _j == b - WINDOW) for b in range(KSIZE)],
                     axis=0).astype(np.float32)                 # (KSIZE, DIM, DIM)


# ----------------------------- small wrapper helpers -------------------------
def _block_diag(blocks):
    """(P, n, n) -> (P*n, P*n) block-diagonal (exact: 0/1 multiply + reshape)."""
    p, n, _ = blocks.shape
    eye = jnp.eye(p, dtype=blocks.dtype)
    return (eye[:, None, :, None] * blocks[:, :, None, :]).reshape(p * n, p * n)


def _diag2(a, b):
    """[[a, 0], [0, b]] for two 2-D blocks (possibly non-square)."""
    a = jnp.asarray(a, jnp.float32)
    b = jnp.asarray(b, jnp.float32)
    za = jnp.zeros((a.shape[0], b.shape[1]), jnp.float32)
    zb = jnp.zeros((b.shape[0], a.shape[1]), jnp.float32)
    return jnp.concatenate(
        [jnp.concatenate([a, za], axis=1),
         jnp.concatenate([zb, b], axis=1)], axis=0)


def _pack_slab(entries):
    """Pack a list of (name, 2-D array with <=128 cols) into one lane-dense
    (R, 128) f32 slab.  Each section starts at an 8-aligned row offset.
    Returns (slab, {name: (row_offset, rows, cols)})."""
    parts, off, r = [], {}, 0
    for name, arr in entries:
        arr = jnp.asarray(arr, jnp.float32)
        rows, cols = arr.shape
        rpad = (-rows) % 8
        off[name] = (r, rows, cols)
        parts.append(jnp.pad(arr, ((0, rpad), (0, 128 - cols))))
        r += rows + rpad
    return jnp.concatenate(parts, axis=0), off


# ----------------------------- fused Pallas kernel ---------------------------
def _make_kernel(off_c, off_w):
    """Kernel factory: row offsets into the two slabs are static Python ints."""

    def kernel(cdat_ref, wts_ref, mcat_ref, out_ref):
        f32 = jnp.float32

        def cget(name, row0=0, nrows=None):
            r, n, c = off_c[name]
            return cdat_ref[pl.ds(r + row0, n if nrows is None else nrows), :c]

        def wget(name, row0=0, nrows=None):
            r, n, c = off_w[name]
            return wts_ref[pl.ds(r + row0, n if nrows is None else nrows), :c]

        # ---------- drug intrinsic: GNN over the stacked (NCA, DIM) atom slab ----
        xs = cget("xs0")                                   # (60, 32) embedded atoms
        a_blk = cget("adj_blk")                            # (60, 60) block-diag adj
        for l in range(LAYER_GNN):
            w_l = wget("gnn_w", l * DIM, DIM)              # (32, 32)
            b_l = wget("gnn_b", l, 1)                      # (1, 32)
            hs = jnp.maximum(
                jnp.dot(xs, w_l, preferred_element_type=f32) + b_l, 0.0)
            xs = xs + jnp.dot(a_blk, hs, preferred_element_type=f32)
        xs_c_int = jnp.dot(cget("pool_c"), xs, preferred_element_type=f32)  # (6,32)

        # ---------- protein intrinsic: CNN = wide matmul + XLU rolls + masks -----
        ys = cget("ys0")                                   # (72, 32) embedded words
        cmask = cget("cmask")                              # (72, KSIZE) boundary mask
        for l in range(LAYER_CNN):
            # one lane-dense matmul per layer: (72,32) @ (32, KSIZE*32)
            t = jnp.dot(ys, mcat_ref[l], preferred_element_type=f32)   # (72, 160)
            acc = t[:, WINDOW * DIM:(WINDOW + 1) * DIM]    # a == WINDOW: no shift
            for a in range(KSIZE):
                if a == WINDOW:
                    continue
                term = t[:, a * DIM:(a + 1) * DIM]
                shifted = pltpu.roll(term, shift=(WINDOW - a) % NPW, axis=0)
                acc = acc + cmask[:, a:a + 1] * shifted
            ys = jnp.maximum(acc + cget("cnn_bb", l, 1), 0.0)
        xs_p_int = jnp.dot(cget("pool_p"), ys, preferred_element_type=f32)  # (6,32)

        # ---------- relational embeddings: both GCNs fused (block-diagonal) ------
        xg = cget("xg0")                                   # (12, 64)
        ag = cget("a_rel")                                 # (12, 12)
        for l in range(LAYER_GCN):
            hs = jnp.dot(ag, xg, preferred_element_type=f32)
            xg = jnp.maximum(
                jnp.dot(hs, wget("gcn_w", l * 2 * DIM, 2 * DIM),
                        preferred_element_type=f32) + wget("gcn_b", l, 1), 0.0)
        xc_rel = xg[:N_C, :DIM]                            # (6, 32) drug block
        xp_rel = xg[N_C:, DIM:]                            # (6, 32) protein block

        # ---------- annotation MLPs: drug + protein fused (block-diagonal) -------
        h = cget("feat")                                   # (2*BATCH, 32)
        h = jnp.maximum(jnp.dot(h, wget("mlp_w1"), preferred_element_type=f32)
                        + wget("mlp_b1"), 0.0)             # (8, 128)
        h = jnp.maximum(jnp.dot(h, wget("mlp_w2"), preferred_element_type=f32)
                        + wget("mlp_b2"), 0.0)             # (8, 64)
        h = jnp.maximum(jnp.dot(h, wget("mlp_w3"), preferred_element_type=f32)
                        + wget("mlp_b3"), 0.0)             # (8, 64)
        cf = h[:BATCH, :DIM]                               # (4, 32)
        pf = h[BATCH:, DIM:]                               # (4, 32)

        # ---------- batch gathers via tiny one-hot matmuls -----------------------
        sel_c = cget("sel_c")                              # (4, 6)
        sel_p = cget("sel_p")                              # (4, 6)
        c_int = jnp.dot(sel_c, xs_c_int, preferred_element_type=f32)
        c_rel = jnp.dot(sel_c, xc_rel, preferred_element_type=f32)
        p_int = jnp.dot(sel_p, xs_p_int, preferred_element_type=f32)
        p_rel = jnp.dot(sel_p, xp_rel, preferred_element_type=f32)

        # ---------- output head: single K=192 matmul, 2 more layers, sigmoid -----
        cat = jnp.concatenate([c_int, c_rel, cf, p_int, p_rel, pf], axis=1)  # (4,192)
        h = jnp.maximum(jnp.dot(cat, wget("o_w1"), preferred_element_type=f32)
                        + wget("o_b1"), 0.0)
        h = jnp.maximum(jnp.dot(h, wget("o_w2"), preferred_element_type=f32)
                        + wget("o_b2"), 0.0)
        h = jnp.maximum(jnp.dot(h, wget("o_w3"), preferred_element_type=f32)
                        + wget("o_b3"), 0.0)
        logits = jnp.dot(h, wget("w_int"), preferred_element_type=f32) + wget("b_int")
        out_ref[...] = 1.0 / (1.0 + jnp.exp(-logits))      # exact sigmoid in [0, 1]

    return kernel


# ----------------------------- wrapper ---------------------------------------
@jax.jit
def deepera_forward(params, data, idx_c, idx_p):
    f32 = jnp.float32
    idx_c = idx_c.astype(jnp.int32)
    idx_p = idx_p.astype(jnp.int32)

    # ---- hoisted embedding lookups / gathers (XLA-side prep, fused into jit) ----
    xs0 = params["embed_fp"][data["compounds"].reshape(-1)]          # (NCA, DIM)
    ys0 = params["embed_word"][data["proteins"].reshape(-1)]         # (NPW, DIM)
    adj_blk = _block_diag(data["adjacencies"])                        # (NCA, NCA)
    sel_c = (idx_c[:, None] == jnp.arange(N_C)[None, :]).astype(f32)  # (B, N_C)
    sel_p = (idx_p[:, None] == jnp.arange(N_P)[None, :]).astype(f32)  # (B, N_P)
    cnn_bb = jnp.broadcast_to(params["cnn_b"].reshape(LAYER_CNN, 1),
                              (LAYER_CNN, DIM))                       # (2, DIM)

    # fused relational GCN inputs (block-diagonal, exact for extracted blocks)
    a_rel = _diag2(data["A_c"], data["A_p"])                          # (12, 12)
    xg0 = _diag2(data["Xs_c"], data["Xs_p"])                          # (12, 64)
    gcn_w_f = jnp.concatenate(
        [_diag2(params["gcn_d_w"][l], params["gcn_p_w"][l])
         for l in range(LAYER_GCN)], axis=0)                          # (128, 64)
    gcn_b_f = jnp.concatenate([params["gcn_d_b"], params["gcn_p_b"]], axis=1)

    # fused annotation MLP (drug rows 0..B-1, protein rows B..2B-1)
    (fd_w1, fd_b1), (fd_w2, fd_b2), (fd_w3, fd_b3) = params["fea_d"]
    (fp_w1, fp_b1), (fp_w2, fp_b2), (fp_w3, fp_b3) = params["fea_p"]
    feat = _diag2(data["drug_feat"][idx_c], data["protein_feat"][idx_p])  # (8, 32)
    w1f = _diag2(fd_w1, fp_w1); b1f = jnp.concatenate([fd_b1, fp_b1], axis=1)
    w2f = _diag2(fd_w2, fp_w2); b2f = jnp.concatenate([fd_b2, fp_b2], axis=1)
    w3f = _diag2(fd_w3, fp_w3); b3f = jnp.concatenate([fd_b3, fp_b3], axis=1)

    # precomputed banded conv matrices: mcat[l, k, a*DIM + j] = M_a(l)[k, j]
    # (elementwise 0/1 multiply + sum: exact, no matmul precision involved)
    wconv = params["cnn_w"].reshape(LAYER_CNN, KSIZE, KSIZE).astype(f32)
    m = (wconv[:, :, :, None, None]
         * jnp.asarray(COL_SHIFT, f32)[None, None, :, :, :]).sum(axis=2)
    mcat = jnp.transpose(m, (0, 2, 1, 3)).reshape(LAYER_CNN, DIM, KSIZE * DIM)

    (o_w1, o_b1), (o_w2, o_b2), (o_w3, o_b3) = params["w_out"]

    # ---- consolidate everything into two lane-dense (R, 128) slabs ----
    cdat, off_c = _pack_slab([
        ("xs0", xs0), ("ys0", ys0), ("adj_blk", adj_blk),
        ("pool_c", POOL_C), ("pool_p", POOL_P),
        ("sel_c", sel_c), ("sel_p", sel_p),
        ("cmask", CMASK), ("cnn_bb", cnn_bb),
        ("a_rel", a_rel), ("xg0", xg0), ("feat", feat),
    ])
    wts, off_w = _pack_slab([
        ("gnn_w", params["gnn_w"].reshape(LAYER_GNN * DIM, DIM)),
        ("gnn_b", params["gnn_b"]),
        ("gcn_w", gcn_w_f), ("gcn_b", gcn_b_f),
        ("mlp_w1", w1f), ("mlp_b1", b1f),
        ("mlp_w2", w2f), ("mlp_b2", b2f),
        ("mlp_w3", w3f), ("mlp_b3", b3f),
        ("o_w1", o_w1), ("o_b1", o_b1),
        ("o_w2", o_w2), ("o_b2", o_b2),
        ("o_w3", o_w3), ("o_b3", o_b3),
        ("w_int", params["w_inter"]), ("b_int", params["b_inter"]),
    ])

    # Single launch, no grid: total live data < 1 MiB, latency/launch bound.
    # TODO(synk): if many independent forward passes are run, add a leading
    # "parallel" grid axis over request groups so v7x's 2nd TensorCore is used.
    return pl.pallas_call(
        _make_kernel(off_c, off_w),
        out_shape=jax.ShapeDtypeStruct((BATCH, 2), jnp.float32),
        in_specs=[pl.BlockSpec(memory_space=pltpu.MemorySpace.VMEM)] * 3,
        out_specs=pl.BlockSpec(memory_space=pltpu.MemorySpace.VMEM),
        compiler_params=pltpu.CompilerParams(vmem_limit_bytes=4 * 1024 * 1024),
    )(cdat, wts, mcat)


# ----------------------------- pure-JAX reference ----------------------------
def _reference_forward(params, data, idx_c, idx_p):
    # intrinsic drug embedding (per-compound GNN, mean over atoms)
    xs = params["embed_fp"][data["compounds"]]                    # (N_C, N_ATOMS, DIM)
    for l in range(LAYER_GNN):
        hs = jax.nn.relu(jnp.einsum("cad,de->cae", xs, params["gnn_w"][l])
                         + params["gnn_b"][l])
        xs = xs + jnp.einsum("cab,cbd->cad", data["adjacencies"], hs)
    xs_c_int = xs.mean(axis=1)
    # intrinsic protein embedding (per-protein same-padded 5x5 conv, mean over words)
    ys = params["embed_word"][data["proteins"]]                   # (N_P, N_WORDS, DIM)
    for l in range(LAYER_CNN):
        w = params["cnn_w"].reshape(LAYER_CNN, KSIZE, KSIZE)[l]
        pad = jnp.pad(ys, ((0, 0), (WINDOW, WINDOW), (WINDOW, WINDOW)))
        acc = jnp.zeros_like(ys)
        for a in range(KSIZE):
            for b in range(KSIZE):
                acc = acc + w[a, b] * pad[:, a:a + N_WORDS, b:b + DIM]
        ys = jax.nn.relu(acc + params["cnn_b"][l])
    xs_p_int = ys.mean(axis=1)
    # relational embeddings
    xc = data["Xs_c"]
    for l in range(LAYER_GCN):
        xc = jax.nn.relu(jnp.dot(data["A_c"], xc) @ params["gcn_d_w"][l]
                         + params["gcn_d_b"][l])
    xp = data["Xs_p"]
    for l in range(LAYER_GCN):
        xp = jax.nn.relu(jnp.dot(data["A_p"], xp) @ params["gcn_p_w"][l]
                         + params["gcn_p_b"][l])

    def mlp(x, layers):
        for w, b in layers:
            x = jax.nn.relu(x @ w + b)
        return x

    cf = mlp(data["drug_feat"][idx_c], params["fea_d"])
    pf = mlp(data["protein_feat"][idx_p], params["fea_p"])
    cat = jnp.concatenate([xs_c_int[idx_c], xc[idx_c], cf,
                           xs_p_int[idx_p], xp[idx_p], pf], axis=1)
    h = mlp(cat, params["w_out"])
    return jax.nn.sigmoid(h @ params["w_inter"] + params["b_inter"])


# ----------------------------- init ------------------------------------------
def init_params(key):
    def rnd(k, shape):
        return (0.1 * jax.random.normal(k, shape)).astype(jnp.float32)

    ks = iter(jax.random.split(key, 40))
    p = {}
    p["embed_fp"] = rnd(next(ks), (N_FINGERPRINT, DIM))
    p["embed_word"] = rnd(next(ks), (N_WORD, DIM))
    p["fea_d"] = tuple(
        (rnd(next(ks), (i, o)), rnd(next(ks), (1, o)))
        for i, o in ((DIM_D, 2 * DIM), (2 * DIM, DIM), (DIM, DIM)))
    p["fea_p"] = tuple(
        (rnd(next(ks), (i, o)), rnd(next(ks), (1, o)))
        for i, o in ((DIM_P, 2 * DIM), (2 * DIM, DIM), (DIM, DIM)))
    p["gnn_w"] = rnd(next(ks), (LAYER_GNN, DIM, DIM))
    p["gnn_b"] = rnd(next(ks), (LAYER_GNN, DIM))
    p["cnn_w"] = rnd(next(ks), (LAYER_CNN * KSIZE * KSIZE,))   # flat 5x5 kernels
    p["cnn_b"] = rnd(next(ks), (LAYER_CNN,))
    p["gcn_d_w"] = rnd(next(ks), (LAYER_GCN, DIM_C, DIM))
    p["gcn_d_b"] = rnd(next(ks), (LAYER_GCN, DIM))
    p["gcn_p_w"] = rnd(next(ks), (LAYER_GCN, DIM_T, DIM))
    p["gcn_p_b"] = rnd(next(ks), (LAYER_GCN, DIM))
    p["w_out"] = tuple(
        (rnd(next(ks), (i, o)), rnd(next(ks), (1, o)))
        for i, o in ((6 * DIM, 4 * DIM), (4 * DIM, 4 * DIM), (4 * DIM, 4 * DIM)))
    p["w_inter"] = rnd(next(ks), (4 * DIM, 2))
    p["b_inter"] = rnd(next(ks), (1, 2))
    return p


def make_data(key):
    def sym_adj(k, n, batch=None):
        shape = (n, n) if batch is None else (batch, n, n)
        a = (jax.random.uniform(k, shape) > 0.7).astype(jnp.float32)
        at = a.T if batch is None else jnp.transpose(a, (0, 2, 1))
        eye = jnp.eye(n, dtype=jnp.float32)
        if batch is not None:
            eye = eye[None]
        return jnp.minimum(a + at + eye, 1.0)

    ks = iter(jax.random.split(key, 16))
    d = {}
    d["compounds"] = jax.random.randint(next(ks), (N_C, N_ATOMS), 0, N_FINGERPRINT)
    d["adjacencies"] = sym_adj(next(ks), N_ATOMS, batch=N_C)
    d["proteins"] = jax.random.randint(next(ks), (N_P, N_WORDS), 0, N_WORD)
    d["Xs_c"] = (0.1 * jax.random.normal(next(ks), (N_C, DIM_C))).astype(jnp.float32)
    d["Xs_p"] = (0.1 * jax.random.normal(next(ks), (N_P, DIM_T))).astype(jnp.float32)
    d["A_c"] = sym_adj(next(ks), N_C)
    d["A_p"] = sym_adj(next(ks), N_P)
    d["drug_feat"] = (0.1 * jax.random.normal(next(ks), (N_C, DIM_D))).astype(jnp.float32)
    d["protein_feat"] = (0.1 * jax.random.normal(next(ks), (N_P, DIM_P))).astype(jnp.float32)
    idx_c = jax.random.randint(next(ks), (BATCH,), 0, N_C)
    idx_p = jax.random.randint(next(ks), (BATCH,), 0, N_P)
    return d, idx_c, idx_p


# TODO(synk): travInvolve's data-dependent pruning only restricts *which* intrinsic
# embeddings get computed (a superset of the rows later gathered); computing them
# densely is output-equivalent, so the traversal is not implemented as a kernel.
# TODO(synk): the loss / softmax / argmax bookkeeping in DeepERA.__call__ is
# host-side training glue and is intentionally not part of the kernel.

if __name__ == "__main__":
    key = jax.random.PRNGKey(0)
    kp, kd = jax.random.split(key)
    params = init_params(kp)
    data, idx_c, idx_p = make_data(kd)

    out = deepera_forward(params, data, idx_c, idx_p)
    out = jax.block_until_ready(out)
    assert out.shape == (BATCH, 2)
    assert bool(jnp.all((out >= 0.0) & (out <= 1.0)))

    with jax.default_matmul_precision("float32"):
        ref = _reference_forward(params, data, idx_c, idx_p)
    assert bool(jnp.max(jnp.abs(out - ref)) < 2e-3), "kernel/reference mismatch"
    print("KERNEL_OK")
</pallas_src>

<mosaic_0001>
module attributes {stable_mosaic.version = 11 : i64} {
  func.func @kernel(%arg0: memref<352x128xf32, #tpu.memory_space<vmem>>, %arg1: memref<1064x128xf32, #tpu.memory_space<vmem>>, %arg2: memref<2x32x160xf32, #tpu.memory_space<vmem>>, %arg3: memref<4x2xf32, #tpu.memory_space<vmem>>) attributes {dimension_semantics = [], scalar_prefetch = 0 : i64, scratch_operands = 0 : i64, tpu.core_type = #tpu.core_type<tc>} {
    %c0 = arith.constant 0 : index
    %c0_0 = arith.constant 0 : index
    %0 = vector.load %arg0[%c0, %c0_0] : memref<352x128xf32, #tpu.memory_space<vmem>>, vector<60x32xf32>
    %c136 = arith.constant 136 : index
    %c0_1 = arith.constant 0 : index
    %1 = vector.load %arg0[%c136, %c0_1] : memref<352x128xf32, #tpu.memory_space<vmem>>, vector<60x60xf32>
    %c0_2 = arith.constant 0 : index
    %c0_3 = arith.constant 0 : index
    %2 = vector.load %arg1[%c0_2, %c0_3] : memref<1064x128xf32, #tpu.memory_space<vmem>>, vector<32x32xf32>
    %c64 = arith.constant 64 : index
    %c0_4 = arith.constant 0 : index
    %3 = vector.load %arg1[%c64, %c0_4] : memref<1064x128xf32, #tpu.memory_space<vmem>>, vector<1x32xf32>
    %cst = arith.constant dense<0.000000e+00> : vector<60x32xf32>
    %4 = tpu.matmul %0, %2, %cst {dimension_numbers = #tpu.dot_dimension_numbers<[1], [0], [0], [1], [0, 0, 1, 1], [], []>} : vector<60x32xf32>, vector<32x32xf32>, vector<60x32xf32> -> vector<60x32xf32>
    %5 = vector.broadcast %3 : vector<1x32xf32> to vector<60x32xf32>
    %6 = arith.addf %4, %5 : vector<60x32xf32>
    %cst_5 = arith.constant 0.000000e+00 : f32
    %7 = vector.broadcast %cst_5 : f32 to vector<60x32xf32>
    %8 = arith.maximumf %6, %7 : vector<60x32xf32>
    %cst_6 = arith.constant dense<0.000000e+00> : vector<60x32xf32>
    %9 = tpu.matmul %1, %8, %cst_6 {dimension_numbers = #tpu.dot_dimension_numbers<[1], [0], [0], [1], [0, 0, 1, 1], [], []>} : vector<60x60xf32>, vector<60x32xf32>, vector<60x32xf32> -> vector<60x32xf32>
    %10 = arith.addf %0, %9 : vector<60x32xf32>
    %c32 = arith.constant 32 : index
    %c0_7 = arith.constant 0 : index
    %11 = vector.load %arg1[%c32, %c0_7] : memref<1064x128xf32, #tpu.memory_space<vmem>>, vector<32x32xf32>
    %c65 = arith.constant 65 : index
    %c0_8 = arith.constant 0 : index
    %12 = vector.load %arg1[%c65, %c0_8] : memref<1064x128xf32, #tpu.memory_space<vmem>>, vector<1x32xf32>
    %cst_9 = arith.constant dense<0.000000e+00> : vector<60x32xf32>
    %13 = tpu.matmul %10, %11, %cst_9 {dimension_numbers = #tpu.dot_dimension_numbers<[1], [0], [0], [1], [0, 0, 1, 1], [], []>} : vector<60x32xf32>, vector<32x32xf32>, vector<60x32xf32> -> vector<60x32xf32>
    %14 = vector.broadcast %12 : vector<1x32xf32> to vector<60x32xf32>
    %15 = arith.addf %13, %14 : vector<60x32xf32>
    %cst_10 = arith.constant 0.000000e+00 : f32
    %16 = vector.broadcast %cst_10 : f32 to vector<60x32xf32>
    %17 = arith.maximumf %15, %16 : vector<60x32xf32>
    %cst_11 = arith.constant dense<0.000000e+00> : vector<60x32xf32>
    %18 = tpu.matmul %1, %17, %cst_11 {dimension_numbers = #tpu.dot_dimension_numbers<[1], [0], [0], [1], [0, 0, 1, 1], [], []>} : vector<60x60xf32>, vector<60x32xf32>, vector<60x32xf32> -> vector<60x32xf32>
    %19 = arith.addf %10, %18 : vector<60x32xf32>
    %c200 = arith.constant 200 : index
    %c0_12 = arith.constant 0 : index
    %20 = vector.load %arg0[%c200, %c0_12] : memref<352x128xf32, #tpu.memory_space<vmem>>, vector<6x60xf32>
    %cst_13 = arith.constant dense<0.000000e+00> : vector<6x32xf32>
    %21 = tpu.matmul %20, %19, %cst_13 {dimension_numbers = #tpu.dot_dimension_numbers<[1], [0], [0], [1], [0, 0, 1, 1], [], []>} : vector<6x60xf32>, vector<60x32xf32>, vector<6x32xf32> -> vector<6x32xf32>
    %c64_14 = arith.constant 64 : index
    %c0_15 = arith.constant 0 : index
    %22 = vector.load %arg0[%c64_14, %c0_15] : memref<352x128xf32, #tpu.memory_space<vmem>>, vector<72x32xf32>
    %c232 = arith.constant 232 : index
    %c0_16 = arith.constant 0 : index
    %23 = vector.load %arg0[%c232, %c0_16] : memref<352x128xf32, #tpu.memory_space<vmem>>, vector<72x5xf32>
    %c0_17 = arith.constant 0 : index
    %c0_18 = arith.constant 0 : index
    %c0_19 = arith.constant 0 : index
    %24 = vector.load %arg2[%c0_17, %c0_18, %c0_19] : memref<2x32x160xf32, #tpu.memory_space<vmem>>, vector<1x32x160xf32>
    %25 = vector.shape_cast %24 : vector<1x32x160xf32> to vector<32x160xf32>
    %cst_20 = arith.constant dense<0.000000e+00> : vector<72x160xf32>
    %26 = tpu.matmul %22, %25, %cst_20 {dimension_numbers = #tpu.dot_dimension_numbers<[1], [0], [0], [1], [0, 0, 1, 1], [], []>} : vector<72x32xf32>, vector<32x160xf32>, vector<72x160xf32> -> vector<72x160xf32>
    %27 = vector.extract_strided_slice %26 {offsets = [0, 64], sizes = [72, 32], strides = [1, 1]} : vector<72x160xf32> to vector<72x32xf32>
    %28 = vector.extract_strided_slice %26 {offsets = [0, 0], sizes = [72, 32], strides = [1, 1]} : vector<72x160xf32> to vector<72x32xf32>
    %c2_i32 = arith.constant 2 : i32
    %29 = tpu.dynamic_rotate %28 by %c2_i32 dim 0 : vector<72x32xf32>, i32 -> vector<72x32xf32>
    %30 = vector.extract_strided_slice %23 {offsets = [0, 0], sizes = [72, 1], strides = [1, 1]} : vector<72x5xf32> to vector<72x1xf32>
    %31 = vector.broadcast %30 : vector<72x1xf32> to vector<72x32xf32>
    %32 = arith.mulf %31, %29 : vector<72x32xf32>
    %33 = arith.addf %27, %32 : vector<72x32xf32>
    %34 = vector.extract_strided_slice %26 {offsets = [0, 32], sizes = [72, 32], strides = [1, 1]} : vector<72x160xf32> to vector<72x32xf32>
    %c1_i32 = arith.constant 1 : i32
    %35 = tpu.dynamic_rotate %34 by %c1_i32 dim 0 : vector<72x32xf32>, i32 -> vector<72x32xf32>
    %36 = vector.extract_strided_slice %23 {offsets = [0, 1], sizes = [72, 1], strides = [1, 1]} : vector<72x5xf32> to vector<72x1xf32>
    %37 = vector.broadcast %36 : vector<72x1xf32> to vector<72x32xf32>
    %38 = arith.mulf %37, %35 : vector<72x32xf32>
    %39 = arith.addf %33, %38 : vector<72x32xf32>
    %40 = vector.extract_strided_slice %26 {offsets = [0, 96], sizes = [72, 32], strides = [1, 1]} : vector<72x160xf32> to vector<72x32xf32>
    %c71_i32 = arith.constant 71 : i32
    %41 = tpu.dynamic_rotate %40 by %c71_i32 dim 0 : vector<72x32xf32>, i32 -> vector<72x32xf32>
    %42 = vector.extract_strided_slice %23 {offsets = [0, 3], sizes = [72, 1], strides = [1, 1]} : vector<72x5xf32> to vector<72x1xf32>
    %43 = vector.broadcast %42 : vector<72x1xf32> to vector<72x32xf32>
    %44 = arith.mulf %43, %41 : vector<72x32xf32>
    %45 = arith.addf %39, %44 : vector<72x32xf32>
    %46 = vector.extract_strided_slice %26 {offsets = [0, 128], sizes = [72, 32], strides = [1, 1]} : vector<72x160xf32> to vector<72x32xf32>
    %c70_i32 = arith.constant 70 : i32
    %47 = tpu.dynamic_rotate %46 by %c70_i32 dim 0 : vector<72x32xf32>, i32 -> vector<72x32xf32>
    %48 = vector.extract_strided_slice %23 {offsets = [0, 4], sizes = [72, 1], strides = [1, 1]} : vector<72x5xf32> to vector<72x1xf32>
    %49 = vector.broadcast %48 : vector<72x1xf32> to vector<72x32xf32>
    %50 = arith.mulf %49, %47 : vector<72x32xf32>
    %51 = arith.addf %45, %50 : vector<72x32xf32>
    %c304 = arith.constant 304 : index
    %c0_21 = arith.constant 0 : index
    %52 = vector.load %arg0[%c304, %c0_21] : memref<352x128xf32, #tpu.memory_space<vmem>>, vector<1x32xf32>
    %53 = vector.broadcast %52 : vector<1x32xf32> to vector<72x32xf32>
    %54 = arith.addf %51, %53 : vector<72x32xf32>
    %cst_22 = arith.constant 0.000000e+00 : f32
    %55 = vector.broadcast %cst_22 : f32 to vector<72x32xf32>
    %56 = arith.maximumf %54, %55 : vector<72x32xf32>
    %c1 = arith.constant 1 : index
    %c0_23 = arith.constant 0 : index
    %c0_24 = arith.constant 0 : index
    %57 = vector.load %arg2[%c1, %c0_23, %c0_24] : memref<2x32x160xf32, #tpu.memory_space<vmem>>, vector<1x32x160xf32>
    %58 = vector.shape_cast %57 : vector<1x32x160xf32> to vector<32x160xf32>
    %cst_25 = arith.constant dense<0.000000e+00> : vector<72x160xf32>
    %59 = tpu.matmul %56, %58, %cst_25 {dimension_numbers = #tpu.dot_dimension_numbers<[1], [0], [0], [1], [0, 0, 1, 1], [], []>} : vector<72x32xf32>, vector<32x160xf32>, vector<72x160xf32> -> vector<72x160xf32>
    %60 = vector.extract_strided_slice %59 {offsets = [0, 64], sizes = [72, 32], strides = [1, 1]} : vector<72x160xf32> to vector<72x32xf32>
    %61 = vector.extract_strided_slice %59 {offsets = [0, 0], sizes = [72, 32], strides = [1, 1]} : vector<72x160xf32> to vector<72x32xf32>
    %c2_i32_26 = arith.constant 2 : i32
    %62 = tpu.dynamic_rotate %61 by %c2_i32_26 dim 0 : vector<72x32xf32>, i32 -> vector<72x32xf32>
    %63 = vector.extract_strided_slice %23 {offsets = [0, 0], sizes = [72, 1], strides = [1, 1]} : vector<72x5xf32> to vector<72x1xf32>
    %64 = vector.broadcast %63 : vector<72x1xf32> to vector<72x32xf32>
    %65 = arith.mulf %64, %62 : vector<72x32xf32>
    %66 = arith.addf %60, %65 : vector<72x32xf32>
    %67 = vector.extract_strided_slice %59 {offsets = [0, 32], sizes = [72, 32], strides = [1, 1]} : vector<72x160xf32> to vector<72x32xf32>
    %c1_i32_27 = arith.constant 1 : i32
    %68 = tpu.dynamic_rotate %67 by %c1_i32_27 dim 0 : vector<72x32xf32>, i32 -> vector<72x32xf32>
    %69 = vector.extract_strided_slice %23 {offsets = [0, 1], sizes = [72, 1], strides = [1, 1]} : vector<72x5xf32> to vector<72x1xf32>
    %70 = vector.broadcast %69 : vector<72x1xf32> to vector<72x32xf32>
    %71 = arith.mulf %70, %68 : vector<72x32xf32>
    %72 = arith.addf %66, %71 : vector<72x32xf32>
    %73 = vector.extract_strided_slice %59 {offsets = [0, 96], sizes = [72, 32], strides = [1, 1]} : vector<72x160xf32> to vector<72x32xf32>
    %c71_i32_28 = arith.constant 71 : i32
    %74 = tpu.dynamic_rotate %73 by %c71_i32_28 dim 0 : vector<72x32xf32>, i32 -> vector<72x32xf32>
    %75 = vector.extract_strided_slice %23 {offsets = [0, 3], sizes = [72, 1], strides = [1, 1]} : vector<72x5xf32> to vector<72x1xf32>
    %76 = vector.broadcast %75 : vector<72x1xf32> to vector<72x32xf32>
    %77 = arith.mulf %76, %74 : vector<72x32xf32>
    %78 = arith.addf %72, %77 : vector<72x32xf32>
    %79 = vector.extract_strided_slice %59 {offsets = [0, 128], sizes = [72, 32], strides = [1, 1]} : vector<72x160xf32> to vector<72x32xf32>
    %c70_i32_29 = arith.constant 70 : i32
    %80 = tpu.dynamic_rotate %79 by %c70_i32_29 dim 0 : vector<72x32xf32>, i32 -> vector<72x32xf32>
    %81 = vector.extract_strided_slice %23 {offsets = [0, 4], sizes = [72, 1], strides = [1, 1]} : vector<72x5xf32> to vector<72x1xf32>
    %82 = vector.broadcast %81 : vector<72x1xf32> to vector<72x32xf32>
    %83 = arith.mulf %82, %80 : vector<72x32xf32>
    %84 = arith.addf %78, %83 : vector<72x32xf32>
    %c305 = arith.constant 305 : index
    %c0_30 = arith.constant 0 : index
    %85 = vector.load %arg0[%c305, %c0_30] : memref<352x128xf32, #tpu.memory_space<vmem>>, vector<1x32xf32>
    %86 = vector.broadcast %85 : vector<1x32xf32> to vector<72x32xf32>
    %87 = arith.addf %84, %86 : vector<72x32xf32>
    %cst_31 = arith.constant 0.000000e+00 : f32
    %88 = vector.broadcast %cst_31 : f32 to vector<72x32xf32>
    %89 = arith.maximumf %87, %88 : vector<72x32xf32>
    %c208 = arith.constant 208 : index
    %c0_32 = arith.constant 0 : index
    %90 = vector.load %arg0[%c208, %c0_32] : memref<352x128xf32, #tpu.memory_space<vmem>>, vector<6x72xf32>
    %cst_33 = arith.constant dense<0.000000e+00> : vector<6x32xf32>
    %91 = tpu.matmul %90, %89, %cst_33 {dimension_numbers = #tpu.dot_dimension_numbers<[1], [0], [0], [1], [0, 0, 1, 1], [], []>} : vector<6x72xf32>, vector<72x32xf32>, vector<6x32xf32> -> vector<6x32xf32>
    %c328 = arith.constant 328 : index
    %c0_34 = arith.constant 0 : index
    %92 = vector.load %arg0[%c328, %c0_34] : memref<352x128xf32, #tpu.memory_space<vmem>>, vector<12x64xf32>
    %c312 = arith.constant 312 : index
    %c0_35 = arith.constant 0 : index
    %93 = vector.load %arg0[%c312, %c0_35] : memref<352x128xf32, #tpu.memory_space<vmem>>, vector<12x12xf32>
    %cst_36 = arith.constant dense<0.000000e+00> : vector<12x64xf32>
    %94 = tpu.matmul %93, %92, %cst_36 {dimension_numbers = #tpu.dot_dimension_numbers<[1], [0], [0], [1], [0, 0, 1, 1], [], []>} : vector<12x12xf32>, vector<12x64xf32>, vector<12x64xf32> -> vector<12x64xf32>
    %c72 = arith.constant 72 : index
    %c0_37 = arith.constant 0 : index
    %95 = vector.load %arg1[%c72, %c0_37] : memref<1064x128xf32, #tpu.memory_space<vmem>>, vector<64x64xf32>
    %cst_38 = arith.constant dense<0.000000e+00> : vector<12x64xf32>
    %96 = tpu.matmul %94, %95, %cst_38 {dimension_numbers = #tpu.dot_dimension_numbers<[1], [0], [0], [1], [0, 0, 1, 1], [], []>} : vector<12x64xf32>, vector<64x64xf32>, vector<12x64xf32> -> vector<12x64xf32>
    %c200_39 = arith.constant 200 : index
    %c0_40 = arith.constant 0 : index
    %97 = vector.load %arg1[%c200_39, %c0_40] : memref<1064x128xf32, #tpu.memory_space<vmem>>, vector<1x64xf32>
    %98 = vector.broadcast %97 : vector<1x64xf32> to vector<12x64xf32>
    %99 = arith.addf %96, %98 : vector<12x64xf32>
    %cst_41 = arith.constant 0.000000e+00 : f32
    %100 = vector.broadcast %cst_41 : f32 to vector<12x64xf32>
    %101 = arith.maximumf %99, %100 : vector<12x64xf32>
    %cst_42 = arith.constant dense<0.000000e+00> : vector<12x64xf32>
    %102 = tpu.matmul %93, %101, %cst_42 {dimension_numbers = #tpu.dot_dimension_numbers<[1], [0], [0], [1], [0, 0, 1, 1], [], []>} : vector<12x12xf32>, vector<12x64xf32>, vector<12x64xf32> -> vector<12x64xf32>
    %c136_43 = arith.constant 136 : index
    %c0_44 = arith.constant 0 : index
    %103 = vector.load %arg1[%c136_43, %c0_44] : memref<1064x128xf32, #tpu.memory_space<vmem>>, vector<64x64xf32>
    %cst_45 = arith.constant dense<0.000000e+00> : vector<12x64xf32>
    %104 = tpu.matmul %102, %103, %cst_45 {dimension_numbers = #tpu.dot_dimension_numbers<[1], [0], [0], [1], [0, 0, 1, 1], [], []>} : vector<12x64xf32>, vector<64x64xf32>, vector<12x64xf32> -> vector<12x64xf32>
    %c201 = arith.constant 201 : index
    %c0_46 = arith.constant 0 : index
    %105 = vector.load %arg1[%c201, %c0_46] : memref<1064x128xf32, #tpu.memory_space<vmem>>, vector<1x64xf32>
    %106 = vector.broadcast %105 : vector<1x64xf32> to vector<12x64xf32>
    %107 = arith.addf %104, %106 : vector<12x64xf32>
    %cst_47 = arith.constant 0.000000e+00 : f32
    %108 = vector.broadcast %cst_47 : f32 to vector<12x64xf32>
    %109 = arith.maximumf %107, %108 : vector<12x64xf32>
    %110 = vector.extract_strided_slice %109 {offsets = [0, 0], sizes = [6, 32], strides = [1, 1]} : vector<12x64xf32> to vector<6x32xf32>
    %111 = vector.extract_strided_slice %109 {offsets = [6, 32], sizes = [6, 32], strides = [1, 1]} : vector<12x64xf32> to vector<6x32xf32>
    %c344 = arith.constant 344 : index
    %c0_48 = arith.constant 0 : index
    %112 = vector.load %arg0[%c344, %c0_48] : memref<352x128xf32, #tpu.memory_space<vmem>>, vector<8x32xf32>
    %c208_49 = arith.constant 208 : index
    %c0_50 = arith.constant 0 : index
    %113 = vector.load %arg1[%c208_49, %c0_50] : memref<1064x128xf32, #tpu.memory_space<vmem>>, vector<32x128xf32>
    %cst_51 = arith.constant dense<0.000000e+00> : vector<8x128xf32>
    %114 = tpu.matmul %112, %113, %cst_51 {dimension_numbers = #tpu.dot_dimension_numbers<[1], [0], [0], [1], [0, 0, 1, 1], [], []>} : vector<8x32xf32>, vector<32x128xf32>, vector<8x128xf32> -> vector<8x128xf32>
    %c240 = arith.constant 240 : index
    %c0_52 = arith.constant 0 : index
    %115 = vector.load %arg1[%c240, %c0_52] : memref<1064x128xf32, #tpu.memory_space<vmem>>, vector<1x128xf32>
    %116 = vector.broadcast %115 : vector<1x128xf32> to vector<8x128xf32>
    %117 = arith.addf %114, %116 : vector<8x128xf32>
    %cst_53 = arith.constant 0.000000e+00 : f32
    %118 = vector.broadcast %cst_53 : f32 to vector<8x128xf32>
    %119 = arith.maximumf %117, %118 : vector<8x128xf32>
    %c248 = arith.constant 248 : index
    %c0_54 = arith.constant 0 : index
    %120 = vector.load %arg1[%c248, %c0_54] : memref<1064x128xf32, #tpu.memory_space<vmem>>, vector<128x64xf32>
    %cst_55 = arith.constant dense<0.000000e+00> : vector<8x64xf32>
    %121 = tpu.matmul %119, %120, %cst_55 {dimension_numbers = #tpu.dot_dimension_numbers<[1], [0], [0], [1], [0, 0, 1, 1], [], []>} : vector<8x128xf32>, vector<128x64xf32>, vector<8x64xf32> -> vector<8x64xf32>
    %c376 = arith.constant 376 : index
    %c0_56 = arith.constant 0 : index
    %122 = vector.load %arg1[%c376, %c0_56] : memref<1064x128xf32, #tpu.memory_space<vmem>>, vector<1x64xf32>
    %123 = vector.broadcast %122 : vector<1x64xf32> to vector<8x64xf32>
    %124 = arith.addf %121, %123 : vector<8x64xf32>
    %cst_57 = arith.constant 0.000000e+00 : f32
    %125 = vector.broadcast %cst_57 : f32 to vector<8x64xf32>
    %126 = arith.maximumf %124, %125 : vector<8x64xf32>
    %c384 = arith.constant 384 : index
    %c0_58 = arith.constant 0 : index
    %127 = vector.load %arg1[%c384, %c0_58] : memref<1064x128xf32, #tpu.memory_space<vmem>>, vector<64x64xf32>
    %cst_59 = arith.constant dense<0.000000e+00> : vector<8x64xf32>
    %128 = tpu.matmul %126, %127, %cst_59 {dimension_numbers = #tpu.dot_dimension_numbers<[1], [0], [0], [1], [0, 0, 1, 1], [], []>} : vector<8x64xf32>, vector<64x64xf32>, vector<8x64xf32> -> vector<8x64xf32>
    %c448 = arith.constant 448 : index
    %c0_60 = arith.constant 0 : index
    %129 = vector.load %arg1[%c448, %c0_60] : memref<1064x128xf32, #tpu.memory_space<vmem>>, vector<1x64xf32>
    %130 = vector.broadcast %129 : vector<1x64xf32> to vector<8x64xf32>
    %131 = arith.addf %128, %130 : vector<8x64xf32>
    %cst_61 = arith.constant 0.000000e+00 : f32
    %132 = vector.broadcast %cst_61 : f32 to vector<8x64xf32>
    %133 = arith.maximumf %131, %132 : vector<8x64xf32>
    %134 = vector.extract_strided_slice %133 {offsets = [0, 0], sizes = [4, 32], strides = [1, 1]} : vector<8x64xf32> to vector<4x32xf32>
    %135 = vector.extract_strided_slice %133 {offsets = [4, 32], sizes = [4, 32], strides = [1, 1]} : vector<8x64xf32> to vector<4x32xf32>
    %c216 = arith.constant 216 : index
    %c0_62 = arith.constant 0 : index
    %136 = vector.load %arg0[%c216, %c0_62] : memref<352x128xf32, #tpu.memory_space<vmem>>, vector<4x6xf32>
    %c224 = arith.constant 224 : index
    %c0_63 = arith.constant 0 : index
    %137 = vector.load %arg0[%c224, %c0_63] : memref<352x128xf32, #tpu.memory_space<vmem>>, vector<4x6xf32>
    %cst_64 = arith.constant dense<0.000000e+00> : vector<4x32xf32>
    %138 = tpu.matmul %136, %21, %cst_64 {dimension_numbers = #tpu.dot_dimension_numbers<[1], [0], [0], [1], [0, 0, 1, 1], [], []>} : vector<4x6xf32>, vector<6x32xf32>, vector<4x32xf32> -> vector<4x32xf32>
    %cst_65 = arith.constant dense<0.000000e+00> : vector<4x32xf32>
    %139 = tpu.matmul %136, %110, %cst_65 {dimension_numbers = #tpu.dot_dimension_numbers<[1], [0], [0], [1], [0, 0, 1, 1], [], []>} : vector<4x6xf32>, vector<6x32xf32>, vector<4x32xf32> -> vector<4x32xf32>
    %cst_66 = arith.constant dense<0.000000e+00> : vector<4x32xf32>
    %140 = tpu.matmul %137, %91, %cst_66 {dimension_numbers = #tpu.dot_dimension_numbers<[1], [0], [0], [1], [0, 0, 1, 1], [], []>} : vector<4x6xf32>, vector<6x32xf32>, vector<4x32xf32> -> vector<4x32xf32>
    %cst_67 = arith.constant dense<0.000000e+00> : vector<4x32xf32>
    %141 = tpu.matmul %137, %111, %cst_67 {dimension_numbers = #tpu.dot_dimension_numbers<[1], [0], [0], [1], [0, 0, 1, 1], [], []>} : vector<4x6xf32>, vector<6x32xf32>, vector<4x32xf32> -> vector<4x32xf32>
    %142 = tpu.concatenate %138, %139, %134, %140, %141, %135 in 1 : vector<4x32xf32>, vector<4x32xf32>, vector<4x32xf32>, vector<4x32xf32>, vector<4x32xf32>, vector<4x32xf32> -> vector<4x192xf32>
    %c456 = arith.constant 456 : index
    %c0_68 = arith.constant 0 : index
    %143 = vector.load %arg1[%c456, %c0_68] : memref<1064x128xf32, #tpu.memory_space<vmem>>, vector<192x128xf32>
    %cst_69 = arith.constant dense<0.000000e+00> : vector<4x128xf32>
    %144 = tpu.matmul %142, %143, %cst_69 {dimension_numbers = #tpu.dot_dimension_numbers<[1], [0], [0], [1], [0, 0, 1, 1], [], []>} : vector<4x192xf32>, vector<192x128xf32>, vector<4x128xf32> -> vector<4x128xf32>
    %c648 = arith.constant 648 : index
    %c0_70 = arith.constant 0 : index
    %145 = vector.load %arg1[%c648, %c0_70] : memref<1064x128xf32, #tpu.memory_space<vmem>>, vector<1x128xf32>
    %146 = vector.broadcast %145 : vector<1x128xf32> to vector<4x128xf32>
    %147 = arith.addf %144, %146 : vector<4x128xf32>
    %cst_71 = arith.constant 0.000000e+00 : f32
    %148 = vector.broadcast %cst_71 : f32 to vector<4x128xf32>
    %149 = arith.maximumf %147, %148 : vector<4x128xf32>
    %c656 = arith.constant 656 : index
    %c0_72 = arith.constant 0 : index
    %150 = vector.load %arg1[%c656, %c0_72] : memref<1064x128xf32, #tpu.memory_space<vmem>>, vector<128x128xf32>
    %cst_73 = arith.constant dense<0.000000e+00> : vector<4x128xf32>
    %151 = tpu.matmul %149, %150, %cst_73 {dimension_numbers = #tpu.dot_dimension_numbers<[1], [0], [0], [1], [0, 0, 1, 1], [], []>} : vector<4x128xf32>, vector<128x128xf32>, vector<4x128xf32> -> vector<4x128xf32>
    %c784 = arith.constant 784 : index
    %c0_74 = arith.constant 0 : index
    %152 = vector.load %arg1[%c784, %c0_74] : memref<1064x128xf32, #tpu.memory_space<vmem>>, vector<1x128xf32>
    %153 = vector.broadcast %152 : vector<1x128xf32> to vector<4x128xf32>
    %154 = arith.addf %151, %153 : vector<4x128xf32>
    %cst_75 = arith.constant 0.000000e+00 : f32
    %155 = vector.broadcast %cst_75 : f32 to vector<4x128xf32>
    %156 = arith.maximumf %154, %155 : vector<4x128xf32>
    %c792 = arith.constant 792 : index
    %c0_76 = arith.constant 0 : index
    %157 = vector.load %arg1[%c792, %c0_76] : memref<1064x128xf32, #tpu.memory_space<vmem>>, vector<128x128xf32>
    %cst_77 = arith.constant dense<0.000000e+00> : vector<4x128xf32>
    %158 = tpu.matmul %156, %157, %cst_77 {dimension_numbers = #tpu.dot_dimension_numbers<[1], [0], [0], [1], [0, 0, 1, 1], [], []>} : vector<4x128xf32>, vector<128x128xf32>, vector<4x128xf32> -> vector<4x128xf32>
    %c920 = arith.constant 920 : index
    %c0_78 = arith.constant 0 : index
    %159 = vector.load %arg1[%c920, %c0_78] : memref<1064x128xf32, #tpu.memory_space<vmem>>, vector<1x128xf32>
    %160 = vector.broadcast %159 : vector<1x128xf32> to vector<4x128xf32>
    %161 = arith.addf %158, %160 : vector<4x128xf32>
    %cst_79 = arith.constant 0.000000e+00 : f32
    %162 = vector.broadcast %cst_79 : f32 to vector<4x128xf32>
    %163 = arith.maximumf %161, %162 : vector<4x128xf32>
    %c928 = arith.constant 928 : index
    %c0_80 = arith.constant 0 : index
    %164 = vector.load %arg1[%c928, %c0_80] : memref<1064x128xf32, #tpu.memory_space<vmem>>, vector<128x2xf32>
    %cst_81 = arith.constant dense<0.000000e+00> : vector<4x2xf32>
    %165 = tpu.matmul %163, %164, %cst_81 {dimension_numbers = #tpu.dot_dimension_numbers<[1], [0], [0], [1], [0, 0, 1, 1], [], []>} : vector<4x128xf32>, vector<128x2xf32>, vector<4x2xf32> -> vector<4x2xf32>
    %c1056 = arith.constant 1056 : index
    %c0_82 = arith.constant 0 : index
    %166 = vector.load %arg1[%c1056, %c0_82] : memref<1064x128xf32, #tpu.memory_space<vmem>>, vector<1x2xf32>
    %167 = vector.broadcast %166 : vector<1x2xf32> to vector<4x2xf32>
    %168 = arith.addf %165, %167 : vector<4x2xf32>
    %cst_83 = arith.constant 0.000000e+00 : f32
    %169 = vector.broadcast %cst_83 : f32 to vector<4x2xf32>
    %170 = arith.subf %169, %168 : vector<4x2xf32>
    %171 = math.exp %170 : vector<4x2xf32>
    %cst_84 = arith.constant 1.000000e+00 : f32
    %172 = vector.broadcast %cst_84 : f32 to vector<4x2xf32>
    %173 = arith.addf %172, %171 : vector<4x2xf32>
    %cst_85 = arith.constant 1.000000e+00 : f32
    %174 = vector.broadcast %cst_85 : f32 to vector<4x2xf32>
    %175 = arith.divf %174, %173 : vector<4x2xf32>
    %c0_86 = arith.constant 0 : index
    %c0_87 = arith.constant 0 : index
    %176 = vector.load %arg3[%c0_86, %c0_87] : memref<4x2xf32, #tpu.memory_space<vmem>>, vector<4x2xf32>
    tpu.vector_store %arg3[%c0_86, %c0_87], %175 {strides = array<i32>} : memref<4x2xf32, #tpu.memory_space<vmem>>, vector<4x2xf32>,
    return
  }
}

</mosaic_0001>

<llo_original>
// kernel: mul.22
$region0: #{mul.22}
  %s0 = inlined_call_operand.vmem [shape: f32[50], index: 0, kind: input, shape index: {}]
  %s1 = inlined_call_operand.vmem [shape: f32[2,5,5], index: 1, kind: output, shape index: {}]
  $region1: #{mul.22} parent=0
    #allocation0 [shape = 'u8[4096]{0}', space=vmem, size = 0x1000, scoped, tag = 'scoped mem for input reshape']
    %s3 = sshllo.u32 0, 1
    %v4 = vld [vmem:[%s0] sm:%s3]
    %5 = vst [vmem:[#allocation0] sm:%s3] %v4
    %v6 = vld [vmem:[#allocation0] sm:$0x1]
    %vm7 = vcmask 39936
    %8 = vst.msk [vmem:[%s1] sm:$0x1] %vm7, %v6
    %v9 = vld [vmem:[#allocation0] sm:$0x1]
    %10 = vrot.lane.b32.xlu0 %v9, 123
    %v11 = vpop.permute.xlu0 %10
    %vm12 = vcmask 39936
    %s13 = scalar_lea.vmem %s1, 1
    %14 = vst.msk [vmem:[%s13] sm:$0x1] %vm12, %v11
    %v15 = vld [vmem:[#allocation0] sm:$0x1]
    %16 = vrot.lane.b32.xlu0 %v15, 118
    %v17 = vpop.permute.xlu0 %16
    %vm18 = vcmask 39936
    %s19 = scalar_lea.vmem %s1, 2
    %20 = vst.msk [vmem:[%s19] sm:$0x1] %vm18, %v17
    %v21 = vld [vmem:[#allocation0] sm:$0x1]
    %22 = vrot.lane.b32.xlu0 %v21, 113
    %v23 = vpop.permute.xlu0 %22
    %vm24 = vcmask 39936
    %s25 = scalar_lea.vmem %s1, 3
    %26 = vst.msk [vmem:[%s25] sm:$0x1] %vm24, %v23
    %v27 = vld [vmem:[#allocation0] sm:$0x1]
    %28 = vrot.lane.b32.xlu0 %v27, 108
    %v29 = vpop.permute.xlu0 %28
    %vm30 = vcmask 39936
    %s31 = scalar_lea.vmem %s1, 4
    %32 = vst.msk [vmem:[%s31] sm:$0x1] %vm30, %v29
    %v33 = vld [vmem:[#allocation0] sm:$0x1]
    %34 = vrot.lane.b32.xlu0 %v33, 103
    %v35 = vpop.permute.xlu0 %34
    %vm36 = vcmask 39936
    %s37 = scalar_lea.vmem %s1, 8
    %38 = vst.msk [vmem:[%s37] sm:$0x1] %vm36, %v35
    %v39 = vld [vmem:[#allocation0] sm:$0x1]
    %40 = vrot.lane.b32.xlu0 %v39, 98
    %v41 = vpop.permute.xlu0 %40
    %vm42 = vcmask 39936
    %s43 = scalar_lea.vmem %s1, 9
    %44 = vst.msk [vmem:[%s43] sm:$0x1] %vm42, %v41
    %v45 = vld [vmem:[#allocation0] sm:$0x1]
    %46 = vrot.lane.b32.xlu0 %v45, 93
    %v47 = vpop.permute.xlu0 %46
    %vm48 = vcmask 39936
    %s49 = scalar_lea.vmem %s1, 10
    %50 = vst.msk [vmem:[%s49] sm:$0x1] %vm48, %v47
    %v51 = vld [vmem:[#allocation0] sm:$0x1]
    %52 = vrot.lane.b32.xlu0 %v51, 88
    %v53 = vpop.permute.xlu0 %52
    %vm54 = vcmask 39936
    %s55 = scalar_lea.vmem %s1, 11
    %56 = vst.msk [vmem:[%s55] sm:$0x1] %vm54, %v53
    %v57 = vld [vmem:[#allocation0] sm:$0x1]
    %58 = vrot.lane.b32.xlu0 %v57, 83
    %v59 = vpop.permute.xlu0 %58
    %vm60 = vcmask 39936
    %s61 = scalar_lea.vmem %s1, 12
    %62 = vst.msk [vmem:[%s61] sm:$0x1] %vm60, %v59

// kernel: deepera_forward.1
$region0: #{deepera_forward.1}
  #allocation0 [shape = 'u32[]', space=smem, size = 0x4, offset = 0x4, fixed_abs, tag = 'smem constant byte address 0x4 - core index']
  #allocation1 [shape = 'u32[144,128]{1,0:T(1,128)}', space=vmem, size = 0x12000, scoped, tag = 'internal scratch']
  %s0 = inlined_call_operand.vmem [shape: f32[352,128], index: 0, kind: input, shape index: {}]
  %s1 = inlined_call_operand.vmem [shape: f32[1064,128], index: 1, kind: input, shape index: {}]
  %s2 = inlined_call_operand.vmem [shape: f32[2,32,160], index: 2, kind: input, shape index: {}]
  %s3 = inlined_call_operand.vmem [shape: f32[4,2], index: 3, kind: output, shape index: {}]
  %s4 = sld [smem:[#allocation0]]
  $region22: #{deepera_forward.1} parent=0
    _
  %s6 = ssub.s32 1, %s4
  %s7 = scalar_select 0, %s6, %s4
  // Predicated region
  $region2: #{deepera_forward.1} parent=0 // pred_check
    _
  $region3: #{deepera_forward.1} parent=0 // pred_check_branch
    %9 = sbr.rel (0) target = $region5
  $region4: #{deepera_forward.1} parent=0 // pred_region
    _
  $region5: #{deepera_forward.1} parent=0 // pred_fallthru
    _
  // Predicated region
  $region6: #{deepera_forward.1} parent=0 // pred_check
    _
  $region7: #{deepera_forward.1} parent=0 // pred_check_branch
    %11 = sbr.rel (0) target = $region9
  $region8: #{deepera_forward.1} parent=0 // pred_region
    _
  $region9: #{deepera_forward.1} parent=0 // pred_fallthru
    _
  // Predicated region
  $region10: #{deepera_forward.1} parent=0 // pred_check
    _
  $region11: #{deepera_forward.1} parent=0 // pred_check_branch
    %13 = sbr.rel (0) target = $region13
  $region12: #{deepera_forward.1} parent=0 // pred_region
    _
  $region13: #{deepera_forward.1} parent=0 // pred_fallthru
    _
  %v14 = vld [vmem:[%s0] sm:$0xff]
  %v15 = vld [vmem:[%s0 + $0x8] sm:$0xff]
  %v16 = vld [vmem:[%s0 + $0x10] sm:$0xff]
  %v17 = vld [vmem:[%s0 + $0x18] sm:$0xff]
  %v18 = vld [vmem:[%s0 + $0x20] sm:$0xff]
  %v19 = vld [vmem:[%s0 + $0x28] sm:$0xff]
  %v20 = vld [vmem:[%s0 + $0x30] sm:$0xff]
  %v21 = vld [vmem:[%s0 + $0x38] sm:$0xf]
  %v22 = vld [vmem:[%s0 + $0x88] sm:$0xff]
  %v23 = vld [vmem:[%s0 + $0x90] sm:$0xff]
  %v24 = vld [vmem:[%s0 + $0x98] sm:$0xff]
  %v25 = vld [vmem:[%s0 + $0xa0] sm:$0xff]
  %v26 = vld [vmem:[%s0 + $0xa8] sm:$0xff]
  %v27 = vld [vmem:[%s0 + $0xb0] sm:$0xff]
  %v28 = vld [vmem:[%s0 + $0xb8] sm:$0xff]
  %v29 = vld [vmem:[%s0 + $0xc0] sm:$0xf]
  %v30 = vld [vmem:[%s1] sm:$0xff]
  %v31 = vld [vmem:[%s1 + $0x8] sm:$0xff]
  %v32 = vld [vmem:[%s1 + $0x10] sm:$0xff]
  %v33 = vld [vmem:[%s1 + $0x18] sm:$0xff]
  %v34 = vld [vmem:[%s1 + $0x40] sm:$0x1]
  %v35 = vlaneseq
  %v36 = vshrl.u32 %v35, 7
  %v37 = vsub.s32 0, %v36
  %v38 = vrot.slane %v34, %v37
  %vm39 = vcmask 261120
  %v41 = vsel %vm39, %v14, 0
  %v44 = vsel %vm39, %v15, 0
  %v47 = vsel %vm39, %v16, 0
  %v50 = vsel %vm39, %v17, 0
  %v53 = vsel %vm39, %v18, 0
  %v56 = vsel %vm39, %v19, 0
  %v59 = vsel %vm39, %v20, 0
  %v62 = vsel %vm39, %v21, 0
  %64 = vmatprep.subr.mxu0 0.0
  %65 = vmatpush1.msra.mxu0 %v30
  %66 = vmatprep.subr.mxu0 0.0
  %67 = vmatpush1.msra.mxu0 %v31
  %68 = vmatprep.subr.mxu0 0.0
  %69 = vmatpush1.msra.mxu0 %v32
  %70 = vmatprep.subr.mxu0 0.0
  %71 = vmatpush1.msra.mxu0 %v33
  %72 = vmatprep.subr.mxu0 0.0
  %73 = vmatpush1.msra.mxu0 0.0
  %74 = vmatprep.subr.mxu0 0.0
  %75 = vmatpush1.msra.mxu0 0.0
  %76 = vmatprep.subr.mxu0 0.0
  %77 = vmatpush1.msra.mxu0 0.0
  %78 = vmatprep.subr.mxu0 0.0
  %79 = vmatpush1.msra.mxu0 0.0
  %80 = vmatprep.subr.mxu0 0.0
  %81 = vmatpush1.msra.mxu0 0.0
  %82 = vmatprep.subr.mxu0 0.0
  %83 = vmatpush1.msra.mxu0 0.0
  %84 = vmatprep.subr.mxu0 0.0
  %85 = vmatpush1.msra.mxu0 0.0
  %86 = vmatprep.subr.mxu0 0.0
  %87 = vmatpush1.msra.mxu0 0.0
  %88 = vmatprep.subr.mxu0 0.0
  %89 = vmatpush1.msra.mxu0 0.0
  %90 = vmatprep.subr.mxu0 0.0
  %91 = vmatpush1.msra.mxu0 0.0
  %92 = vmatprep.subr.mxu0 0.0
  %93 = vmatpush1.msra.mxu0 0.0
  %94 = vmatprep.subr.mxu0 0.0
  %95 = vmatpush1.msra.mxu0 0.0
  %96 = vmatprep.subr.mxu0 0.0
  %97 = vmatpush1.msra.mxu0 0.0
  %98 = vmatprep.subr.mxu0 0.0
  %99 = vmatpush1.msra.mxu0 0.0
  %100 = vmatprep.subr.mxu0 0.0
  %101 = vmatpush1.msra.mxu0 0.0
  %102 = vmatprep.subr.mxu0 0.0
  %103 = vmatpush1.msra.mxu0 0.0
  %104 = vmatprep.subr.mxu0 0.0
  %105 = vmatpush1.msra.mxu0 0.0
  %106 = vmatprep.subr.mxu0 0.0
  %107 = vmatpush1.msra.mxu0 0.0
  %108 = vmatprep.subr.mxu0 0.0
  %109 = vmatpush1.msra.mxu0 0.0
  %110 = vmatprep.subr.mxu0 0.0
  %111 = vmatpush1.msra.mxu0 0.0
  %112 = vmatprep.subr.mxu0 0.0
  %113 = vmatpush1.msra.mxu0 0.0
  %114 = vmatprep.subr.mxu0 0.0
  %115 = vmatpush1.msra.mxu0 0.0
  %116 = vmatprep.subr.mxu0 0.0
  %117 = vmatpush1.msra.mxu0 0.0
  %118 = vmatprep.subr.mxu0 0.0
  %119 = vmatpush1.msra.mxu0 0.0
  %120 = vmatprep.subr.mxu0 0.0
  %121 = vmatpush1.msra.mxu0 0.0
  %122 = vmatprep.subr.mxu0 0.0
  %123 = vmatpush1.msra.mxu0 0.0
  %124 = vmatprep.subr.mxu0 0.0
  %125 = vmatpush1.msra.mxu0 0.0
  %126 = vmatprep.subr.mxu0 0.0
  %127 = vmatpush1.msra.mxu0 0.0
  %128 = vmatprep.mubr.f32.mxu0 0.0
  %129 = vmatmul.mubr.f32.gmra.mrb[0].mxu0 %v41
  %v130 = vpop.f32.mrb[0].mxu0
  %v131 = vadd.f32 %v38, %v130
  %v132 = vpop.f32.mrb[0].mxu0
  %133 = vmatprep.mubr.f32.mxu0 0.0
  %134 = vmatmul.mubr.f32.gmra.mrb[0].mxu0 %v44
  %v135 = vpop.f32.mrb[0].mxu0
  %v136 = vadd.f32 %v38, %v135
  %v137 = vpop.f32.mrb[0].mxu0
  %138 = vmatprep.mubr.f32.mxu0 0.0
  %139 = vmatmul.mubr.f32.gmra.mrb[0].mxu0 %v47
  %v140 = vpop.f32.mrb[0].mxu0
  %v141 = vadd.f32 %v38, %v140
  %v142 = vpop.f32.mrb[0].mxu0
  %143 = vmatprep.mubr.f32.mxu0 0.0
  %144 = vmatmul.mubr.f32.gmra.mrb[0].mxu0 %v50
  %v145 = vpop.f32.mrb[0].mxu0
  %v146 = vadd.f32 %v38, %v145
  %v147 = vpop.f32.mrb[0].mxu0
  %148 = vmatprep.mubr.f32.mxu0 0.0
  %149 = vmatmul.mubr.f32.gmra.mrb[0].mxu0 %v53
  %v150 = vpop.f32.mrb[0].mxu0
  %v151 = vadd.f32 %v38, %v150
  %v152 = vpop.f32.mrb[0].mxu0
  %153 = vmatprep.mubr.f32.mxu0 0.0
  %154 = vmatmul.mubr.f32.gmra.mrb[0].mxu0 %v56
  %v155 = vpop.f32.mrb[0].mxu0
  %v156 = vadd.f32 %v38, %v155
  %v157 = vpop.f32.mrb[0].mxu0
  %158 = vmatprep.mubr.f32.mxu0 0.0
  %159 = vmatmul.mubr.f32.gmra.mrb[0].mxu0 %v59
  %v160 = vpop.f32.mrb[0].mxu0
  %v161 = vadd.f32 %v38, %v160
  %v162 = vpop.f32.mrb[0].mxu0
  %163 = vmatprep.mubr.f32.mxu0 0.0
  %164 = vmatmul.mubr.f32.gmra.mrb[0].mxu0 %v62
  %v165 = vpop.f32.mrb[0].mxu0
  %v166 = vadd.f32 %v38, %v165
  %v167 = vpop.f32.mrb[0].mxu0
  %168 = vdwg.mxu0
  %v169 = vmax.f32 %v131, 0.0
  %v170 = vmax.f32 %v136, 0.0
  %v171 = vmax.f32 %v141, 0.0
  %v172 = vmax.f32 %v146, 0.0
  %v173 = vmax.f32 %v151, 0.0
  %v174 = vmax.f32 %v156, 0.0
  %v175 = vmax.f32 %v161, 0.0
  %v176 = vmax.f32 %v166, 0.0
  %vm177 = vcmask 490496
  %v179 = vsel %vm177, %v22, 0
  %v182 = vsel %vm177, %v23, 0
  %v185 = vsel %vm177, %v24, 0
  %v188 = vsel %vm177, %v25, 0
  %v191 = vsel %vm177, %v26, 0
  %v194 = vsel %vm177, %v27, 0
  %v197 = vsel %vm177, %v28, 0
  %v200 = vsel %vm177, %v29, 0
  %vm202 = vcmask 1043456
  %v204 = vsel %vm202, %v176, 0
  %206 = vmatprep.subr.mxu0 0.0
  %207 = vmatpush1.msra.mxu0 %v169
  %208 = vmatprep.subr.mxu0 0.0
  %209 = vmatpush1.msra.mxu0 %v170
  %210 = vmatprep.subr.mxu0 0.0
  %211 = vmatpush1.msra.mxu0 %v171
  %212 = vmatprep.subr.mxu0 0.0
  %213 = vmatpush1.msra.mxu0 %v172
  %214 = vmatprep.subr.mxu0 0.0
  %215 = vmatpush1.msra.mxu0 %v173
  %216 = vmatprep.subr.mxu0 0.0
  %217 = vmatpush1.msra.mxu0 %v174
  %218 = vmatprep.subr.mxu0 0.0
  %219 = vmatpush1.msra.mxu0 %v175
  %220 = vmatprep.subr.mxu0 0.0
  %221 = vmatpush1.msra.mxu0 %v204
  %222 = vmatprep.subr.mxu0 0.0
  %223 = vmatpush1.msra.mxu0 0.0
  %224 = vmatprep.subr.mxu0 0.0
  %225 = vmatpush1.msra.mxu0 0.0
  %226 = vmatprep.subr.mxu0 0.0
  %227 = vmatpush1.msra.mxu0 0.0
  %228 = vmatprep.subr.mxu0 0.0
  %229 = vmatpush1.msra.mxu0 0.0
  %230 = vmatprep.subr.mxu0 0.0
  %231 = vmatpush1.msra.mxu0 0.0
  %232 = vmatprep.subr.mxu0 0.0
  %233 = vmatpush1.msra.mxu0 0.0
  %234 = vmatprep.subr.mxu0 0.0
  %235 = vmatpush1.msra.mxu0 0.0
  %236 = vmatprep.subr.mxu0 0.0
  %237 = vmatpush1.msra.mxu0 0.0
  %238 = vmatprep.subr.mxu0 0.0
  %239 = vmatpush1.msra.mxu0 0.0
  %240 = vmatprep.subr.mxu0 0.0
  %241 = vmatpush1.msra.mxu0 0.0
  %242 = vmatprep.subr.mxu0 0.0
  %243 = vmatpush1.msra.mxu0 0.0
  %244 = vmatprep.subr.mxu0 0.0
  %245 = vmatpush1.msra.mxu0 0.0
  %246 = vmatprep.subr.mxu0 0.0
  %247 = vmatpush1.msra.mxu0 0.0
  %248 = vmatprep.subr.mxu0 0.0
  %249 = vmatpush1.msra.mxu0 0.0
  %250 = vmatprep.subr.mxu0 0.0
  %251 = vmatpush1.msra.mxu0 0.0
  %252 = vmatprep.subr.mxu0 0.0
  %253 = vmatpush1.msra.mxu0 0.0
  %254 = vmatprep.subr.mxu0 0.0
  %255 = vmatpush1.msra.mxu0 0.0
  %256 = vmatprep.subr.mxu0 0.0
  %257 = vmatpush1.msra.mxu0 0.0
  %258 = vmatprep.subr.mxu0 0.0
  %259 = vmatpush1.msra.mxu0 0.0
  %260 = vmatprep.subr.mxu0 0.0
  %261 = vmatpush1.msra.mxu0 0.0
  %262 = vmatprep.subr.mxu0 0.0
  %263 = vmatpush1.msra.mxu0 0.0
  %264 = vmatprep.subr.mxu0 0.0
  %265 = vmatpush1.msra.mxu0 0.0
  %266 = vmatprep.subr.mxu0 0.0
  %267 = vmatpush1.msra.mxu0 0.0
  %268 = vmatprep.subr.mxu0 0.0
  %269 = vmatpush1.msra.mxu0 0.0
  %270 = vmatprep.mubr.f32.mxu0 0.0
  %271 = vmatmul.mubr.f32.gmra.mrb[0].mxu0 %v179
  %v272 = vpop.f32.mrb[0].mxu0
  %v273 = vadd.f32 0.0, %v272
  %v274 = vpop.f32.mrb[0].mxu0
  %275 = vmatprep.mubr.f32.mxu0 0.0
  %276 = vmatmul.mubr.f32.gmra.mrb[0].mxu0 %v182
  %v277 = vpop.f32.mrb[0].mxu0
  %v278 = vadd.f32 0.0, %v277
  %v279 = vpop.f32.mrb[0].mxu0
  %280 = vmatprep.mubr.f32.mxu0 0.0
  %281 = vmatmul.mubr.f32.gmra.mrb[0].mxu0 %v185
  %v282 = vpop.f32.mrb[0].mxu0
  %v283 = vadd.f32 0.0, %v282
  %v284 = vpop.f32.mrb[0].mxu0
  %285 = vmatprep.mubr.f32.mxu0 0.0
  %286 = vmatmul.mubr.f32.gmra.mrb[0].mxu0 %v188
  %v287 = vpop.f32.mrb[0].mxu0
  %v288 = vadd.f32 0.0, %v287
  %v289 = vpop.f32.mrb[0].mxu0
  %290 = vmatprep.mubr.f32.mxu0 0.0
  %291 = vmatmul.mubr.f32.gmra.mrb[0].mxu0 %v191
  %v292 = vpop.f32.mrb[0].mxu0
  %v293 = vadd.f32 0.0, %v292
  %v294 = vpop.f32.mrb[0].mxu0
  %295 = vmatprep.mubr.f32.mxu0 0.0
  %296 = vmatmul.mubr.f32.gmra.mrb[0].mxu0 %v194
  %v297 = vpop.f32.mrb[0].mxu0
  %v298 = vadd.f32 0.0, %v297
  %v299 = vpop.f32.mrb[0].mxu0
  %300 = vmatprep.mubr.f32.mxu0 0.0
  %301 = vmatmul.mubr.f32.gmra.mrb[0].mxu0 %v197
  %v302 = vpop.f32.mrb[0].mxu0
  %v303 = vadd.f32 0.0, %v302
  %v304 = vpop.f32.mrb[0].mxu0
  %305 = vmatprep.mubr.f32.mxu0 0.0
  %306 = vmatmul.mubr.f32.gmra.mrb[0].mxu0 %v200
  %v307 = vpop.f32.mrb[0].mxu0
  %v308 = vadd.f32 0.0, %v307
  %v309 = vpop.f32.mrb[0].mxu0
  %310 = vdwg.mxu0
  %v311 = vadd.f32 %v14, %v273
  %v312 = vadd.f32 %v15, %v278
  %v313 = vadd.f32 %v16, %v283
  %v314 = vadd.f32 %v17, %v288
  %v315 = vadd.f32 %v18, %v293
  %v316 = vadd.f32 %v19, %v298
  %v317 = vadd.f32 %v20, %v303
  %v318 = vadd.f32 %v21, %v308
  %v319 = vld [vmem:[%s1 + $0x20] sm:$0xff]
  %v320 = vld [vmem:[%s1 + $0x28] sm:$0xff]
  %v321 = vld [vmem:[%s1 + $0x30] sm:$0xff]
  %v322 = vld [vmem:[%s1 + $0x38] sm:$0xff]
  %v323 = vld [vmem:[%s1 + $0x41] sm:$0x1]
  %v324 = vlaneseq
  %v325 = vshrl.u32 %v324, 7
  %v326 = vsub.s32 0, %v325
  %v327 = vrot.slane %v323, %v326
  %v329 = vsel %vm39, %v311, 0
  %v332 = vsel %vm39, %v312, 0
  %v335 = vsel %vm39, %v313, 0
  %v338 = vsel %vm39, %v314, 0
  %v341 = vsel %vm39, %v315, 0
  %v344 = vsel %vm39, %v316, 0
  %v347 = vsel %vm39, %v317, 0
  %v350 = vsel %vm39, %v318, 0
  %352 = vmatprep.subr.mxu0 0.0
  %353 = vmatpush1.msra.mxu0 %v319
  %354 = vmatprep.subr.mxu0 0.0
  %355 = vmatpush1.msra.mxu0 %v320
  %356 = vmatprep.subr.mxu0 0.0
  %357 = vmatpush1.msra.mxu0 %v321
  %358 = vmatprep.subr.mxu0 0.0
  %359 = vmatpush1.msra.mxu0 %v322
  %360 = vmatprep.subr.mxu0 0.0
  %361 = vmatpush1.msra.mxu0 0.0
  %362 = vmatprep.subr.mxu0 0.0
  %363 = vmatpush1.msra.mxu0 0.0
  %364 = vmatprep.subr.mxu0 0.0
  %365 = vmatpush1.msra.mxu0 0.0
  %366 = vmatprep.subr.mxu0 0.0
  %367 = vmatpush1.msra.mxu0 0.0
  %368 = vmatprep.subr.mxu0 0.0
  %369 = vmatpush1.msra.mxu0 0.0
  %370 = vmatprep.subr.mxu0 0.0
  %371 = vmatpush1.msra.mxu0 0.0
  %372 = vmatprep.subr.mxu0 0.0
  %373 = vmatpush1.msra.mxu0 0.0
  %374 = vmatprep.subr.mxu0 0.0
  %375 = vmatpush1.msra.mxu0 0.0
  %376 = vmatprep.subr.mxu0 0.0
  %377 = vmatpush1.msra.mxu0 0.0
  %378 = vmatprep.subr.mxu0 0.0
  %379 = vmatpush1.msra.mxu0 0.0
  %380 = vmatprep.subr.mxu0 0.0
  %381 = vmatpush1.msra.mxu0 0.0
  %382 = vmatprep.subr.mxu0 0.0
  %383 = vmatpush1.msra.mxu0 0.0
  %384 = vmatprep.subr.mxu0 0.0
  %385 = vmatpush1.msra.mxu0 0.0
  %386 = vmatprep.subr.mxu0 0.0
  %387 = vmatpush1.msra.mxu0 0.0
  %388 = vmatprep.subr.mxu0 0.0
  %389 = vmatpush1.msra.mxu0 0.0
  %390 = vmatprep.subr.mxu0 0.0
  %391 = vmatpush1.msra.mxu0 0.0
  %392 = vmatprep.subr.mxu0 0.0
  %393 = vmatpush1.msra.mxu0 0.0
  %394 = vmatprep.subr.mxu0 0.0
  %395 = vmatpush1.msra.mxu0 0.0
  %396 = vmatprep.subr.mxu0 0.0
  %397 = vmatpush1.msra.mxu0 0.0
  %398 = vmatprep.subr.mxu0 0.0
  %399 = vmatpush1.msra.mxu0 0.0
  %400 = vmatprep.subr.mxu0 0.0
  %401 = vmatpush1.msra.mxu0 0.0
  %402 = vmatprep.subr.mxu0 0.0
  %403 = vmatpush1.msra.mxu0 0.0
  %404 = vmatprep.subr.mxu0 0.0
  %405 = vmatpush1.msra.mxu0 0.0
  %406 = vmatprep.subr.mxu0 0.0
  %407 = vmatpush1.msra.mxu0 0.0
  %408 = vmatprep.subr.mxu0 0.0
  %409 = vmatpush1.msra.mxu0 0.0
  %410 = vmatprep.subr.mxu0 0.0
  %411 = vmatpush1.msra.mxu0 0.0
  %412 = vmatprep.subr.mxu0 0.0
  %413 = vmatpush1.msra.mxu0 0.0
  %414 = vmatprep.subr.mxu0 0.0
  %415 = vmatpush1.msra.mxu0 0.0
  %416 = vmatprep.mubr.f32.mxu0 0.0
  %417 = vmatmul.mubr.f32.gmra.mrb[0].mxu0 %v329
  %v418 = vpop.f32.mrb[0].mxu0
  %v419 = vadd.f32 %v327, %v418
  %v420 = vpop.f32.mrb[0].mxu0
  %421 = vmatprep.mubr.f32.mxu0 0.0
  %422 = vmatmul.mubr.f32.gmra.mrb[0].mxu0 %v332
  %v423 = vpop.f32.mrb[0].mxu0
  %v424 = vadd.f32 %v327, %v423
  %v425 = vpop.f32.mrb[0].mxu0
  %426 = vmatprep.mubr.f32.mxu0 0.0
  %427 = vmatmul.mubr.f32.gmra.mrb[0].mxu0 %v335
  %v428 = vpop.f32.mrb[0].mxu0
  %v429 = vadd.f32 %v327, %v428
  %v430 = vpop.f32.mrb[0].mxu0
  %431 = vmatprep.mubr.f32.mxu0 0.0
  %432 = vmatmul.mubr.f32.gmra.mrb[0].mxu0 %v338
  %v433 = vpop.f32.mrb[0].mxu0
  %v434 = vadd.f32 %v327, %v433
  %v435 = vpop.f32.mrb[0].mxu0
  %436 = vmatprep.mubr.f32.mxu0 0.0
  %437 = vmatmul.mubr.f32.gmra.mrb[0].mxu0 %v341
  %v438 = vpop.f32.mrb[0].mxu0
  %v439 = vadd.f32 %v327, %v438
  %v440 = vpop.f32.mrb[0].mxu0
  %441 = vmatprep.mubr.f32.mxu0 0.0
  %442 = vmatmul.mubr.f32.gmra.mrb[0].mxu0 %v344
  %v443 = vpop.f32.mrb[0].mxu0
  %v444 = vadd.f32 %v327, %v443
  %v445 = vpop.f32.mrb[0].mxu0
  %446 = vmatprep.mubr.f32.mxu0 0.0
  %447 = vmatmul.mubr.f32.gmra.mrb[0].mxu0 %v347
  %v448 = vpop.f32.mrb[0].mxu0
  %v449 = vadd.f32 %v327, %v448
  %v450 = vpop.f32.mrb[0].mxu0
  %451 = vmatprep.mubr.f32.mxu0 0.0
  %452 = vmatmul.mubr.f32.gmra.mrb[0].mxu0 %v350
  %v453 = vpop.f32.mrb[0].mxu0
  %v454 = vadd.f32 %v327, %v453
  %v455 = vpop.f32.mrb[0].mxu0
  %456 = vdwg.mxu0
  %v457 = vmax.f32 %v419, 0.0
  %v458 = vmax.f32 %v424, 0.0
  %v459 = vmax.f32 %v429, 0.0
  %v460 = vmax.f32 %v434, 0.0
  %v461 = vmax.f32 %v439, 0.0
  %v462 = vmax.f32 %v444, 0.0
  %v463 = vmax.f32 %v449, 0.0
  %v464 = vmax.f32 %v454, 0.0
  %v466 = vsel %vm202, %v464, 0
  %468 = vmatprep.subr.mxu0 0.0
  %469 = vmatpush1.msra.mxu0 %v457
  %470 = vmatprep.subr.mxu0 0.0
  %471 = vmatpush1.msra.mxu0 %v458
  %472 = vmatprep.subr.mxu0 0.0
  %473 = vmatpush1.msra.mxu0 %v459
  %474 = vmatprep.subr.mxu0 0.0
  %475 = vmatpush1.msra.mxu0 %v460
  %476 = vmatprep.subr.mxu0 0.0
  %477 = vmatpush1.msra.mxu0 %v461
  %478 = vmatprep.subr.mxu0 0.0
  %479 = vmatpush1.msra.mxu0 %v462
  %480 = vmatprep.subr.mxu0 0.0
  %481 = vmatpush1.msra.mxu0 %v463
  %482 = vmatprep.subr.mxu0 0.0
  %483 = vmatpush1.msra.mxu0 %v466
  %484 = vmatprep.subr.mxu0 0.0
  %485 = vmatpush1.msra.mxu0 0.0
  %486 = vmatprep.subr.mxu0 0.0
  %487 = vmatpush1.msra.mxu0 0.0
  %488 = vmatprep.subr.mxu0 0.0
  %489 = vmatpush1.msra.mxu0 0.0
  %490 = vmatprep.subr.mxu0 0.0
  %491 = vmatpush1.msra.mxu0 0.0
  %492 = vmatprep.subr.mxu0 0.0
  %493 = vmatpush1.msra.mxu0 0.0
  %494 = vmatprep.subr.mxu0 0.0
  %495 = vmatpush1.msra.mxu0 0.0
  %496 = vmatprep.subr.mxu0 0.0
  %497 = vmatpush1.msra.mxu0 0.0
  %498 = vmatprep.subr.mxu0 0.0
  %499 = vmatpush1.msra.mxu0 0.0
  %500 = vmatprep.subr.mxu0 0.0
  %501 = vmatpush1.msra.mxu0 0.0
  %502 = vmatprep.subr.mxu0 0.0
  %503 = vmatpush1.msra.mxu0 0.0
  %504 = vmatprep.subr.mxu0 0.0
  %505 = vmatpush1.msra.mxu0 0.0
  %506 = vmatprep.subr.mxu0 0.0
  %507 = vmatpush1.msra.mxu0 0.0
  %508 = vmatprep.subr.mxu0 0.0
  %509 = vmatpush1.msra.mxu0 0.0
  %510 = vmatprep.subr.mxu0 0.0
  %511 = vmatpush1.msra.mxu0 0.0
  %512 = vmatprep.subr.mxu0 0.0
  %513 = vmatpush1.msra.mxu0 0.0
  %514 = vmatprep.subr.mxu0 0.0
  %515 = vmatpush1.msra.mxu0 0.0
  %516 = vmatprep.subr.mxu0 0.0
  %517 = vmatpush1.msra.mxu0 0.0
  %518 = vmatprep.subr.mxu0 0.0
  %519 = vmatpush1.msra.mxu0 0.0
  %520 = vmatprep.subr.mxu0 0.0
  %521 = vmatpush1.msra.mxu0 0.0
  %522 = vmatprep.subr.mxu0 0.0
  %523 = vmatpush1.msra.mxu0 0.0
  %524 = vmatprep.subr.mxu0 0.0
  %525 = vmatpush1.msra.mxu0 0.0
  %526 = vmatprep.subr.mxu0 0.0
  %527 = vmatpush1.msra.mxu0 0.0
  %528 = vmatprep.subr.mxu0 0.0
  %529 = vmatpush1.msra.mxu0 0.0
  %530 = vmatprep.subr.mxu0 0.0
  %531 = vmatpush1.msra.mxu0 0.0
  %532 = vmatprep.mubr.f32.mxu0 0.0
  %533 = vmatmul.mubr.f32.gmra.mrb[0].mxu0 %v179
  %v534 = vpop.f32.mrb[0].mxu0
  %v535 = vadd.f32 0.0, %v534
  %v536 = vpop.f32.mrb[0].mxu0
  %537 = vmatprep.mubr.f32.mxu0 0.0
  %538 = vmatmul.mubr.f32.gmra.mrb[0].mxu0 %v182
  %v539 = vpop.f32.mrb[0].mxu0
  %v540 = vadd.f32 0.0, %v539
  %v541 = vpop.f32.mrb[0].mxu0
  %542 = vmatprep.mubr.f32.mxu0 0.0
  %543 = vmatmul.mubr.f32.gmra.mrb[0].mxu0 %v185
  %v544 = vpop.f32.mrb[0].mxu0
  %v545 = vadd.f32 0.0, %v544
  %v546 = vpop.f32.mrb[0].mxu0
  %547 = vmatprep.mubr.f32.mxu0 0.0
  %548 = vmatmul.mubr.f32.gmra.mrb[0].mxu0 %v188
  %v549 = vpop.f32.mrb[0].mxu0
  %v550 = vadd.f32 0.0, %v549
  %v551 = vpop.f32.mrb[0].mxu0
  %552 = vmatprep.mubr.f32.mxu0 0.0
  %553 = vmatmul.mubr.f32.gmra.mrb[0].mxu0 %v191
  %v554 = vpop.f32.mrb[0].mxu0
  %v555 = vadd.f32 0.0, %v554
  %v556 = vpop.f32.mrb[0].mxu0
  %557 = vmatprep.mubr.f32.mxu0 0.0
  %558 = vmatmul.mubr.f32.gmra.mrb[0].mxu0 %v194
  %v559 = vpop.f32.mrb[0].mxu0
  %v560 = vadd.f32 0.0, %v559
  %v561 = vpop.f32.mrb[0].mxu0
  %562 = vmatprep.mubr.f32.mxu0 0.0
  %563 = vmatmul.mubr.f32.gmra.mrb[0].mxu0 %v197
  %v564 = vpop.f32.mrb[0].mxu0
  %v565 = vadd.f32 0.0, %v564
  %v566 = vpop.f32.mrb[0].mxu0
  %567 = vmatprep.mubr.f32.mxu0 0.0
  %568 = vmatmul.mubr.f32.gmra.mrb[0].mxu0 %v200
  %v569 = vpop.f32.mrb[0].mxu0
  %v570 = vadd.f32 0.0, %v569
  %v571 = vpop.f32.mrb[0].mxu0
  %572 = vdwg.mxu0
  %v573 = vadd.f32 %v311, %v535
  %v574 = vadd.f32 %v312, %v540
  %v575 = vadd.f32 %v313, %v545
  %v576 = vadd.f32 %v314, %v550
  %v577 = vadd.f32 %v315, %v555
  %v578 = vadd.f32 %v316, %v560
  %v579 = vadd.f32 %v317, %v565
  %v580 = vadd.f32 %v318, %v570
  %v581 = vld [vmem:[%s0 + $0xc8] sm:$0x3f]
  %v583 = vsel %vm177, %v581, 0
  %v586 = vsel %vm202, %v580, 0
  %588 = vmatprep.subr.mxu0 0.0
  %589 = vmatpush1.msra.mxu0 %v573
  %590 = vmatprep.subr.mxu0 0.0
  %591 = vmatpush1.msra.mxu0 %v574
  %592 = vmatprep.subr.mxu0 0.0
  %593 = vmatpush1.msra.mxu0 %v575
  %594 = vmatprep.subr.mxu0 0.0
  %595 = vmatpush1.msra.mxu0 %v576
  %596 = vmatprep.subr.mxu0 0.0
  %597 = vmatpush1.msra.mxu0 %v577
  %598 = vmatprep.subr.mxu0 0.0
  %599 = vmatpush1.msra.mxu0 %v578
  %600 = vmatprep.subr.mxu0 0.0
  %601 = vmatpush1.msra.mxu0 %v579
  %602 = vmatprep.subr.mxu0 0.0
  %603 = vmatpush1.msra.mxu0 %v586
  %604 = vmatprep.subr.mxu0 0.0
  %605 = vmatpush1.msra.mxu0 0.0
  %606 = vmatprep.subr.mxu0 0.0
  %607 = vmatpush1.msra.mxu0 0.0
  %608 = vmatprep.subr.mxu0 0.0
  %609 = vmatpush1.msra.mxu0 0.0
  %610 = vmatprep.subr.mxu0 0.0
  %611 = vmatpush1.msra.mxu0 0.0
  %612 = vmatprep.subr.mxu0 0.0
  %613 = vmatpush1.msra.mxu0 0.0
  %614 = vmatprep.subr.mxu0 0.0
  %615 = vmatpush1.msra.mxu0 0.0
  %616 = vmatprep.subr.mxu0 0.0
  %617 = vmatpush1.msra.mxu0 0.0
  %618 = vmatprep.subr.mxu0 0.0
  %619 = vmatpush1.msra.mxu0 0.0
  %620 = vmatprep.subr.mxu0 0.0
  %621 = vmatpush1.msra.mxu0 0.0
  %622 = vmatprep.subr.mxu0 0.0
  %623 = vmatpush1.msra.mxu0 0.0
  %624 = vmatprep.subr.mxu0 0.0
  %625 = vmatpush1.msra.mxu0 0.0
  %626 = vmatprep.subr.mxu0 0.0
  %627 = vmatpush1.msra.mxu0 0.0
  %628 = vmatprep.subr.mxu0 0.0
  %629 = vmatpush1.msra.mxu0 0.0
  %630 = vmatprep.subr.mxu0 0.0
  %631 = vmatpush1.msra.mxu0 0.0
  %632 = vmatprep.subr.mxu0 0.0
  %633 = vmatpush1.msra.mxu0 0.0
  %634 = vmatprep.subr.mxu0 0.0
  %635 = vmatpush1.msra.mxu0 0.0
  %636 = vmatprep.subr.mxu0 0.0
  %637 = vmatpush1.msra.mxu0 0.0
  %638 = vmatprep.subr.mxu0 0.0
  %639 = vmatpush1.msra.mxu0 0.0
  %640 = vmatprep.subr.mxu0 0.0
  %641 = vmatpush1.msra.mxu0 0.0
  %642 = vmatprep.subr.mxu0 0.0
  %643 = vmatpush1.msra.mxu0 0.0
  %644 = vmatprep.subr.mxu0 0.0
  %645 = vmatpush1.msra.mxu0 0.0
  %646 = vmatprep.subr.mxu0 0.0
  %647 = vmatpush1.msra.mxu0 0.0
  %648 = vmatprep.subr.mxu0 0.0
  %649 = vmatpush1.msra.mxu0 0.0
  %650 = vmatprep.subr.mxu0 0.0
  %651 = vmatpush1.msra.mxu0 0.0
  %652 = vmatprep.mubr.f32.mxu0 0.0
  %653 = vmatmul.mubr.f32.gmra.mrb[0].mxu0 %v583
  %v654 = vpop.f32.mrb[0].mxu0
  %v655 = vadd.f32 0.0, %v654
  %v656 = vpop.f32.mrb[0].mxu0
  %657 = vdwg.mxu0
  %v658 = vld [vmem:[%s0 + $0x40] sm:$0xff]
  %v659 = vld [vmem:[%s0 + $0x48] sm:$0xff]
  %v660 = vld [vmem:[%s0 + $0x50] sm:$0xff]
  %v661 = vld [vmem:[%s0 + $0x58] sm:$0xff]
  %v662 = vld [vmem:[%s0 + $0x60] sm:$0xff]
  %v663 = vld [vmem:[%s0 + $0x68] sm:$0xff]
  %v664 = vld [vmem:[%s0 + $0x70] sm:$0xff]
  %v665 = vld [vmem:[%s0 + $0x78] sm:$0xff]
  %v666 = vld [vmem:[%s0 + $0x80] sm:$0xff]
  %v667 = vld [vmem:[%s0 + $0xe8] sm:$0xff]
  %v668 = vld [vmem:[%s0 + $0xf0] sm:$0xff]
  %v669 = vld [vmem:[%s0 + $0xf8] sm:$0xff]
  %v670 = vld [vmem:[%s0 + $0x100] sm:$0xff]
  %v671 = vld [vmem:[%s0 + $0x108] sm:$0xff]
  %v672 = vld [vmem:[%s0 + $0x110] sm:$0xff]
  %v673 = vld [vmem:[%s0 + $0x118] sm:$0xff]
  %v674 = vld [vmem:[%s0 + $0x120] sm:$0xff]
  %v675 = vld [vmem:[%s0 + $0x128] sm:$0xff]
  %v676 = vld [vmem:[%s2] sm:$0xff]
  %v677 = vld [vmem:[%s2 + $0x8] sm:$0xff]
  %v678 = vld [vmem:[%s2 + $0x10] sm:$0xff]
  %v679 = vld [vmem:[%s2 + $0x18] sm:$0xff]
  %v680 = vld [vmem:[%s2 + $0x20] sm:$0xff]
  %v681 = vld [vmem:[%s2 + $0x28] sm:$0xff]
  %v682 = vld [vmem:[%s2 + $0x30] sm:$0xff]
  %v683 = vld [vmem:[%s2 + $0x38] sm:$0xff]
  %v685 = vsel %vm39, %v658, 0
  %v688 = vsel %vm39, %v659, 0
  %v691 = vsel %vm39, %v660, 0
  %v694 = vsel %vm39, %v661, 0
  %v697 = vsel %vm39, %v662, 0
  %v700 = vsel %vm39, %v663, 0
  %v703 = vsel %vm39, %v664, 0
  %v706 = vsel %vm39, %v665, 0
  %v709 = vsel %vm39, %v666, 0
  %711 = vmatprep.subr.mxu0 %v677
  %712 = vmatpush1.msra.mxu0 %v676
  %713 = vmatprep.subr.mxu0 %v679
  %714 = vmatpush1.msra.mxu0 %v678
  %715 = vmatprep.subr.mxu0 %v681
  %716 = vmatpush1.msra.mxu0 %v680
  %717 = vmatprep.subr.mxu0 %v683
  %718 = vmatpush1.msra.mxu0 %v682
  %719 = vmatprep.subr.mxu0 0.0
  %720 = vmatpush1.msra.mxu0 0.0
  %721 = vmatprep.subr.mxu0 0.0
  %722 = vmatpush1.msra.mxu0 0.0
  %723 = vmatprep.subr.mxu0 0.0
  %724 = vmatpush1.msra.mxu0 0.0
  %725 = vmatprep.subr.mxu0 0.0
  %726 = vmatpush1.msra.mxu0 0.0
  %727 = vmatprep.subr.mxu0 0.0
  %728 = vmatpush1.msra.mxu0 0.0
  %729 = vmatprep.subr.mxu0 0.0
  %730 = vmatpush1.msra.mxu0 0.0
  %731 = vmatprep.subr.mxu0 0.0
  %732 = vmatpush1.msra.mxu0 0.0
  %733 = vmatprep.subr.mxu0 0.0
  %734 = vmatpush1.msra.mxu0 0.0
  %735 = vmatprep.subr.mxu0 0.0
  %736 = vmatpush1.msra.mxu0 0.0
  %737 = vmatprep.subr.mxu0 0.0
  %738 = vmatpush1.msra.mxu0 0.0
  %739 = vmatprep.subr.mxu0 0.0
  %740 = vmatpush1.msra.mxu0 0.0
  %741 = vmatprep.subr.mxu0 0.0
  %742 = vmatpush1.msra.mxu0 0.0
  %743 = vmatprep.subr.mxu0 0.0
  %744 = vmatpush1.msra.mxu0 0.0
  %745 = vmatprep.subr.mxu0 0.0
  %746 = vmatpush1.msra.mxu0 0.0
  %747 = vmatprep.subr.mxu0 0.0
  %748 = vmatpush1.msra.mxu0 0.0
  %749 = vmatprep.subr.mxu0 0.0
  %750 = vmatpush1.msra.mxu0 0.0
  %751 = vmatprep.subr.mxu0 0.0
  %752 = vmatpush1.msra.mxu0 0.0
  %753 = vmatprep.subr.mxu0 0.0
  %754 = vmatpush1.msra.mxu0 0.0
  %755 = vmatprep.subr.mxu0 0.0
  %756 = vmatpush1.msra.mxu0 0.0
  %757 = vmatprep.subr.mxu0 0.0
  %758 = vmatpush1.msra.mxu0 0.0
  %759 = vmatprep.subr.mxu0 0.0
  %760 = vmatpush1.msra.mxu0 0.0
  %761 = vmatprep.subr.mxu0 0.0
  %762 = vmatpush1.msra.mxu0 0.0
  %763 = vmatprep.subr.mxu0 0.0
  %764 = vmatpush1.msra.mxu0 0.0
  %765 = vmatprep.subr.mxu0 0.0
  %766 = vmatpush1.msra.mxu0 0.0
  %767 = vmatprep.subr.mxu0 0.0
  %768 = vmatpush1.msra.mxu0 0.0
  %769 = vmatprep.subr.mxu0 0.0
  %770 = vmatpush1.msra.mxu0 0.0
  %771 = vmatprep.subr.mxu0 0.0
  %772 = vmatpush1.msra.mxu0 0.0
  %773 = vmatprep.subr.mxu0 0.0
  %774 = vmatpush1.msra.mxu0 0.0
  %775 = vmatprep.mubr.f32.mxu0 0.0
  %776 = vmatmul.mubr.f32.gmra.mrb[0].mxu0 %v685
  %v777 = vpop.f32.mrb[0].mxu0
  %v778 = vadd.f32 0.0, %v777
  %v779 = vpop.f32.mrb[0].mxu0
  %v780 = vadd.f32 0.0, %v779
  %781 = vmatprep.mubr.f32.mxu0 0.0
  %782 = vmatmul.mubr.f32.gmra.mrb[0].mxu0 %v688
  %v783 = vpop.f32.mrb[0].mxu0
  %v784 = vadd.f32 0.0, %v783
  %v785 = vpop.f32.mrb[0].mxu0
  %v786 = vadd.f32 0.0, %v785
  %787 = vmatprep.mubr.f32.mxu0 0.0
  %788 = vmatmul.mubr.f32.gmra.mrb[0].mxu0 %v691
  %v789 = vpop.f32.mrb[0].mxu0
  %v790 = vadd.f32 0.0, %v789
  %v791 = vpop.f32.mrb[0].mxu0
  %v792 = vadd.f32 0.0, %v791
  %793 = vmatprep.mubr.f32.mxu0 0.0
  %794 = vmatmul.mubr.f32.gmra.mrb[0].mxu0 %v694
  %v795 = vpop.f32.mrb[0].mxu0
  %v796 = vadd.f32 0.0, %v795
  %v797 = vpop.f32.mrb[0].mxu0
  %v798 = vadd.f32 0.0, %v797
  %799 = vmatprep.mubr.f32.mxu0 0.0
  %800 = vmatmul.mubr.f32.gmra.mrb[0].mxu0 %v697
  %v801 = vpop.f32.mrb[0].mxu0
  %v802 = vadd.f32 0.0, %v801
  %v803 = vpop.f32.mrb[0].mxu0
  %v804 = vadd.f32 0.0, %v803
  %805 = vmatprep.mubr.f32.mxu0 0.0
  %806 = vmatmul.mubr.f32.gmra.mrb[0].mxu0 %v700
  %v807 = vpop.f32.mrb[0].mxu0
  %v808 = vadd.f32 0.0, %v807
  %v809 = vpop.f32.mrb[0].mxu0
  %v810 = vadd.f32 0.0, %v809
  %811 = vmatprep.mubr.f32.mxu0 0.0
  %812 = vmatmul.mubr.f32.gmra.mrb[0].mxu0 %v703
  %v813 = vpop.f32.mrb[0].mxu0
  %v814 = vadd.f32 0.0, %v813
  %v815 = vpop.f32.mrb[0].mxu0
  %v816 = vadd.f32 0.0, %v815
  %817 = vmatprep.mubr.f32.mxu0 0.0
  %818 = vmatmul.mubr.f32.gmra.mrb[0].mxu0 %v706
  %v819 = vpop.f32.mrb[0].mxu0
  %v820 = vadd.f32 0.0, %v819
  %v821 = vpop.f32.mrb[0].mxu0
  %v822 = vadd.f32 0.0, %v821
  %823 = vmatprep.mubr.f32.mxu0 0.0
  %824 = vmatmul.mubr.f32.gmra.mrb[0].mxu0 %v709
  %v825 = vpop.f32.mrb[0].mxu0
  %v826 = vadd.f32 0.0, %v825
  %v827 = vpop.f32.mrb[0].mxu0
  %v828 = vadd.f32 0.0, %v827
  %829 = vdwg.mxu0
  %v830 = vrot.slane %v778, 6
  %v831 = vrot.slane %v784, 6
  %v832 = vrot.slane %v790, 6
  %v833 = vrot.slane %v796, 6
  %v834 = vrot.slane %v802, 6
  %v835 = vrot.slane %v808, 6
  %v836 = vrot.slane %v814, 6
  %v837 = vrot.slane %v820, 6
  %v838 = vrot.slane %v826, 6
  %v839 = vlaneseq
  %v840 = vshrl.u32 %v839, 7
  %vm841 = vcmp.lt.s32.totalorder %v840, 2
  %v842 = vsel %vm841, %v837, %v838
  %v843 = vsel %vm841, %v836, %v837
  %v844 = vsel %vm841, %v835, %v836
  %v845 = vsel %vm841, %v834, %v835
  %v846 = vsel %vm841, %v833, %v834
  %v847 = vsel %vm841, %v832, %v833
  %v848 = vsel %vm841, %v831, %v832
  %v849 = vsel %vm841, %v830, %v831
  %v850 = vsel %vm841, %v838, %v830
  %852 = vset.pattern.permute.xlu0 0
  %853 = vperm.xlu0 %852, %v667
  %v854 = vpop.permute.xlu0 %853
  %857 = vset.pattern.permute.xlu0 0
  %858 = vperm.xlu0 %857, %v668
  %v859 = vpop.permute.xlu0 %858
  %862 = vset.pattern.permute.xlu0 0
  %863 = vperm.xlu0 %862, %v669
  %v864 = vpop.permute.xlu0 %863
  %867 = vset.pattern.permute.xlu0 0
  %868 = vperm.xlu0 %867, %v670
  %v869 = vpop.permute.xlu0 %868
  %872 = vset.pattern.permute.xlu0 0
  %873 = vperm.xlu0 %872, %v671
  %v874 = vpop.permute.xlu0 %873
  %877 = vset.pattern.permute.xlu0 0
  %878 = vperm.xlu0 %877, %v672
  %v879 = vpop.permute.xlu0 %878
  %882 = vset.pattern.permute.xlu0 0
  %883 = vperm.xlu0 %882, %v673
  %v884 = vpop.permute.xlu0 %883
  %887 = vset.pattern.permute.xlu0 0
  %888 = vperm.xlu0 %887, %v674
  %v889 = vpop.permute.xlu0 %888
  %892 = vset.pattern.permute.xlu0 0
  %893 = vperm.xlu0 %892, %v675
  %v894 = vpop.permute.xlu0 %893
  %v896 = vmul.f32 %v854, %v850
  %v897 = vmul.f32 %v859, %v849
  %v898 = vmul.f32 %v864, %v848
  %v899 = vmul.f32 %v869, %v847
  %v900 = vmul.f32 %v874, %v846
  %v901 = vmul.f32 %v879, %v845
  %v902 = vmul.f32 %v884, %v844
  %v903 = vmul.f32 %v889, %v843
  %v904 = vmul.f32 %v894, %v842
  %914 = vrot.lane.b32.xlu0 %v896, 64
  %v915 = vpop.permute.xlu0 %914
  %916 = vrot.lane.b32.xlu0 %v897, 64
  %v917 = vpop.permute.xlu0 %916
  %918 = vrot.lane.b32.xlu0 %v898, 64
  %v919 = vpop.permute.xlu0 %918
  %920 = vrot.lane.b32.xlu0 %v899, 64
  %v921 = vpop.permute.xlu0 %920
  %922 = vrot.lane.b32.xlu0 %v900, 64
  %v923 = vpop.permute.xlu0 %922
  %924 = vrot.lane.b32.xlu0 %v901, 64
  %v925 = vpop.permute.xlu0 %924
  %926 = vrot.lane.b32.xlu0 %v902, 64
  %v927 = vpop.permute.xlu0 %926
  %928 = vrot.lane.b32.xlu0 %v903, 64
  %v929 = vpop.permute.xlu0 %928
  %930 = vrot.lane.b32.xlu0 %v904, 64
  %v931 = vpop.permute.xlu0 %930
  %v941 = vadd.f32 %v778, %v915
  %v942 = vadd.f32 %v784, %v917
  %v943 = vadd.f32 %v790, %v919
  %v944 = vadd.f32 %v796, %v921
  %v945 = vadd.f32 %v802, %v923
  %v946 = vadd.f32 %v808, %v925
  %v947 = vadd.f32 %v814, %v927
  %v948 = vadd.f32 %v820, %v929
  %v949 = vadd.f32 %v826, %v931
  %959 = vrot.lane.b32.xlu0 %v778, 96
  %v960 = vpop.permute.xlu0 %959
  %961 = vrot.lane.b32.xlu0 %v784, 96
  %v962 = vpop.permute.xlu0 %961
  %963 = vrot.lane.b32.xlu0 %v790, 96
  %v964 = vpop.permute.xlu0 %963
  %965 = vrot.lane.b32.xlu0 %v796, 96
  %v966 = vpop.permute.xlu0 %965
  %967 = vrot.lane.b32.xlu0 %v802, 96
  %v968 = vpop.permute.xlu0 %967
  %969 = vrot.lane.b32.xlu0 %v808, 96
  %v970 = vpop.permute.xlu0 %969
  %971 = vrot.lane.b32.xlu0 %v814, 96
  %v972 = vpop.permute.xlu0 %971
  %973 = vrot.lane.b32.xlu0 %v820, 96
  %v974 = vpop.permute.xlu0 %973
  %975 = vrot.lane.b32.xlu0 %v826, 96
  %v976 = vpop.permute.xlu0 %975
  %v986 = vrot.slane %v960, 7
  %v987 = vrot.slane %v962, 7
  %v988 = vrot.slane %v964, 7
  %v989 = vrot.slane %v966, 7
  %v990 = vrot.slane %v968, 7
  %v991 = vrot.slane %v970, 7
  %v992 = vrot.slane %v972, 7
  %v993 = vrot.slane %v974, 7
  %v994 = vrot.slane %v976, 7
  %vm995 = vcmp.lt.s32.totalorder %v840, 1
  %v996 = vsel %vm995, %v993, %v994
  %v997 = vsel %vm995, %v992, %v993
  %v998 = vsel %vm995, %v991, %v992
  %v999 = vsel %vm995, %v990, %v991
  %v1000 = vsel %vm995, %v989, %v990
  %v1001 = vsel %vm995, %v988, %v989
  %v1002 = vsel %vm995, %v987, %v988
  %v1003 = vsel %vm995, %v986, %v987
  %v1004 = vsel %vm995, %v994, %v986
  %1005 = vset.pattern.permute.xlu0 1
  %1006 = vperm.xlu0 %1005, %v667
  %v1007 = vpop.permute.xlu0 %1006
  %1009 = vset.pattern.permute.xlu0 1
  %1010 = vperm.xlu0 %1009, %v668
  %v1011 = vpop.permute.xlu0 %1010
  %1013 = vset.pattern.permute.xlu0 1
  %1014 = vperm.xlu0 %1013, %v669
  %v1015 = vpop.permute.xlu0 %1014
  %1017 = vset.pattern.permute.xlu0 1
  %1018 = vperm.xlu0 %1017, %v670
  %v1019 = vpop.permute.xlu0 %1018
  %1021 = vset.pattern.permute.xlu0 1
  %1022 = vperm.xlu0 %1021, %v671
  %v1023 = vpop.permute.xlu0 %1022
  %1025 = vset.pattern.permute.xlu0 1
  %1026 = vperm.xlu0 %1025, %v672
  %v1027 = vpop.permute.xlu0 %1026
  %1029 = vset.pattern.permute.xlu0 1
  %1030 = vperm.xlu0 %1029, %v673
  %v1031 = vpop.permute.xlu0 %1030
  %1033 = vset.pattern.permute.xlu0 1
  %1034 = vperm.xlu0 %1033, %v674
  %v1035 = vpop.permute.xlu0 %1034
  %1037 = vset.pattern.permute.xlu0 1
  %1038 = vperm.xlu0 %1037, %v675
  %v1039 = vpop.permute.xlu0 %1038
  %v1041 = vmul.f32 %v1007, %v1004
  %v1042 = vmul.f32 %v1011, %v1003
  %v1043 = vmul.f32 %v1015, %v1002
  %v1044 = vmul.f32 %v1019, %v1001
  %v1045 = vmul.f32 %v1023, %v1000
  %v1046 = vmul.f32 %v1027, %v999
  %v1047 = vmul.f32 %v1031, %v998
  %v1048 = vmul.f32 %v1035, %v997
  %v1049 = vmul.f32 %v1039, %v996
  %1059 = vrot.lane.b32.xlu0 %v1041, 64
  %v1060 = vpop.permute.xlu0 %1059
  %1061 = vrot.lane.b32.xlu0 %v1042, 64
  %v1062 = vpop.permute.xlu0 %1061
  %1063 = vrot.lane.b32.xlu0 %v1043, 64
  %v1064 = vpop.permute.xlu0 %1063
  %1065 = vrot.lane.b32.xlu0 %v1044, 64
  %v1066 = vpop.permute.xlu0 %1065
  %1067 = vrot.lane.b32.xlu0 %v1045, 64
  %v1068 = vpop.permute.xlu0 %1067
  %1069 = vrot.lane.b32.xlu0 %v1046, 64
  %v1070 = vpop.permute.xlu0 %1069
  %1071 = vrot.lane.b32.xlu0 %v1047, 64
  %v1072 = vpop.permute.xlu0 %1071
  %1073 = vrot.lane.b32.xlu0 %v1048, 64
  %v1074 = vpop.permute.xlu0 %1073
  %1075 = vrot.lane.b32.xlu0 %v1049, 64
  %v1076 = vpop.permute.xlu0 %1075
  %v1086 = vadd.f32 %v941, %v1060
  %v1087 = vadd.f32 %v942, %v1062
  %v1088 = vadd.f32 %v943, %v1064
  %v1089 = vadd.f32 %v944, %v1066
  %v1090 = vadd.f32 %v945, %v1068
  %v1091 = vadd.f32 %v946, %v1070
  %v1092 = vadd.f32 %v947, %v1072
  %v1093 = vadd.f32 %v948, %v1074
  %v1094 = vadd.f32 %v949, %v1076
  %1095 = vrot.lane.b32.xlu0 %v778, 32
  %v1096 = vpop.permute.xlu0 %1095
  %1097 = vrot.lane.b32.xlu0 %v784, 32
  %v1098 = vpop.permute.xlu0 %1097
  %1099 = vrot.lane.b32.xlu0 %v790, 32
  %v1100 = vpop.permute.xlu0 %1099
  %1101 = vrot.lane.b32.xlu0 %v796, 32
  %v1102 = vpop.permute.xlu0 %1101
  %1103 = vrot.lane.b32.xlu0 %v802, 32
  %v1104 = vpop.permute.xlu0 %1103
  %1105 = vrot.lane.b32.xlu0 %v808, 32
  %v1106 = vpop.permute.xlu0 %1105
  %1107 = vrot.lane.b32.xlu0 %v814, 32
  %v1108 = vpop.permute.xlu0 %1107
  %1109 = vrot.lane.b32.xlu0 %v820, 32
  %v1110 = vpop.permute.xlu0 %1109
  %1111 = vrot.lane.b32.xlu0 %v826, 32
  %v1112 = vpop.permute.xlu0 %1111
  %v1122 = vrot.slane %v1096, 1
  %v1123 = vrot.slane %v1098, 1
  %v1124 = vrot.slane %v1100, 1
  %v1125 = vrot.slane %v1102, 1
  %v1126 = vrot.slane %v1104, 1
  %v1127 = vrot.slane %v1106, 1
  %v1128 = vrot.slane %v1108, 1
  %v1129 = vrot.slane %v1110, 1
  %v1130 = vrot.slane %v1112, 1
  %vm1131 = vcmp.lt.s32.totalorder %v840, 7
  %v1132 = vsel %vm1131, %v1129, %v1130
  %v1133 = vsel %vm1131, %v1128, %v1129
  %v1134 = vsel %vm1131, %v1127, %v1128
  %v1135 = vsel %vm1131, %v1126, %v1127
  %v1136 = vsel %vm1131, %v1125, %v1126
  %v1137 = vsel %vm1131, %v1124, %v1125
  %v1138 = vsel %vm1131, %v1123, %v1124
  %v1139 = vsel %vm1131, %v1122, %v1123
  %v1140 = vsel %vm1131, %v1130, %v1122
  %1141 = vset.pattern.permute.xlu0 3
  %1142 = vperm.xlu0 %1141, %v667
  %v1143 = vpop.permute.xlu0 %1142
  %1145 = vset.pattern.permute.xlu0 3
  %1146 = vperm.xlu0 %1145, %v668
  %v1147 = vpop.permute.xlu0 %1146
  %1149 = vset.pattern.permute.xlu0 3
  %1150 = vperm.xlu0 %1149, %v669
  %v1151 = vpop.permute.xlu0 %1150
  %1153 = vset.pattern.permute.xlu0 3
  %1154 = vperm.xlu0 %1153, %v670
  %v1155 = vpop.permute.xlu0 %1154
  %1157 = vset.pattern.permute.xlu0 3
  %1158 = vperm.xlu0 %1157, %v671
  %v1159 = vpop.permute.xlu0 %1158
  %1161 = vset.pattern.permute.xlu0 3
  %1162 = vperm.xlu0 %1161, %v672
  %v1163 = vpop.permute.xlu0 %1162
  %1165 = vset.pattern.permute.xlu0 3
  %1166 = vperm.xlu0 %1165, %v673
  %v1167 = vpop.permute.xlu0 %1166
  %1169 = vset.pattern.permute.xlu0 3
  %1170 = vperm.xlu0 %1169, %v674
  %v1171 = vpop.permute.xlu0 %1170
  %1173 = vset.pattern.permute.xlu0 3
  %1174 = vperm.xlu0 %1173, %v675
  %v1175 = vpop.permute.xlu0 %1174
  %v1177 = vmul.f32 %v1143, %v1139
  %v1178 = vmul.f32 %v1147, %v1138
  %v1179 = vmul.f32 %v1151, %v1137
  %v1180 = vmul.f32 %v1155, %v1136
  %v1181 = vmul.f32 %v1159, %v1135
  %v1182 = vmul.f32 %v1163, %v1134
  %v1183 = vmul.f32 %v1167, %v1133
  %v1184 = vmul.f32 %v1171, %v1132
  %v1185 = vmul.f32 %v1175, %v1140
  %1195 = vrot.lane.b32.xlu0 %v1177, 64
  %v1196 = vpop.permute.xlu0 %1195
  %1197 = vrot.lane.b32.xlu0 %v1178, 64
  %v1198 = vpop.permute.xlu0 %1197
  %1199 = vrot.lane.b32.xlu0 %v1179, 64
  %v1200 = vpop.permute.xlu0 %1199
  %1201 = vrot.lane.b32.xlu0 %v1180, 64
  %v1202 = vpop.permute.xlu0 %1201
  %1203 = vrot.lane.b32.xlu0 %v1181, 64
  %v1204 = vpop.permute.xlu0 %1203
  %1205 = vrot.lane.b32.xlu0 %v1182, 64
  %v1206 = vpop.permute.xlu0 %1205
  %1207 = vrot.lane.b32.xlu0 %v1183, 64
  %v1208 = vpop.permute.xlu0 %1207
  %1209 = vrot.lane.b32.xlu0 %v1184, 64
  %v1210 = vpop.permute.xlu0 %1209
  %1211 = vrot.lane.b32.xlu0 %v1185, 64
  %v1212 = vpop.permute.xlu0 %1211
  %v1222 = vadd.f32 %v1086, %v1196
  %v1223 = vadd.f32 %v1087, %v1198
  %v1224 = vadd.f32 %v1088, %v1200
  %v1225 = vadd.f32 %v1089, %v1202
  %v1226 = vadd.f32 %v1090, %v1204
  %v1227 = vadd.f32 %v1091, %v1206
  %v1228 = vadd.f32 %v1092, %v1208
  %v1229 = vadd.f32 %v1093, %v1210
  %v1230 = vadd.f32 %v1094, %v1212
  %v1231 = vrot.slane %v780, 2
  %v1232 = vrot.slane %v786, 2
  %v1233 = vrot.slane %v792, 2
  %v1234 = vrot.slane %v798, 2
  %v1235 = vrot.slane %v804, 2
  %v1236 = vrot.slane %v810, 2
  %v1237 = vrot.slane %v816, 2
  %v1238 = vrot.slane %v822, 2
  %v1239 = vrot.slane %v828, 2
  %vm1240 = vcmp.lt.s32.totalorder %v840, 6
  %v1241 = vsel %vm1240, %v1238, %v1239
  %v1242 = vsel %vm1240, %v1237, %v1238
  %v1243 = vsel %vm1240, %v1236, %v1237
  %v1244 = vsel %vm1240, %v1235, %v1236
  %v1245 = vsel %vm1240, %v1234, %v1235
  %v1246 = vsel %vm1240, %v1233, %v1234
  %v1247 = vsel %vm1240, %v1232, %v1233
  %v1248 = vsel %vm1240, %v1231, %v1232
  %v1249 = vsel %vm1240, %v1239, %v1231
  %1250 = vset.pattern.permute.xlu0 4
  %1251 = vperm.xlu0 %1250, %v667
  %v1252 = vpop.permute.xlu0 %1251
  %1254 = vset.pattern.permute.xlu0 4
  %1255 = vperm.xlu0 %1254, %v668
  %v1256 = vpop.permute.xlu0 %1255
  %1258 = vset.pattern.permute.xlu0 4
  %1259 = vperm.xlu0 %1258, %v669
  %v1260 = vpop.permute.xlu0 %1259
  %1262 = vset.pattern.permute.xlu0 4
  %1263 = vperm.xlu0 %1262, %v670
  %v1264 = vpop.permute.xlu0 %1263
  %1266 = vset.pattern.permute.xlu0 4
  %1267 = vperm.xlu0 %1266, %v671
  %v1268 = vpop.permute.xlu0 %1267
  %1270 = vset.pattern.permute.xlu0 4
  %1271 = vperm.xlu0 %1270, %v672
  %v1272 = vpop.permute.xlu0 %1271
  %1274 = vset.pattern.permute.xlu0 4
  %1275 = vperm.xlu0 %1274, %v673
  %v1276 = vpop.permute.xlu0 %1275
  %1278 = vset.pattern.permute.xlu0 4
  %1279 = vperm.xlu0 %1278, %v674
  %v1280 = vpop.permute.xlu0 %1279
  %1282 = vset.pattern.permute.xlu0 4
  %1283 = vperm.xlu0 %1282, %v675
  %v1284 = vpop.permute.xlu0 %1283
  %v1286 = vmul.f32 %v1252, %v1248
  %v1287 = vmul.f32 %v1256, %v1247
  %v1288 = vmul.f32 %v1260, %v1246
  %v1289 = vmul.f32 %v1264, %v1245
  %v1290 = vmul.f32 %v1268, %v1244
  %v1291 = vmul.f32 %v1272, %v1243
  %v1292 = vmul.f32 %v1276, %v1242
  %v1293 = vmul.f32 %v1280, %v1241
  %v1294 = vmul.f32 %v1284, %v1249
  %1304 = vrot.lane.b32.xlu0 %v1286, 64
  %v1305 = vpop.permute.xlu0 %1304
  %1306 = vrot.lane.b32.xlu0 %v1287, 64
  %v1307 = vpop.permute.xlu0 %1306
  %1308 = vrot.lane.b32.xlu0 %v1288, 64
  %v1309 = vpop.permute.xlu0 %1308
  %1310 = vrot.lane.b32.xlu0 %v1289, 64
  %v1311 = vpop.permute.xlu0 %1310
  %1312 = vrot.lane.b32.xlu0 %v1290, 64
  %v1313 = vpop.permute.xlu0 %1312
  %1314 = vrot.lane.b32.xlu0 %v1291, 64
  %v1315 = vpop.permute.xlu0 %1314
  %1316 = vrot.lane.b32.xlu0 %v1292, 64
  %v1317 = vpop.permute.xlu0 %1316
  %1318 = vrot.lane.b32.xlu0 %v1293, 64
  %v1319 = vpop.permute.xlu0 %1318
  %1320 = vrot.lane.b32.xlu0 %v1294, 64
  %v1321 = vpop.permute.xlu0 %1320
  %v1331 = vadd.f32 %v1222, %v1305
  %v1332 = vadd.f32 %v1223, %v1307
  %v1333 = vadd.f32 %v1224, %v1309
  %v1334 = vadd.f32 %v1225, %v1311
  %v1335 = vadd.f32 %v1226, %v1313
  %v1336 = vadd.f32 %v1227, %v1315
  %v1337 = vadd.f32 %v1228, %v1317
  %v1338 = vadd.f32 %v1229, %v1319
  %v1339 = vadd.f32 %v1230, %v1321
  %v1340 = vld [vmem:[%s0 + $0x130] sm:$0x1]
  %v1341 = vlaneseq
  %v1342 = vshrl.u32 %v1341, 7
  %v1343 = vsub.s32 0, %v1342
  %v1344 = vrot.slane %v1340, %v1343
  %1346 = vrot.lane.b32.xlu0 %v1344, 64
  %v1347 = vpop.permute.xlu0 %1346
  %v1349 = vadd.f32 %v1331, %v1347
  %v1350 = vadd.f32 %v1332, %v1347
  %v1351 = vadd.f32 %v1333, %v1347
  %v1352 = vadd.f32 %v1334, %v1347
  %v1353 = vadd.f32 %v1335, %v1347
  %v1354 = vadd.f32 %v1336, %v1347
  %v1355 = vadd.f32 %v1337, %v1347
  %v1356 = vadd.f32 %v1338, %v1347
  %v1357 = vadd.f32 %v1339, %v1347
  %v1358 = vmax.f32 %v1349, 0.0
  %v1359 = vmax.f32 %v1350, 0.0
  %v1360 = vmax.f32 %v1351, 0.0
  %v1361 = vmax.f32 %v1352, 0.0
  %v1362 = vmax.f32 %v1353, 0.0
  %v1363 = vmax.f32 %v1354, 0.0
  %v1364 = vmax.f32 %v1355, 0.0
  %v1365 = vmax.f32 %v1356, 0.0
  %v1366 = vmax.f32 %v1357, 0.0
  %s1367 = scalar_lea.vmem %s2, 64
  %v1368 = vld [vmem:[%s1367] sm:$0xff]
  %v1369 = vld [vmem:[%s1367 + $0x8] sm:$0xff]
  %v1370 = vld [vmem:[%s1367 + $0x10] sm:$0xff]
  %v1371 = vld [vmem:[%s1367 + $0x18] sm:$0xff]
  %v1372 = vld [vmem:[%s1367 + $0x20] sm:$0xff]
  %v1373 = vld [vmem:[%s1367 + $0x28] sm:$0xff]
  %v1374 = vld [vmem:[%s1367 + $0x30] sm:$0xff]
  %v1375 = vld [vmem:[%s1367 + $0x38] sm:$0xff]
  %1385 = vrot.lane.b32.xlu0 %v1358, 64
  %v1386 = vpop.permute.xlu0 %1385
  %1387 = vrot.lane.b32.xlu0 %v1359, 64
  %v1388 = vpop.permute.xlu0 %1387
  %1389 = vrot.lane.b32.xlu0 %v1360, 64
  %v1390 = vpop.permute.xlu0 %1389
  %1391 = vrot.lane.b32.xlu0 %v1361, 64
  %v1392 = vpop.permute.xlu0 %1391
  %1393 = vrot.lane.b32.xlu0 %v1362, 64
  %v1394 = vpop.permute.xlu0 %1393
  %1395 = vrot.lane.b32.xlu0 %v1363, 64
  %v1396 = vpop.permute.xlu0 %1395
  %1397 = vrot.lane.b32.xlu0 %v1364, 64
  %v1398 = vpop.permute.xlu0 %1397
  %1399 = vrot.lane.b32.xlu0 %v1365, 64
  %v1400 = vpop.permute.xlu0 %1399
  %1401 = vrot.lane.b32.xlu0 %v1366, 64
  %v1402 = vpop.permute.xlu0 %1401
  %v1403 = vsel %vm39, %v1386, 0
  %v1405 = vsel %vm39, %v1388, 0
  %v1407 = vsel %vm39, %v1390, 0
  %v1409 = vsel %vm39, %v1392, 0
  %v1411 = vsel %vm39, %v1394, 0
  %v1413 = vsel %vm39, %v1396, 0
  %v1415 = vsel %vm39, %v1398, 0
  %v1417 = vsel %vm39, %v1400, 0
  %v1419 = vsel %vm39, %v1402, 0
  %1421 = vmatprep.subr.mxu0 %v1369
  %1422 = vmatpush1.msra.mxu0 %v1368
  %1423 = vmatprep.subr.mxu0 %v1371
  %1424 = vmatpush1.msra.mxu0 %v1370
  %1425 = vmatprep.subr.mxu0 %v1373
  %1426 = vmatpush1.msra.mxu0 %v1372
  %1427 = vmatprep.subr.mxu0 %v1375
  %1428 = vmatpush1.msra.mxu0 %v1374
  %1429 = vmatprep.subr.mxu0 0.0
  %1430 = vmatpush1.msra.mxu0 0.0
  %1431 = vmatprep.subr.mxu0 0.0
  %1432 = vmatpush1.msra.mxu0 0.0
  %1433 = vmatprep.subr.mxu0 0.0
  %1434 = vmatpush1.msra.mxu0 0.0
  %1435 = vmatprep.subr.mxu0 0.0
  %1436 = vmatpush1.msra.mxu0 0.0
  %1437 = vmatprep.subr.mxu0 0.0
  %1438 = vmatpush1.msra.mxu0 0.0
  %1439 = vmatprep.subr.mxu0 0.0
  %1440 = vmatpush1.msra.mxu0 0.0
  %1441 = vmatprep.subr.mxu0 0.0
  %1442 = vmatpush1.msra.mxu0 0.0
  %1443 = vmatprep.subr.mxu0 0.0
  %1444 = vmatpush1.msra.mxu0 0.0
  %1445 = vmatprep.subr.mxu0 0.0
  %1446 = vmatpush1.msra.mxu0 0.0
  %1447 = vmatprep.subr.mxu0 0.0
  %1448 = vmatpush1.msra.mxu0 0.0
  %1449 = vmatprep.subr.mxu0 0.0
  %1450 = vmatpush1.msra.mxu0 0.0
  %1451 = vmatprep.subr.mxu0 0.0
  %1452 = vmatpush1.msra.mxu0 0.0
  %1453 = vmatprep.subr.mxu0 0.0
  %1454 = vmatpush1.msra.mxu0 0.0
  %1455 = vmatprep.subr.mxu0 0.0
  %1456 = vmatpush1.msra.mxu0 0.0
  %1457 = vmatprep.subr.mxu0 0.0
  %1458 = vmatpush1.msra.mxu0 0.0
  %1459 = vmatprep.subr.mxu0 0.0
  %1460 = vmatpush1.msra.mxu0 0.0
  %1461 = vmatprep.subr.mxu0 0.0
  %1462 = vmatpush1.msra.mxu0 0.0
  %1463 = vmatprep.subr.mxu0 0.0
  %1464 = vmatpush1.msra.mxu0 0.0
  %1465 = vmatprep.subr.mxu0 0.0
  %1466 = vmatpush1.msra.mxu0 0.0
  %1467 = vmatprep.subr.mxu0 0.0
  %1468 = vmatpush1.msra.mxu0 0.0
  %1469 = vmatprep.subr.mxu0 0.0
  %1470 = vmatpush1.msra.mxu0 0.0
  %1471 = vmatprep.subr.mxu0 0.0
  %1472 = vmatpush1.msra.mxu0 0.0
  %1473 = vmatprep.subr.mxu0 0.0
  %1474 = vmatpush1.msra.mxu0 0.0
  %1475 = vmatprep.subr.mxu0 0.0
  %1476 = vmatpush1.msra.mxu0 0.0
  %1477 = vmatprep.subr.mxu0 0.0
  %1478 = vmatpush1.msra.mxu0 0.0
  %1479 = vmatprep.subr.mxu0 0.0
  %1480 = vmatpush1.msra.mxu0 0.0
  %1481 = vmatprep.subr.mxu0 0.0
  %1482 = vmatpush1.msra.mxu0 0.0
  %1483 = vmatprep.subr.mxu0 0.0
  %1484 = vmatpush1.msra.mxu0 0.0
  %1485 = vmatprep.mubr.f32.mxu0 0.0
  %1486 = vmatmul.mubr.f32.gmra.mrb[0].mxu0 %v1403
  %v1487 = vpop.f32.mrb[0].mxu0
  %v1488 = vadd.f32 0.0, %v1487
  %v1489 = vpop.f32.mrb[0].mxu0
  %v1490 = vadd.f32 0.0, %v1489
  %1491 = vmatprep.mubr.f32.mxu0 0.0
  %1492 = vmatmul.mubr.f32.gmra.mrb[0].mxu0 %v1405
  %v1493 = vpop.f32.mrb[0].mxu0
  %v1494 = vadd.f32 0.0, %v1493
  %v1495 = vpop.f32.mrb[0].mxu0
  %v1496 = vadd.f32 0.0, %v1495
  %1497 = vmatprep.mubr.f32.mxu0 0.0
  %1498 = vmatmul.mubr.f32.gmra.mrb[0].mxu0 %v1407
  %v1499 = vpop.f32.mrb[0].mxu0
  %v1500 = vadd.f32 0.0, %v1499
  %v1501 = vpop.f32.mrb[0].mxu0
  %v1502 = vadd.f32 0.0, %v1501
  %1503 = vmatprep.mubr.f32.mxu0 0.0
  %1504 = vmatmul.mubr.f32.gmra.mrb[0].mxu0 %v1409
  %v1505 = vpop.f32.mrb[0].mxu0
  %v1506 = vadd.f32 0.0, %v1505
  %v1507 = vpop.f32.mrb[0].mxu0
  %v1508 = vadd.f32 0.0, %v1507
  %1509 = vmatprep.mubr.f32.mxu0 0.0
  %1510 = vmatmul.mubr.f32.gmra.mrb[0].mxu0 %v1411
  %v1511 = vpop.f32.mrb[0].mxu0
  %v1512 = vadd.f32 0.0, %v1511
  %v1513 = vpop.f32.mrb[0].mxu0
  %v1514 = vadd.f32 0.0, %v1513
  %1515 = vmatprep.mubr.f32.mxu0 0.0
  %1516 = vmatmul.mubr.f32.gmra.mrb[0].mxu0 %v1413
  %v1517 = vpop.f32.mrb[0].mxu0
  %v1518 = vadd.f32 0.0, %v1517
  %v1519 = vpop.f32.mrb[0].mxu0
  %v1520 = vadd.f32 0.0, %v1519
  %1521 = vmatprep.mubr.f32.mxu0 0.0
  %1522 = vmatmul.mubr.f32.gmra.mrb[0].mxu0 %v1415
  %v1523 = vpop.f32.mrb[0].mxu0
  %v1524 = vadd.f32 0.0, %v1523
  %v1525 = vpop.f32.mrb[0].mxu0
  %v1526 = vadd.f32 0.0, %v1525
  %1527 = vmatprep.mubr.f32.mxu0 0.0
  %1528 = vmatmul.mubr.f32.gmra.mrb[0].mxu0 %v1417
  %v1529 = vpop.f32.mrb[0].mxu0
  %v1530 = vadd.f32 0.0, %v1529
  %v1531 = vpop.f32.mrb[0].mxu0
  %v1532 = vadd.f32 0.0, %v1531
  %1533 = vmatprep.mubr.f32.mxu0 0.0
  %1534 = vmatmul.mubr.f32.gmra.mrb[0].mxu0 %v1419
  %v1535 = vpop.f32.mrb[0].mxu0
  %v1536 = vadd.f32 0.0, %v1535
  %v1537 = vpop.f32.mrb[0].mxu0
  %v1538 = vadd.f32 0.0, %v1537
  %1539 = vdwg.mxu0
  %v1540 = vrot.slane %v1488, 6
  %v1541 = vrot.slane %v1494, 6
  %v1542 = vrot.slane %v1500, 6
  %v1543 = vrot.slane %v1506, 6
  %v1544 = vrot.slane %v1512, 6
  %v1545 = vrot.slane %v1518, 6
  %v1546 = vrot.slane %v1524, 6
  %v1547 = vrot.slane %v1530, 6
  %v1548 = vrot.slane %v1536, 6
  %v1549 = vsel %vm841, %v1547, %v1548
  %v1550 = vsel %vm841, %v1546, %v1547
  %v1551 = vsel %vm841, %v1545, %v1546
  %v1552 = vsel %vm841, %v1544, %v1545
  %v1553 = vsel %vm841, %v1543, %v1544
  %v1554 = vsel %vm841, %v1542, %v1543
  %v1555 = vsel %vm841, %v1541, %v1542
  %v1556 = vsel %vm841, %v1540, %v1541
  %v1557 = vsel %vm841, %v1548, %v1540
  %v1558 = vmul.f32 %v854, %v1557
  %v1559 = vmul.f32 %v859, %v1556
  %v1560 = vmul.f32 %v864, %v1555
  %v1561 = vmul.f32 %v869, %v1554
  %v1562 = vmul.f32 %v874, %v1553
  %v1563 = vmul.f32 %v879, %v1552
  %v1564 = vmul.f32 %v884, %v1551
  %v1565 = vmul.f32 %v889, %v1550
  %v1566 = vmul.f32 %v894, %v1549
  %1576 = vrot.lane.b32.xlu0 %v1558, 64
  %v1577 = vpop.permute.xlu0 %1576
  %1578 = vrot.lane.b32.xlu0 %v1559, 64
  %v1579 = vpop.permute.xlu0 %1578
  %1580 = vrot.lane.b32.xlu0 %v1560, 64
  %v1581 = vpop.permute.xlu0 %1580
  %1582 = vrot.lane.b32.xlu0 %v1561, 64
  %v1583 = vpop.permute.xlu0 %1582
  %1584 = vrot.lane.b32.xlu0 %v1562, 64
  %v1585 = vpop.permute.xlu0 %1584
  %1586 = vrot.lane.b32.xlu0 %v1563, 64
  %v1587 = vpop.permute.xlu0 %1586
  %1588 = vrot.lane.b32.xlu0 %v1564, 64
  %v1589 = vpop.permute.xlu0 %1588
  %1590 = vrot.lane.b32.xlu0 %v1565, 64
  %v1591 = vpop.permute.xlu0 %1590
  %1592 = vrot.lane.b32.xlu0 %v1566, 64
  %v1593 = vpop.permute.xlu0 %1592
  %v1603 = vadd.f32 %v1488, %v1577
  %v1604 = vadd.f32 %v1494, %v1579
  %v1605 = vadd.f32 %v1500, %v1581
  %v1606 = vadd.f32 %v1506, %v1583
  %v1607 = vadd.f32 %v1512, %v1585
  %v1608 = vadd.f32 %v1518, %v1587
  %v1609 = vadd.f32 %v1524, %v1589
  %v1610 = vadd.f32 %v1530, %v1591
  %v1611 = vadd.f32 %v1536, %v1593
  %1621 = vrot.lane.b32.xlu0 %v1488, 96
  %v1622 = vpop.permute.xlu0 %1621
  %1623 = vrot.lane.b32.xlu0 %v1494, 96
  %v1624 = vpop.permute.xlu0 %1623
  %1625 = vrot.lane.b32.xlu0 %v1500, 96
  %v1626 = vpop.permute.xlu0 %1625
  %1627 = vrot.lane.b32.xlu0 %v1506, 96
  %v1628 = vpop.permute.xlu0 %1627
  %1629 = vrot.lane.b32.xlu0 %v1512, 96
  %v1630 = vpop.permute.xlu0 %1629
  %1631 = vrot.lane.b32.xlu0 %v1518, 96
  %v1632 = vpop.permute.xlu0 %1631
  %1633 = vrot.lane.b32.xlu0 %v1524, 96
  %v1634 = vpop.permute.xlu0 %1633
  %1635 = vrot.lane.b32.xlu0 %v1530, 96
  %v1636 = vpop.permute.xlu0 %1635
  %1637 = vrot.lane.b32.xlu0 %v1536, 96
  %v1638 = vpop.permute.xlu0 %1637
  %v1648 = vrot.slane %v1622, 7
  %v1649 = vrot.slane %v1624, 7
  %v1650 = vrot.slane %v1626, 7
  %v1651 = vrot.slane %v1628, 7
  %v1652 = vrot.slane %v1630, 7
  %v1653 = vrot.slane %v1632, 7
  %v1654 = vrot.slane %v1634, 7
  %v1655 = vrot.slane %v1636, 7
  %v1656 = vrot.slane %v1638, 7
  %v1657 = vsel %vm995, %v1655, %v1656
  %v1658 = vsel %vm995, %v1654, %v1655
  %v1659 = vsel %vm995, %v1653, %v1654
  %v1660 = vsel %vm995, %v1652, %v1653
  %v1661 = vsel %vm995, %v1651, %v1652
  %v1662 = vsel %vm995, %v1650, %v1651
  %v1663 = vsel %vm995, %v1649, %v1650
  %v1664 = vsel %vm995, %v1648, %v1649
  %v1665 = vsel %vm995, %v1656, %v1648
  %v1666 = vmul.f32 %v1007, %v1665
  %v1667 = vmul.f32 %v1011, %v1664
  %v1668 = vmul.f32 %v1015, %v1663
  %v1669 = vmul.f32 %v1019, %v1662
  %v1670 = vmul.f32 %v1023, %v1661
  %v1671 = vmul.f32 %v1027, %v1660
  %v1672 = vmul.f32 %v1031, %v1659
  %v1673 = vmul.f32 %v1035, %v1658
  %v1674 = vmul.f32 %v1039, %v1657
  %1684 = vrot.lane.b32.xlu0 %v1666, 64
  %v1685 = vpop.permute.xlu0 %1684
  %1686 = vrot.lane.b32.xlu0 %v1667, 64
  %v1687 = vpop.permute.xlu0 %1686
  %1688 = vrot.lane.b32.xlu0 %v1668, 64
  %v1689 = vpop.permute.xlu0 %1688
  %1690 = vrot.lane.b32.xlu0 %v1669, 64
  %v1691 = vpop.permute.xlu0 %1690
  %1692 = vrot.lane.b32.xlu0 %v1670, 64
  %v1693 = vpop.permute.xlu0 %1692
  %1694 = vrot.lane.b32.xlu0 %v1671, 64
  %v1695 = vpop.permute.xlu0 %1694
  %1696 = vrot.lane.b32.xlu0 %v1672, 64
  %v1697 = vpop.permute.xlu0 %1696
  %1698 = vrot.lane.b32.xlu0 %v1673, 64
  %v1699 = vpop.permute.xlu0 %1698
  %1700 = vrot.lane.b32.xlu0 %v1674, 64
  %v1701 = vpop.permute.xlu0 %1700
  %v1711 = vadd.f32 %v1603, %v1685
  %v1712 = vadd.f32 %v1604, %v1687
  %v1713 = vadd.f32 %v1605, %v1689
  %v1714 = vadd.f32 %v1606, %v1691
  %v1715 = vadd.f32 %v1607, %v1693
  %v1716 = vadd.f32 %v1608, %v1695
  %v1717 = vadd.f32 %v1609, %v1697
  %v1718 = vadd.f32 %v1610, %v1699
  %v1719 = vadd.f32 %v1611, %v1701
  %1720 = vrot.lane.b32.xlu0 %v1488, 32
  %v1721 = vpop.permute.xlu0 %1720
  %1722 = vrot.lane.b32.xlu0 %v1494, 32
  %v1723 = vpop.permute.xlu0 %1722
  %1724 = vrot.lane.b32.xlu0 %v1500, 32
  %v1725 = vpop.permute.xlu0 %1724
  %1726 = vrot.lane.b32.xlu0 %v1506, 32
  %v1727 = vpop.permute.xlu0 %1726
  %1728 = vrot.lane.b32.xlu0 %v1512, 32
  %v1729 = vpop.permute.xlu0 %1728
  %1730 = vrot.lane.b32.xlu0 %v1518, 32
  %v1731 = vpop.permute.xlu0 %1730
  %1732 = vrot.lane.b32.xlu0 %v1524, 32
  %v1733 = vpop.permute.xlu0 %1732
  %1734 = vrot.lane.b32.xlu0 %v1530, 32
  %v1735 = vpop.permute.xlu0 %1734
  %1736 = vrot.lane.b32.xlu0 %v1536, 32
  %v1737 = vpop.permute.xlu0 %1736
  %v1747 = vrot.slane %v1721, 1
  %v1748 = vrot.slane %v1723, 1
  %v1749 = vrot.slane %v1725, 1
  %v1750 = vrot.slane %v1727, 1
  %v1751 = vrot.slane %v1729, 1
  %v1752 = vrot.slane %v1731, 1
  %v1753 = vrot.slane %v1733, 1
  %v1754 = vrot.slane %v1735, 1
  %v1755 = vrot.slane %v1737, 1
  %v1756 = vsel %vm1131, %v1754, %v1755
  %v1757 = vsel %vm1131, %v1753, %v1754
  %v1758 = vsel %vm1131, %v1752, %v1753
  %v1759 = vsel %vm1131, %v1751, %v1752
  %v1760 = vsel %vm1131, %v1750, %v1751
  %v1761 = vsel %vm1131, %v1749, %v1750
  %v1762 = vsel %vm1131, %v1748, %v1749
  %v1763 = vsel %vm1131, %v1747, %v1748
  %v1764 = vsel %vm1131, %v1755, %v1747
  %v1765 = vmul.f32 %v1143, %v1763
  %v1766 = vmul.f32 %v1147, %v1762
  %v1767 = vmul.f32 %v1151, %v1761
  %v1768 = vmul.f32 %v1155, %v1760
  %v1769 = vmul.f32 %v1159, %v1759
  %v1770 = vmul.f32 %v1163, %v1758
  %v1771 = vmul.f32 %v1167, %v1757
  %v1772 = vmul.f32 %v1171, %v1756
  %v1773 = vmul.f32 %v1175, %v1764
  %1783 = vrot.lane.b32.xlu0 %v1765, 64
  %v1784 = vpop.permute.xlu0 %1783
  %1785 = vrot.lane.b32.xlu0 %v1766, 64
  %v1786 = vpop.permute.xlu0 %1785
  %1787 = vrot.lane.b32.xlu0 %v1767, 64
  %v1788 = vpop.permute.xlu0 %1787
  %1789 = vrot.lane.b32.xlu0 %v1768, 64
  %v1790 = vpop.permute.xlu0 %1789
  %1791 = vrot.lane.b32.xlu0 %v1769, 64
  %v1792 = vpop.permute.xlu0 %1791
  %1793 = vrot.lane.b32.xlu0 %v1770, 64
  %v1794 = vpop.permute.xlu0 %1793
  %1795 = vrot.lane.b32.xlu0 %v1771, 64
  %v1796 = vpop.permute.xlu0 %1795
  %1797 = vrot.lane.b32.xlu0 %v1772, 64
  %v1798 = vpop.permute.xlu0 %1797
  %1799 = vrot.lane.b32.xlu0 %v1773, 64
  %v1800 = vpop.permute.xlu0 %1799
  %v1810 = vadd.f32 %v1711, %v1784
  %v1811 = vadd.f32 %v1712, %v1786
  %v1812 = vadd.f32 %v1713, %v1788
  %v1813 = vadd.f32 %v1714, %v1790
  %v1814 = vadd.f32 %v1715, %v1792
  %v1815 = vadd.f32 %v1716, %v1794
  %v1816 = vadd.f32 %v1717, %v1796
  %v1817 = vadd.f32 %v1718, %v1798
  %v1818 = vadd.f32 %v1719, %v1800
  %v1819 = vrot.slane %v1490, 2
  %v1820 = vrot.slane %v1496, 2
  %v1821 = vrot.slane %v1502, 2
  %v1822 = vrot.slane %v1508, 2
  %v1823 = vrot.slane %v1514, 2
  %v1824 = vrot.slane %v1520, 2
  %v1825 = vrot.slane %v1526, 2
  %v1826 = vrot.slane %v1532, 2
  %v1827 = vrot.slane %v1538, 2
  %v1828 = vsel %vm1240, %v1826, %v1827
  %v1829 = vsel %vm1240, %v1825, %v1826
  %v1830 = vsel %vm1240, %v1824, %v1825
  %v1831 = vsel %vm1240, %v1823, %v1824
  %v1832 = vsel %vm1240, %v1822, %v1823
  %v1833 = vsel %vm1240, %v1821, %v1822
  %v1834 = vsel %vm1240, %v1820, %v1821
  %v1835 = vsel %vm1240, %v1819, %v1820
  %v1836 = vsel %vm1240, %v1827, %v1819
  %v1837 = vmul.f32 %v1252, %v1835
  %v1838 = vmul.f32 %v1256, %v1834
  %v1839 = vmul.f32 %v1260, %v1833
  %v1840 = vmul.f32 %v1264, %v1832
  %v1841 = vmul.f32 %v1268, %v1831
  %v1842 = vmul.f32 %v1272, %v1830
  %v1843 = vmul.f32 %v1276, %v1829
  %v1844 = vmul.f32 %v1280, %v1828
  %v1845 = vmul.f32 %v1284, %v1836
  %1855 = vrot.lane.b32.xlu0 %v1837, 64
  %v1856 = vpop.permute.xlu0 %1855
  %1857 = vrot.lane.b32.xlu0 %v1838, 64
  %v1858 = vpop.permute.xlu0 %1857
  %1859 = vrot.lane.b32.xlu0 %v1839, 64
  %v1860 = vpop.permute.xlu0 %1859
  %1861 = vrot.lane.b32.xlu0 %v1840, 64
  %v1862 = vpop.permute.xlu0 %1861
  %1863 = vrot.lane.b32.xlu0 %v1841, 64
  %v1864 = vpop.permute.xlu0 %1863
  %1865 = vrot.lane.b32.xlu0 %v1842, 64
  %v1866 = vpop.permute.xlu0 %1865
  %1867 = vrot.lane.b32.xlu0 %v1843, 64
  %v1868 = vpop.permute.xlu0 %1867
  %1869 = vrot.lane.b32.xlu0 %v1844, 64
  %v1870 = vpop.permute.xlu0 %1869
  %1871 = vrot.lane.b32.xlu0 %v1845, 64
  %v1872 = vpop.permute.xlu0 %1871
  %v1882 = vadd.f32 %v1810, %v1856
  %v1883 = vadd.f32 %v1811, %v1858
  %v1884 = vadd.f32 %v1812, %v1860
  %v1885 = vadd.f32 %v1813, %v1862
  %v1886 = vadd.f32 %v1814, %v1864
  %v1887 = vadd.f32 %v1815, %v1866
  %v1888 = vadd.f32 %v1816, %v1868
  %v1889 = vadd.f32 %v1817, %v1870
  %v1890 = vadd.f32 %v1818, %v1872
  %v1891 = vld [vmem:[%s0 + $0x131] sm:$0x1]
  %v1892 = vlaneseq
  %v1893 = vshrl.u32 %v1892, 7
  %v1894 = vsub.s32 0, %v1893
  %v1895 = vrot.slane %v1891, %v1894
  %1897 = vrot.lane.b32.xlu0 %v1895, 64
  %v1898 = vpop.permute.xlu0 %1897
  %v1900 = vadd.f32 %v1882, %v1898
  %v1901 = vadd.f32 %v1883, %v1898
  %v1902 = vadd.f32 %v1884, %v1898
  %v1903 = vadd.f32 %v1885, %v1898
  %v1904 = vadd.f32 %v1886, %v1898
  %v1905 = vadd.f32 %v1887, %v1898
  %v1906 = vadd.f32 %v1888, %v1898
  %v1907 = vadd.f32 %v1889, %v1898
  %v1908 = vadd.f32 %v1890, %v1898
  %v1909 = vmax.f32 %v1900, 0.0
  %v1910 = vmax.f32 %v1901, 0.0
  %v1911 = vmax.f32 %v1902, 0.0
  %v1912 = vmax.f32 %v1903, 0.0
  %v1913 = vmax.f32 %v1904, 0.0
  %v1914 = vmax.f32 %v1905, 0.0
  %v1915 = vmax.f32 %v1906, 0.0
  %v1916 = vmax.f32 %v1907, 0.0
  %v1917 = vmax.f32 %v1908, 0.0
  %v1918 = vld [vmem:[%s0 + $0xd0] sm:$0x3f]
  %1928 = vrot.lane.b32.xlu0 %v1909, 64
  %v1929 = vpop.permute.xlu0 %1928
  %1930 = vrot.lane.b32.xlu0 %v1910, 64
  %v1931 = vpop.permute.xlu0 %1930
  %1932 = vrot.lane.b32.xlu0 %v1911, 64
  %v1933 = vpop.permute.xlu0 %1932
  %1934 = vrot.lane.b32.xlu0 %v1912, 64
  %v1935 = vpop.permute.xlu0 %1934
  %1936 = vrot.lane.b32.xlu0 %v1913, 64
  %v1937 = vpop.permute.xlu0 %1936
  %1938 = vrot.lane.b32.xlu0 %v1914, 64
  %v1939 = vpop.permute.xlu0 %1938
  %1940 = vrot.lane.b32.xlu0 %v1915, 64
  %v1941 = vpop.permute.xlu0 %1940
  %1942 = vrot.lane.b32.xlu0 %v1916, 64
  %v1943 = vpop.permute.xlu0 %1942
  %1944 = vrot.lane.b32.xlu0 %v1917, 64
  %v1945 = vpop.permute.xlu0 %1944
  %vm1955 = vcmask 588800
  %v1957 = vsel %vm1955, %v1918, 0
  %1959 = vmatprep.subr.mxu0 0.0
  %1960 = vmatpush1.msra.mxu0 %v1929
  %1961 = vmatprep.subr.mxu0 0.0
  %1962 = vmatpush1.msra.mxu0 %v1931
  %1963 = vmatprep.subr.mxu0 0.0
  %1964 = vmatpush1.msra.mxu0 %v1933
  %1965 = vmatprep.subr.mxu0 0.0
  %1966 = vmatpush1.msra.mxu0 %v1935
  %1967 = vmatprep.subr.mxu0 0.0
  %1968 = vmatpush1.msra.mxu0 %v1937
  %1969 = vmatprep.subr.mxu0 0.0
  %1970 = vmatpush1.msra.mxu0 %v1939
  %1971 = vmatprep.subr.mxu0 0.0
  %1972 = vmatpush1.msra.mxu0 %v1941
  %1973 = vmatprep.subr.mxu0 0.0
  %1974 = vmatpush1.msra.mxu0 %v1943
  %1975 = vmatprep.subr.mxu0 0.0
  %1976 = vmatpush1.msra.mxu0 %v1945
  %1977 = vmatprep.subr.mxu0 0.0
  %1978 = vmatpush1.msra.mxu0 0.0
  %1979 = vmatprep.subr.mxu0 0.0
  %1980 = vmatpush1.msra.mxu0 0.0
  %1981 = vmatprep.subr.mxu0 0.0
  %1982 = vmatpush1.msra.mxu0 0.0
  %1983 = vmatprep.subr.mxu0 0.0
  %1984 = vmatpush1.msra.mxu0 0.0
  %1985 = vmatprep.subr.mxu0 0.0
  %1986 = vmatpush1.msra.mxu0 0.0
  %1987 = vmatprep.subr.mxu0 0.0
  %1988 = vmatpush1.msra.mxu0 0.0
  %1989 = vmatprep.subr.mxu0 0.0
  %1990 = vmatpush1.msra.mxu0 0.0
  %1991 = vmatprep.subr.mxu0 0.0
  %1992 = vmatpush1.msra.mxu0 0.0
  %1993 = vmatprep.subr.mxu0 0.0
  %1994 = vmatpush1.msra.mxu0 0.0
  %1995 = vmatprep.subr.mxu0 0.0
  %1996 = vmatpush1.msra.mxu0 0.0
  %1997 = vmatprep.subr.mxu0 0.0
  %1998 = vmatpush1.msra.mxu0 0.0
  %1999 = vmatprep.subr.mxu0 0.0
  %2000 = vmatpush1.msra.mxu0 0.0
  %2001 = vmatprep.subr.mxu0 0.0
  %2002 = vmatpush1.msra.mxu0 0.0
  %2003 = vmatprep.subr.mxu0 0.0
  %2004 = vmatpush1.msra.mxu0 0.0
  %2005 = vmatprep.subr.mxu0 0.0
  %2006 = vmatpush1.msra.mxu0 0.0
  %2007 = vmatprep.subr.mxu0 0.0
  %2008 = vmatpush1.msra.mxu0 0.0
  %2009 = vmatprep.subr.mxu0 0.0
  %2010 = vmatpush1.msra.mxu0 0.0
  %2011 = vmatprep.subr.mxu0 0.0
  %2012 = vmatpush1.msra.mxu0 0.0
  %2013 = vmatprep.subr.mxu0 0.0
  %2014 = vmatpush1.msra.mxu0 0.0
  %2015 = vmatprep.subr.mxu0 0.0
  %2016 = vmatpush1.msra.mxu0 0.0
  %2017 = vmatprep.subr.mxu0 0.0
  %2018 = vmatpush1.msra.mxu0 0.0
  %2019 = vmatprep.subr.mxu0 0.0
  %2020 = vmatpush1.msra.mxu0 0.0
  %2021 = vmatprep.subr.mxu0 0.0
  %2022 = vmatpush1.msra.mxu0 0.0
  %2023 = vmatprep.mubr.f32.mxu0 0.0
  %2024 = vmatmul.mubr.f32.gmra.mrb[0].mxu0 %v1957
  %v2025 = vpop.f32.mrb[0].mxu0
  %v2026 = vadd.f32 0.0, %v2025
  %v2027 = vpop.f32.mrb[0].mxu0
  %2028 = vdwg.mxu0
  %v2029 = vld [vmem:[%s0 + $0x148] sm:$0xff]
  %v2030 = vld [vmem:[%s0 + $0x150] sm:$0xf]
  %v2031 = vld [vmem:[%s0 + $0x138] sm:$0xff]
  %v2032 = vld [vmem:[%s0 + $0x140] sm:$0xf]
  %vm2033 = vcmask 97280
  %v2035 = vsel %vm2033, %v2031, 0
  %v2038 = vsel %vm2033, %v2032, 0
  %v2041 = vsel %vm202, %v2030, 0
  %2043 = vmatprep.subr.mxu0 0.0
  %2044 = vmatpush1.msra.mxu0 %v2029
  %2045 = vmatprep.subr.mxu0 0.0
  %2046 = vmatpush1.msra.mxu0 %v2041
  %2047 = vmatprep.subr.mxu0 0.0
  %2048 = vmatpush1.msra.mxu0 0.0
  %2049 = vmatprep.subr.mxu0 0.0
  %2050 = vmatpush1.msra.mxu0 0.0
  %2051 = vmatprep.subr.mxu0 0.0
  %2052 = vmatpush1.msra.mxu0 0.0
  %2053 = vmatprep.subr.mxu0 0.0
  %2054 = vmatpush1.msra.mxu0 0.0
  %2055 = vmatprep.subr.mxu0 0.0
  %2056 = vmatpush1.msra.mxu0 0.0
  %2057 = vmatprep.subr.mxu0 0.0
  %2058 = vmatpush1.msra.mxu0 0.0
  %2059 = vmatprep.subr.mxu0 0.0
  %2060 = vmatpush1.msra.mxu0 0.0
  %2061 = vmatprep.subr.mxu0 0.0
  %2062 = vmatpush1.msra.mxu0 0.0
  %2063 = vmatprep.subr.mxu0 0.0
  %2064 = vmatpush1.msra.mxu0 0.0
  %2065 = vmatprep.subr.mxu0 0.0
  %2066 = vmatpush1.msra.mxu0 0.0
  %2067 = vmatprep.subr.mxu0 0.0
  %2068 = vmatpush1.msra.mxu0 0.0
  %2069 = vmatprep.subr.mxu0 0.0
  %2070 = vmatpush1.msra.mxu0 0.0
  %2071 = vmatprep.subr.mxu0 0.0
  %2072 = vmatpush1.msra.mxu0 0.0
  %2073 = vmatprep.subr.mxu0 0.0
  %2074 = vmatpush1.msra.mxu0 0.0
  %2075 = vmatprep.subr.mxu0 0.0
  %2076 = vmatpush1.msra.mxu0 0.0
  %2077 = vmatprep.subr.mxu0 0.0
  %2078 = vmatpush1.msra.mxu0 0.0
  %2079 = vmatprep.subr.mxu0 0.0
  %2080 = vmatpush1.msra.mxu0 0.0
  %2081 = vmatprep.subr.mxu0 0.0
  %2082 = vmatpush1.msra.mxu0 0.0
  %2083 = vmatprep.subr.mxu0 0.0
  %2084 = vmatpush1.msra.mxu0 0.0
  %2085 = vmatprep.subr.mxu0 0.0
  %2086 = vmatpush1.msra.mxu0 0.0
  %2087 = vmatprep.subr.mxu0 0.0
  %2088 = vmatpush1.msra.mxu0 0.0
  %2089 = vmatprep.subr.mxu0 0.0
  %2090 = vmatpush1.msra.mxu0 0.0
  %2091 = vmatprep.subr.mxu0 0.0
  %2092 = vmatpush1.msra.mxu0 0.0
  %2093 = vmatprep.subr.mxu0 0.0
  %2094 = vmatpush1.msra.mxu0 0.0
  %2095 = vmatprep.subr.mxu0 0.0
  %2096 = vmatpush1.msra.mxu0 0.0
  %2097 = vmatprep.subr.mxu0 0.0
  %2098 = vmatpush1.msra.mxu0 0.0
  %2099 = vmatprep.subr.mxu0 0.0
  %2100 = vmatpush1.msra.mxu0 0.0
  %2101 = vmatprep.subr.mxu0 0.0
  %2102 = vmatpush1.msra.mxu0 0.0
  %2103 = vmatprep.subr.mxu0 0.0
  %2104 = vmatpush1.msra.mxu0 0.0
  %2105 = vmatprep.subr.mxu0 0.0
  %2106 = vmatpush1.msra.mxu0 0.0
  %2107 = vmatprep.mubr.f32.mxu0 0.0
  %2108 = vmatmul.mubr.f32.gmra.mrb[0].mxu0 %v2035
  %v2109 = vpop.f32.mrb[0].mxu0
  %v2110 = vadd.f32 0.0, %v2109
  %v2111 = vpop.f32.mrb[0].mxu0
  %2112 = vmatprep.mubr.f32.mxu0 0.0
  %2113 = vmatmul.mubr.f32.gmra.mrb[0].mxu0 %v2038
  %v2114 = vpop.f32.mrb[0].mxu0
  %v2115 = vadd.f32 0.0, %v2114
  %v2116 = vpop.f32.mrb[0].mxu0
  %2117 = vdwg.mxu0
  %v2118 = vld [vmem:[%s1 + $0x48] sm:$0xff]
  %v2119 = vld [vmem:[%s1 + $0x50] sm:$0xff]
  %v2120 = vld [vmem:[%s1 + $0x58] sm:$0xff]
  %v2121 = vld [vmem:[%s1 + $0x60] sm:$0xff]
  %v2122 = vld [vmem:[%s1 + $0x68] sm:$0xff]
  %v2123 = vld [vmem:[%s1 + $0x70] sm:$0xff]
  %v2124 = vld [vmem:[%s1 + $0x78] sm:$0xff]
  %v2125 = vld [vmem:[%s1 + $0x80] sm:$0xff]
  %v2126 = vld [vmem:[%s1 + $0xc8] sm:$0x1]
  %v2127 = vlaneseq
  %v2128 = vshrl.u32 %v2127, 7
  %v2129 = vsub.s32 0, %v2128
  %v2130 = vrot.slane %v2126, %v2129
  %vm2131 = vcmask 523264
  %v2133 = vsel %vm2131, %v2110, 0
  %v2136 = vsel %vm2131, %v2115, 0
  %2138 = vmatprep.subr.mxu0 0.0
  %2139 = vmatpush1.msra.mxu0 %v2118
  %2140 = vmatprep.subr.mxu0 0.0
  %2141 = vmatpush1.msra.mxu0 %v2119
  %2142 = vmatprep.subr.mxu0 0.0
  %2143 = vmatpush1.msra.mxu0 %v2120
  %2144 = vmatprep.subr.mxu0 0.0
  %2145 = vmatpush1.msra.mxu0 %v2121
  %2146 = vmatprep.subr.mxu0 0.0
  %2147 = vmatpush1.msra.mxu0 %v2122
  %2148 = vmatprep.subr.mxu0 0.0
  %2149 = vmatpush1.msra.mxu0 %v2123
  %2150 = vmatprep.subr.mxu0 0.0
  %2151 = vmatpush1.msra.mxu0 %v2124
  %2152 = vmatprep.subr.mxu0 0.0
  %2153 = vmatpush1.msra.mxu0 %v2125
  %2154 = vmatprep.subr.mxu0 0.0
  %2155 = vmatpush1.msra.mxu0 0.0
  %2156 = vmatprep.subr.mxu0 0.0
  %2157 = vmatpush1.msra.mxu0 0.0
  %2158 = vmatprep.subr.mxu0 0.0
  %2159 = vmatpush1.msra.mxu0 0.0
  %2160 = vmatprep.subr.mxu0 0.0
  %2161 = vmatpush1.msra.mxu0 0.0
  %2162 = vmatprep.subr.mxu0 0.0
  %2163 = vmatpush1.msra.mxu0 0.0
  %2164 = vmatprep.subr.mxu0 0.0
  %2165 = vmatpush1.msra.mxu0 0.0
  %2166 = vmatprep.subr.mxu0 0.0
  %2167 = vmatpush1.msra.mxu0 0.0
  %2168 = vmatprep.subr.mxu0 0.0
  %2169 = vmatpush1.msra.mxu0 0.0
  %2170 = vmatprep.subr.mxu0 0.0
  %2171 = vmatpush1.msra.mxu0 0.0
  %2172 = vmatprep.subr.mxu0 0.0
  %2173 = vmatpush1.msra.mxu0 0.0
  %2174 = vmatprep.subr.mxu0 0.0
  %2175 = vmatpush1.msra.mxu0 0.0
  %2176 = vmatprep.subr.mxu0 0.0
  %2177 = vmatpush1.msra.mxu0 0.0
  %2178 = vmatprep.subr.mxu0 0.0
  %2179 = vmatpush1.msra.mxu0 0.0
  %2180 = vmatprep.subr.mxu0 0.0
  %2181 = vmatpush1.msra.mxu0 0.0
  %2182 = vmatprep.subr.mxu0 0.0
  %2183 = vmatpush1.msra.mxu0 0.0
  %2184 = vmatprep.subr.mxu0 0.0
  %2185 = vmatpush1.msra.mxu0 0.0
  %2186 = vmatprep.subr.mxu0 0.0
  %2187 = vmatpush1.msra.mxu0 0.0
  %2188 = vmatprep.subr.mxu0 0.0
  %2189 = vmatpush1.msra.mxu0 0.0
  %2190 = vmatprep.subr.mxu0 0.0
  %2191 = vmatpush1.msra.mxu0 0.0
  %2192 = vmatprep.subr.mxu0 0.0
  %2193 = vmatpush1.msra.mxu0 0.0
  %2194 = vmatprep.subr.mxu0 0.0
  %2195 = vmatpush1.msra.mxu0 0.0
  %2196 = vmatprep.subr.mxu0 0.0
  %2197 = vmatpush1.msra.mxu0 0.0
  %2198 = vmatprep.subr.mxu0 0.0
  %2199 = vmatpush1.msra.mxu0 0.0
  %2200 = vmatprep.subr.mxu0 0.0
  %2201 = vmatpush1.msra.mxu0 0.0
  %2202 = vmatprep.mubr.f32.mxu0 0.0
  %2203 = vmatmul.mubr.f32.gmra.mrb[0].mxu0 %v2133
  %v2204 = vpop.f32.mrb[0].mxu0
  %v2205 = vadd.f32 %v2130, %v2204
  %v2206 = vpop.f32.mrb[0].mxu0
  %2207 = vmatprep.mubr.f32.mxu0 0.0
  %2208 = vmatmul.mubr.f32.gmra.mrb[0].mxu0 %v2136
  %v2209 = vpop.f32.mrb[0].mxu0
  %v2210 = vadd.f32 %v2130, %v2209
  %v2211 = vpop.f32.mrb[0].mxu0
  %2212 = vdwg.mxu0
  %v2213 = vmax.f32 %v2205, 0.0
  %v2214 = vmax.f32 %v2210, 0.0
  %v2216 = vsel %vm202, %v2214, 0
  %2218 = vmatprep.subr.mxu0 0.0
  %2219 = vmatpush1.msra.mxu0 %v2213
  %2220 = vmatprep.subr.mxu0 0.0
  %2221 = vmatpush1.msra.mxu0 %v2216
  %2222 = vmatprep.subr.mxu0 0.0
  %2223 = vmatpush1.msra.mxu0 0.0
  %2224 = vmatprep.subr.mxu0 0.0
  %2225 = vmatpush1.msra.mxu0 0.0
  %2226 = vmatprep.subr.mxu0 0.0
  %2227 = vmatpush1.msra.mxu0 0.0
  %2228 = vmatprep.subr.mxu0 0.0
  %2229 = vmatpush1.msra.mxu0 0.0
  %2230 = vmatprep.subr.mxu0 0.0
  %2231 = vmatpush1.msra.mxu0 0.0
  %2232 = vmatprep.subr.mxu0 0.0
  %2233 = vmatpush1.msra.mxu0 0.0
  %2234 = vmatprep.subr.mxu0 0.0
  %2235 = vmatpush1.msra.mxu0 0.0
  %2236 = vmatprep.subr.mxu0 0.0
  %2237 = vmatpush1.msra.mxu0 0.0
  %2238 = vmatprep.subr.mxu0 0.0
  %2239 = vmatpush1.msra.mxu0 0.0
  %2240 = vmatprep.subr.mxu0 0.0
  %2241 = vmatpush1.msra.mxu0 0.0
  %2242 = vmatprep.subr.mxu0 0.0
  %2243 = vmatpush1.msra.mxu0 0.0
  %2244 = vmatprep.subr.mxu0 0.0
  %2245 = vmatpush1.msra.mxu0 0.0
  %2246 = vmatprep.subr.mxu0 0.0
  %2247 = vmatpush1.msra.mxu0 0.0
  %2248 = vmatprep.subr.mxu0 0.0
  %2249 = vmatpush1.msra.mxu0 0.0
  %2250 = vmatprep.subr.mxu0 0.0
  %2251 = vmatpush1.msra.mxu0 0.0
  %2252 = vmatprep.subr.mxu0 0.0
  %2253 = vmatpush1.msra.mxu0 0.0
  %2254 = vmatprep.subr.mxu0 0.0
  %2255 = vmatpush1.msra.mxu0 0.0
  %2256 = vmatprep.subr.mxu0 0.0
  %2257 = vmatpush1.msra.mxu0 0.0
  %2258 = vmatprep.subr.mxu0 0.0
  %2259 = vmatpush1.msra.mxu0 0.0
  %2260 = vmatprep.subr.mxu0 0.0
  %2261 = vmatpush1.msra.mxu0 0.0
  %2262 = vmatprep.subr.mxu0 0.0
  %2263 = vmatpush1.msra.mxu0 0.0
  %2264 = vmatprep.subr.mxu0 0.0
  %2265 = vmatpush1.msra.mxu0 0.0
  %2266 = vmatprep.subr.mxu0 0.0
  %2267 = vmatpush1.msra.mxu0 0.0
  %2268 = vmatprep.subr.mxu0 0.0
  %2269 = vmatpush1.msra.mxu0 0.0
  %2270 = vmatprep.subr.mxu0 0.0
  %2271 = vmatpush1.msra.mxu0 0.0
  %2272 = vmatprep.subr.mxu0 0.0
  %2273 = vmatpush1.msra.mxu0 0.0
  %2274 = vmatprep.subr.mxu0 0.0
  %2275 = vmatpush1.msra.mxu0 0.0
  %2276 = vmatprep.subr.mxu0 0.0
  %2277 = vmatpush1.msra.mxu0 0.0
  %2278 = vmatprep.subr.mxu0 0.0
  %2279 = vmatpush1.msra.mxu0 0.0
  %2280 = vmatprep.subr.mxu0 0.0
  %2281 = vmatpush1.msra.mxu0 0.0
  %2282 = vmatprep.mubr.f32.mxu0 0.0
  %2283 = vmatmul.mubr.f32.gmra.mrb[0].mxu0 %v2035
  %v2284 = vpop.f32.mrb[0].mxu0
  %v2285 = vadd.f32 0.0, %v2284
  %v2286 = vpop.f32.mrb[0].mxu0
  %2287 = vmatprep.mubr.f32.mxu0 0.0
  %2288 = vmatmul.mubr.f32.gmra.mrb[0].mxu0 %v2038
  %v2289 = vpop.f32.mrb[0].mxu0
  %v2290 = vadd.f32 0.0, %v2289
  %v2291 = vpop.f32.mrb[0].mxu0
  %2292 = vdwg.mxu0
  %v2293 = vld [vmem:[%s1 + $0x88] sm:$0xff]
  %v2294 = vld [vmem:[%s1 + $0x90] sm:$0xff]
  %v2295 = vld [vmem:[%s1 + $0x98] sm:$0xff]
  %v2296 = vld [vmem:[%s1 + $0xa0] sm:$0xff]
  %v2297 = vld [vmem:[%s1 + $0xa8] sm:$0xff]
  %v2298 = vld [vmem:[%s1 + $0xb0] sm:$0xff]
  %v2299 = vld [vmem:[%s1 + $0xb8] sm:$0xff]
  %v2300 = vld [vmem:[%s1 + $0xc0] sm:$0xff]
  %v2301 = vld [vmem:[%s1 + $0xc9] sm:$0x1]
  %v2302 = vlaneseq
  %v2303 = vshrl.u32 %v2302, 7
  %v2304 = vsub.s32 0, %v2303
  %v2305 = vrot.slane %v2301, %v2304
  %v2307 = vsel %vm2131, %v2285, 0
  %v2310 = vsel %vm2131, %v2290, 0
  %2312 = vmatprep.subr.mxu0 0.0
  %2313 = vmatpush1.msra.mxu0 %v2293
  %2314 = vmatprep.subr.mxu0 0.0
  %2315 = vmatpush1.msra.mxu0 %v2294
  %2316 = vmatprep.subr.mxu0 0.0
  %2317 = vmatpush1.msra.mxu0 %v2295
  %2318 = vmatprep.subr.mxu0 0.0
  %2319 = vmatpush1.msra.mxu0 %v2296
  %2320 = vmatprep.subr.mxu0 0.0
  %2321 = vmatpush1.msra.mxu0 %v2297
  %2322 = vmatprep.subr.mxu0 0.0
  %2323 = vmatpush1.msra.mxu0 %v2298
  %2324 = vmatprep.subr.mxu0 0.0
  %2325 = vmatpush1.msra.mxu0 %v2299
  %2326 = vmatprep.subr.mxu0 0.0
  %2327 = vmatpush1.msra.mxu0 %v2300
  %2328 = vmatprep.subr.mxu0 0.0
  %2329 = vmatpush1.msra.mxu0 0.0
  %2330 = vmatprep.subr.mxu0 0.0
  %2331 = vmatpush1.msra.mxu0 0.0
  %2332 = vmatprep.subr.mxu0 0.0
  %2333 = vmatpush1.msra.mxu0 0.0
  %2334 = vmatprep.subr.mxu0 0.0
  %2335 = vmatpush1.msra.mxu0 0.0
  %2336 = vmatprep.subr.mxu0 0.0
  %2337 = vmatpush1.msra.mxu0 0.0
  %2338 = vmatprep.subr.mxu0 0.0
  %2339 = vmatpush1.msra.mxu0 0.0
  %2340 = vmatprep.subr.mxu0 0.0
  %2341 = vmatpush1.msra.mxu0 0.0
  %2342 = vmatprep.subr.mxu0 0.0
  %2343 = vmatpush1.msra.mxu0 0.0
  %2344 = vmatprep.subr.mxu0 0.0
  %2345 = vmatpush1.msra.mxu0 0.0
  %2346 = vmatprep.subr.mxu0 0.0
  %2347 = vmatpush1.msra.mxu0 0.0
  %2348 = vmatprep.subr.mxu0 0.0
  %2349 = vmatpush1.msra.mxu0 0.0
  %2350 = vmatprep.subr.mxu0 0.0
  %2351 = vmatpush1.msra.mxu0 0.0
  %2352 = vmatprep.subr.mxu0 0.0
  %2353 = vmatpush1.msra.mxu0 0.0
  %2354 = vmatprep.subr.mxu0 0.0
  %2355 = vmatpush1.msra.mxu0 0.0
  %2356 = vmatprep.subr.mxu0 0.0
  %2357 = vmatpush1.msra.mxu0 0.0
  %2358 = vmatprep.subr.mxu0 0.0
  %2359 = vmatpush1.msra.mxu0 0.0
  %2360 = vmatprep.subr.mxu0 0.0
  %2361 = vmatpush1.msra.mxu0 0.0
  %2362 = vmatprep.subr.mxu0 0.0
  %2363 = vmatpush1.msra.mxu0 0.0
  %2364 = vmatprep.subr.mxu0 0.0
  %2365 = vmatpush1.msra.mxu0 0.0
  %2366 = vmatprep.subr.mxu0 0.0
  %2367 = vmatpush1.msra.mxu0 0.0
  %2368 = vmatprep.subr.mxu0 0.0
  %2369 = vmatpush1.msra.mxu0 0.0
  %2370 = vmatprep.subr.mxu0 0.0
  %2371 = vmatpush1.msra.mxu0 0.0
  %2372 = vmatprep.subr.mxu0 0.0
  %2373 = vmatpush1.msra.mxu0 0.0
  %2374 = vmatprep.subr.mxu0 0.0
  %2375 = vmatpush1.msra.mxu0 0.0
  %2376 = vmatprep.mubr.f32.mxu0 0.0
  %2377 = vmatmul.mubr.f32.gmra.mrb[0].mxu0 %v2307
  %v2378 = vpop.f32.mrb[0].mxu0
  %v2379 = vadd.f32 %v2305, %v2378
  %v2380 = vpop.f32.mrb[0].mxu0
  %2381 = vmatprep.mubr.f32.mxu0 0.0
  %2382 = vmatmul.mubr.f32.gmra.mrb[0].mxu0 %v2310
  %v2383 = vpop.f32.mrb[0].mxu0
  %v2384 = vadd.f32 %v2305, %v2383
  %v2385 = vpop.f32.mrb[0].mxu0
  %2386 = vdwg.mxu0
  %v2387 = vmax.f32 %v2379, 0.0
  %v2388 = vmax.f32 %v2384, 0.0
  %v2389 = vld [vmem:[%s0 + $0x158] sm:$0xff]
  %v2390 = vld [vmem:[%s1 + $0xd0] sm:$0xff]
  %v2391 = vld [vmem:[%s1 + $0xd8] sm:$0xff]
  %v2392 = vld [vmem:[%s1 + $0xe0] sm:$0xff]
  %v2393 = vld [vmem:[%s1 + $0xe8] sm:$0xff]
  %v2394 = vld [vmem:[%s1 + $0xf0] sm:$0x1]
  %v2395 = vlaneseq
  %v2396 = vshrl.u32 %v2395, 7
  %v2397 = vsub.s32 0, %v2396
  %v2398 = vrot.slane %v2394, %v2397
  %v2400 = vsel %vm39, %v2389, 0
  %2402 = vmatprep.subr.mxu0 0.0
  %2403 = vmatpush1.msra.mxu0 %v2390
  %2404 = vmatprep.subr.mxu0 0.0
  %2405 = vmatpush1.msra.mxu0 %v2391
  %2406 = vmatprep.subr.mxu0 0.0
  %2407 = vmatpush1.msra.mxu0 %v2392
  %2408 = vmatprep.subr.mxu0 0.0
  %2409 = vmatpush1.msra.mxu0 %v2393
  %2410 = vmatprep.subr.mxu0 0.0
  %2411 = vmatpush1.msra.mxu0 0.0
  %2412 = vmatprep.subr.mxu0 0.0
  %2413 = vmatpush1.msra.mxu0 0.0
  %2414 = vmatprep.subr.mxu0 0.0
  %2415 = vmatpush1.msra.mxu0 0.0
  %2416 = vmatprep.subr.mxu0 0.0
  %2417 = vmatpush1.msra.mxu0 0.0
  %2418 = vmatprep.subr.mxu0 0.0
  %2419 = vmatpush1.msra.mxu0 0.0
  %2420 = vmatprep.subr.mxu0 0.0
  %2421 = vmatpush1.msra.mxu0 0.0
  %2422 = vmatprep.subr.mxu0 0.0
  %2423 = vmatpush1.msra.mxu0 0.0
  %2424 = vmatprep.subr.mxu0 0.0
  %2425 = vmatpush1.msra.mxu0 0.0
  %2426 = vmatprep.subr.mxu0 0.0
  %2427 = vmatpush1.msra.mxu0 0.0
  %2428 = vmatprep.subr.mxu0 0.0
  %2429 = vmatpush1.msra.mxu0 0.0
  %2430 = vmatprep.subr.mxu0 0.0
  %2431 = vmatpush1.msra.mxu0 0.0
  %2432 = vmatprep.subr.mxu0 0.0
  %2433 = vmatpush1.msra.mxu0 0.0
  %2434 = vmatprep.subr.mxu0 0.0
  %2435 = vmatpush1.msra.mxu0 0.0
  %2436 = vmatprep.subr.mxu0 0.0
  %2437 = vmatpush1.msra.mxu0 0.0
  %2438 = vmatprep.subr.mxu0 0.0
  %2439 = vmatpush1.msra.mxu0 0.0
  %2440 = vmatprep.subr.mxu0 0.0
  %2441 = vmatpush1.msra.mxu0 0.0
  %2442 = vmatprep.subr.mxu0 0.0
  %2443 = vmatpush1.msra.mxu0 0.0
  %2444 = vmatprep.subr.mxu0 0.0
  %2445 = vmatpush1.msra.mxu0 0.0
  %2446 = vmatprep.subr.mxu0 0.0
  %2447 = vmatpush1.msra.mxu0 0.0
  %2448 = vmatprep.subr.mxu0 0.0
  %2449 = vmatpush1.msra.mxu0 0.0
  %2450 = vmatprep.subr.mxu0 0.0
  %2451 = vmatpush1.msra.mxu0 0.0
  %2452 = vmatprep.subr.mxu0 0.0
  %2453 = vmatpush1.msra.mxu0 0.0
  %2454 = vmatprep.subr.mxu0 0.0
  %2455 = vmatpush1.msra.mxu0 0.0
  %2456 = vmatprep.subr.mxu0 0.0
  %2457 = vmatpush1.msra.mxu0 0.0
  %2458 = vmatprep.subr.mxu0 0.0
  %2459 = vmatpush1.msra.mxu0 0.0
  %2460 = vmatprep.subr.mxu0 0.0
  %2461 = vmatpush1.msra.mxu0 0.0
  %2462 = vmatprep.subr.mxu0 0.0
  %2463 = vmatpush1.msra.mxu0 0.0
  %2464 = vmatprep.subr.mxu0 0.0
  %2465 = vmatpush1.msra.mxu0 0.0
  %2466 = vmatprep.mubr.f32.mxu0 0.0
  %2467 = vmatmul.mubr.f32.gmra.mrb[0].mxu0 %v2400
  %v2468 = vpop.f32.mrb[0].mxu0
  %v2469 = vadd.f32 %v2398, %v2468
  %v2470 = vpop.f32.mrb[0].mxu0
  %2471 = vdwg.mxu0
  %v2472 = vmax.f32 %v2469, 0.0
  %v2473 = vld [vmem:[%s1 + $0xf8] sm:$0xff]
  %v2474 = vld [vmem:[%s1 + $0x100] sm:$0xff]
  %v2475 = vld [vmem:[%s1 + $0x108] sm:$0xff]
  %v2476 = vld [vmem:[%s1 + $0x110] sm:$0xff]
  %v2477 = vld [vmem:[%s1 + $0x118] sm:$0xff]
  %v2478 = vld [vmem:[%s1 + $0x120] sm:$0xff]
  %v2479 = vld [vmem:[%s1 + $0x128] sm:$0xff]
  %v2480 = vld [vmem:[%s1 + $0x130] sm:$0xff]
  %v2481 = vld [vmem:[%s1 + $0x138] sm:$0xff]
  %v2482 = vld [vmem:[%s1 + $0x140] sm:$0xff]
  %v2483 = vld [vmem:[%s1 + $0x148] sm:$0xff]
  %v2484 = vld [vmem:[%s1 + $0x150] sm:$0xff]
  %v2485 = vld [vmem:[%s1 + $0x158] sm:$0xff]
  %v2486 = vld [vmem:[%s1 + $0x160] sm:$0xff]
  %v2487 = vld [vmem:[%s1 + $0x168] sm:$0xff]
  %v2488 = vld [vmem:[%s1 + $0x170] sm:$0xff]
  %v2489 = vld [vmem:[%s1 + $0x178] sm:$0x1]
  %v2490 = vlaneseq
  %v2491 = vshrl.u32 %v2490, 7
  %v2492 = vsub.s32 0, %v2491
  %v2493 = vrot.slane %v2489, %v2492
  %2494 = vmatprep.subr.mxu0 0.0
  %2495 = vmatpush1.msra.mxu0 %v2473
  %2496 = vmatprep.subr.mxu0 0.0
  %2497 = vmatpush1.msra.mxu0 %v2474
  %2498 = vmatprep.subr.mxu0 0.0
  %2499 = vmatpush1.msra.mxu0 %v2475
  %2500 = vmatprep.subr.mxu0 0.0
  %2501 = vmatpush1.msra.mxu0 %v2476
  %2502 = vmatprep.subr.mxu0 0.0
  %2503 = vmatpush1.msra.mxu0 %v2477
  %2504 = vmatprep.subr.mxu0 0.0
  %2505 = vmatpush1.msra.mxu0 %v2478
  %2506 = vmatprep.subr.mxu0 0.0
  %2507 = vmatpush1.msra.mxu0 %v2479
  %2508 = vmatprep.subr.mxu0 0.0
  %2509 = vmatpush1.msra.mxu0 %v2480
  %2510 = vmatprep.subr.mxu0 0.0
  %2511 = vmatpush1.msra.mxu0 %v2481
  %2512 = vmatprep.subr.mxu0 0.0
  %2513 = vmatpush1.msra.mxu0 %v2482
  %2514 = vmatprep.subr.mxu0 0.0
  %2515 = vmatpush1.msra.mxu0 %v2483
  %2516 = vmatprep.subr.mxu0 0.0
  %2517 = vmatpush1.msra.mxu0 %v2484
  %2518 = vmatprep.subr.mxu0 0.0
  %2519 = vmatpush1.msra.mxu0 %v2485
  %2520 = vmatprep.subr.mxu0 0.0
  %2521 = vmatpush1.msra.mxu0 %v2486
  %2522 = vmatprep.subr.mxu0 0.0
  %2523 = vmatpush1.msra.mxu0 %v2487
  %2524 = vmatprep.subr.mxu0 0.0
  %2525 = vmatpush1.msra.mxu0 %v2488
  %2526 = vmatprep.subr.mxu0 0.0
  %2527 = vmatpush1.msra.mxu0 0.0
  %2528 = vmatprep.subr.mxu0 0.0
  %2529 = vmatpush1.msra.mxu0 0.0
  %2530 = vmatprep.subr.mxu0 0.0
  %2531 = vmatpush1.msra.mxu0 0.0
  %2532 = vmatprep.subr.mxu0 0.0
  %2533 = vmatpush1.msra.mxu0 0.0
  %2534 = vmatprep.subr.mxu0 0.0
  %2535 = vmatpush1.msra.mxu0 0.0
  %2536 = vmatprep.subr.mxu0 0.0
  %2537 = vmatpush1.msra.mxu0 0.0
  %2538 = vmatprep.subr.mxu0 0.0
  %2539 = vmatpush1.msra.mxu0 0.0
  %2540 = vmatprep.subr.mxu0 0.0
  %2541 = vmatpush1.msra.mxu0 0.0
  %2542 = vmatprep.subr.mxu0 0.0
  %2543 = vmatpush1.msra.mxu0 0.0
  %2544 = vmatprep.subr.mxu0 0.0
  %2545 = vmatpush1.msra.mxu0 0.0
  %2546 = vmatprep.subr.mxu0 0.0
  %2547 = vmatpush1.msra.mxu0 0.0
  %2548 = vmatprep.subr.mxu0 0.0
  %2549 = vmatpush1.msra.mxu0 0.0
  %2550 = vmatprep.subr.mxu0 0.0
  %2551 = vmatpush1.msra.mxu0 0.0
  %2552 = vmatprep.subr.mxu0 0.0
  %2553 = vmatpush1.msra.mxu0 0.0
  %2554 = vmatprep.subr.mxu0 0.0
  %2555 = vmatpush1.msra.mxu0 0.0
  %2556 = vmatprep.subr.mxu0 0.0
  %2557 = vmatpush1.msra.mxu0 0.0
  %2558 = vmatprep.mubr.f32.mxu0 0.0
  %2559 = vmatmul.mubr.f32.gmra.mrb[0].mxu0 %v2472
  %v2560 = vpop.f32.mrb[0].mxu0
  %v2561 = vadd.f32 %v2493, %v2560
  %v2562 = vpop.f32.mrb[0].mxu0
  %2563 = vdwg.mxu0
  %v2564 = vmax.f32 %v2561, 0.0
  %v2565 = vld [vmem:[%s1 + $0x180] sm:$0xff]
  %v2566 = vld [vmem:[%s1 + $0x188] sm:$0xff]
  %v2567 = vld [vmem:[%s1 + $0x190] sm:$0xff]
  %v2568 = vld [vmem:[%s1 + $0x198] sm:$0xff]
  %v2569 = vld [vmem:[%s1 + $0x1a0] sm:$0xff]
  %v2570 = vld [vmem:[%s1 + $0x1a8] sm:$0xff]
  %v2571 = vld [vmem:[%s1 + $0x1b0] sm:$0xff]
  %v2572 = vld [vmem:[%s1 + $0x1b8] sm:$0xff]
  %v2573 = vld [vmem:[%s1 + $0x1c0] sm:$0x1]
  %v2574 = vlaneseq
  %v2575 = vshrl.u32 %v2574, 7
  %v2576 = vsub.s32 0, %v2575
  %v2577 = vrot.slane %v2573, %v2576
  %v2579 = vsel %vm2131, %v2564, 0
  %2581 = vmatprep.subr.mxu0 0.0
  %2582 = vmatpush1.msra.mxu0 %v2565
  %2583 = vmatprep.subr.mxu0 0.0
  %2584 = vmatpush1.msra.mxu0 %v2566
  %2585 = vmatprep.subr.mxu0 0.0
  %2586 = vmatpush1.msra.mxu0 %v2567
  %2587 = vmatprep.subr.mxu0 0.0
  %2588 = vmatpush1.msra.mxu0 %v2568
  %2589 = vmatprep.subr.mxu0 0.0
  %2590 = vmatpush1.msra.mxu0 %v2569
  %2591 = vmatprep.subr.mxu0 0.0
  %2592 = vmatpush1.msra.mxu0 %v2570
  %2593 = vmatprep.subr.mxu0 0.0
  %2594 = vmatpush1.msra.mxu0 %v2571
  %2595 = vmatprep.subr.mxu0 0.0
  %2596 = vmatpush1.msra.mxu0 %v2572
  %2597 = vmatprep.subr.mxu0 0.0
  %2598 = vmatpush1.msra.mxu0 0.0
  %2599 = vmatprep.subr.mxu0 0.0
  %2600 = vmatpush1.msra.mxu0 0.0
  %2601 = vmatprep.subr.mxu0 0.0
  %2602 = vmatpush1.msra.mxu0 0.0
  %2603 = vmatprep.subr.mxu0 0.0
  %2604 = vmatpush1.msra.mxu0 0.0
  %2605 = vmatprep.subr.mxu0 0.0
  %2606 = vmatpush1.msra.mxu0 0.0
  %2607 = vmatprep.subr.mxu0 0.0
  %2608 = vmatpush1.msra.mxu0 0.0
  %2609 = vmatprep.subr.mxu0 0.0
  %2610 = vmatpush1.msra.mxu0 0.0
  %2611 = vmatprep.subr.mxu0 0.0
  %2612 = vmatpush1.msra.mxu0 0.0
  %2613 = vmatprep.subr.mxu0 0.0
  %2614 = vmatpush1.msra.mxu0 0.0
  %2615 = vmatprep.subr.mxu0 0.0
  %2616 = vmatpush1.msra.mxu0 0.0
  %2617 = vmatprep.subr.mxu0 0.0
  %2618 = vmatpush1.msra.mxu0 0.0
  %2619 = vmatprep.subr.mxu0 0.0
  %2620 = vmatpush1.msra.mxu0 0.0
  %2621 = vmatprep.subr.mxu0 0.0
  %2622 = vmatpush1.msra.mxu0 0.0
  %2623 = vmatprep.subr.mxu0 0.0
  %2624 = vmatpush1.msra.mxu0 0.0
  %2625 = vmatprep.subr.mxu0 0.0
  %2626 = vmatpush1.msra.mxu0 0.0
  %2627 = vmatprep.subr.mxu0 0.0
  %2628 = vmatpush1.msra.mxu0 0.0
  %2629 = vmatprep.subr.mxu0 0.0
  %2630 = vmatpush1.msra.mxu0 0.0
  %2631 = vmatprep.subr.mxu0 0.0
  %2632 = vmatpush1.msra.mxu0 0.0
  %2633 = vmatprep.subr.mxu0 0.0
  %2634 = vmatpush1.msra.mxu0 0.0
  %2635 = vmatprep.subr.mxu0 0.0
  %2636 = vmatpush1.msra.mxu0 0.0
  %2637 = vmatprep.subr.mxu0 0.0
  %2638 = vmatpush1.msra.mxu0 0.0
  %2639 = vmatprep.subr.mxu0 0.0
  %2640 = vmatpush1.msra.mxu0 0.0
  %2641 = vmatprep.subr.mxu0 0.0
  %2642 = vmatpush1.msra.mxu0 0.0
  %2643 = vmatprep.subr.mxu0 0.0
  %2644 = vmatpush1.msra.mxu0 0.0
  %2645 = vmatprep.mubr.f32.mxu0 0.0
  %2646 = vmatmul.mubr.f32.gmra.mrb[0].mxu0 %v2579
  %v2647 = vpop.f32.mrb[0].mxu0
  %v2648 = vadd.f32 %v2577, %v2647
  %v2649 = vpop.f32.mrb[0].mxu0
  %2650 = vdwg.mxu0
  %v2651 = vmax.f32 %v2648, 0.0
  %v2652 = vld [vmem:[%s0 + $0xd8] sm:$0xf]
  %v2653 = vld [vmem:[%s0 + $0xe0] sm:$0xf]
  %vm2654 = vcmask 48128
  %v2656 = vsel %vm2654, %v2652, 0
  %vm2658 = vcmask 1045504
  %v2660 = vsel %vm2658, %v655, 0
  %2662 = vmatprep.subr.mxu0 0.0
  %2663 = vmatpush1.msra.mxu0 %v2660
  %2664 = vmatprep.subr.mxu0 0.0
  %2665 = vmatpush1.msra.mxu0 0.0
  %2666 = vmatprep.subr.mxu0 0.0
  %2667 = vmatpush1.msra.mxu0 0.0
  %2668 = vmatprep.subr.mxu0 0.0
  %2669 = vmatpush1.msra.mxu0 0.0
  %2670 = vmatprep.subr.mxu0 0.0
  %2671 = vmatpush1.msra.mxu0 0.0
  %2672 = vmatprep.subr.mxu0 0.0
  %2673 = vmatpush1.msra.mxu0 0.0
  %2674 = vmatprep.subr.mxu0 0.0
  %2675 = vmatpush1.msra.mxu0 0.0
  %2676 = vmatprep.subr.mxu0 0.0
  %2677 = vmatpush1.msra.mxu0 0.0
  %2678 = vmatprep.subr.mxu0 0.0
  %2679 = vmatpush1.msra.mxu0 0.0
  %2680 = vmatprep.subr.mxu0 0.0
  %2681 = vmatpush1.msra.mxu0 0.0
  %2682 = vmatprep.subr.mxu0 0.0
  %2683 = vmatpush1.msra.mxu0 0.0
  %2684 = vmatprep.subr.mxu0 0.0
  %2685 = vmatpush1.msra.mxu0 0.0
  %2686 = vmatprep.subr.mxu0 0.0
  %2687 = vmatpush1.msra.mxu0 0.0
  %2688 = vmatprep.subr.mxu0 0.0
  %2689 = vmatpush1.msra.mxu0 0.0
  %2690 = vmatprep.subr.mxu0 0.0
  %2691 = vmatpush1.msra.mxu0 0.0
  %2692 = vmatprep.subr.mxu0 0.0
  %2693 = vmatpush1.msra.mxu0 0.0
  %2694 = vmatprep.subr.mxu0 0.0
  %2695 = vmatpush1.msra.mxu0 0.0
  %2696 = vmatprep.subr.mxu0 0.0
  %2697 = vmatpush1.msra.mxu0 0.0
  %2698 = vmatprep.subr.mxu0 0.0
  %2699 = vmatpush1.msra.mxu0 0.0
  %2700 = vmatprep.subr.mxu0 0.0
  %2701 = vmatpush1.msra.mxu0 0.0
  %2702 = vmatprep.subr.mxu0 0.0
  %2703 = vmatpush1.msra.mxu0 0.0
  %2704 = vmatprep.subr.mxu0 0.0
  %2705 = vmatpush1.msra.mxu0 0.0
  %2706 = vmatprep.subr.mxu0 0.0
  %2707 = vmatpush1.msra.mxu0 0.0
  %2708 = vmatprep.subr.mxu0 0.0
  %2709 = vmatpush1.msra.mxu0 0.0
  %2710 = vmatprep.subr.mxu0 0.0
  %2711 = vmatpush1.msra.mxu0 0.0
  %2712 = vmatprep.subr.mxu0 0.0
  %2713 = vmatpush1.msra.mxu0 0.0
  %2714 = vmatprep.subr.mxu0 0.0
  %2715 = vmatpush1.msra.mxu0 0.0
  %2716 = vmatprep.subr.mxu0 0.0
  %2717 = vmatpush1.msra.mxu0 0.0
  %2718 = vmatprep.subr.mxu0 0.0
  %2719 = vmatpush1.msra.mxu0 0.0
  %2720 = vmatprep.subr.mxu0 0.0
  %2721 = vmatpush1.msra.mxu0 0.0
  %2722 = vmatprep.subr.mxu0 0.0
  %2723 = vmatpush1.msra.mxu0 0.0
  %2724 = vmatprep.subr.mxu0 0.0
  %2725 = vmatpush1.msra.mxu0 0.0
  %2726 = vmatprep.mubr.f32.mxu0 0.0
  %2727 = vmatmul.mubr.f32.gmra.mrb[0].mxu0 %v2656
  %v2728 = vpop.f32.mrb[0].mxu0
  %v2729 = vadd.f32 0.0, %v2728
  %v2730 = vpop.f32.mrb[0].mxu0
  %2731 = vdwg.mxu0
  %v2733 = vsel %vm2658, %v2387, 0
  %2735 = vmatprep.subr.mxu0 0.0
  %2736 = vmatpush1.msra.mxu0 %v2733
  %2737 = vmatprep.subr.mxu0 0.0
  %2738 = vmatpush1.msra.mxu0 0.0
  %2739 = vmatprep.subr.mxu0 0.0
  %2740 = vmatpush1.msra.mxu0 0.0
  %2741 = vmatprep.subr.mxu0 0.0
  %2742 = vmatpush1.msra.mxu0 0.0
  %2743 = vmatprep.subr.mxu0 0.0
  %2744 = vmatpush1.msra.mxu0 0.0
  %2745 = vmatprep.subr.mxu0 0.0
  %2746 = vmatpush1.msra.mxu0 0.0
  %2747 = vmatprep.subr.mxu0 0.0
  %2748 = vmatpush1.msra.mxu0 0.0
  %2749 = vmatprep.subr.mxu0 0.0
  %2750 = vmatpush1.msra.mxu0 0.0
  %2751 = vmatprep.subr.mxu0 0.0
  %2752 = vmatpush1.msra.mxu0 0.0
  %2753 = vmatprep.subr.mxu0 0.0
  %2754 = vmatpush1.msra.mxu0 0.0
  %2755 = vmatprep.subr.mxu0 0.0
  %2756 = vmatpush1.msra.mxu0 0.0
  %2757 = vmatprep.subr.mxu0 0.0
  %2758 = vmatpush1.msra.mxu0 0.0
  %2759 = vmatprep.subr.mxu0 0.0
  %2760 = vmatpush1.msra.mxu0 0.0
  %2761 = vmatprep.subr.mxu0 0.0
  %2762 = vmatpush1.msra.mxu0 0.0
  %2763 = vmatprep.subr.mxu0 0.0
  %2764 = vmatpush1.msra.mxu0 0.0
  %2765 = vmatprep.subr.mxu0 0.0
  %2766 = vmatpush1.msra.mxu0 0.0
  %2767 = vmatprep.subr.mxu0 0.0
  %2768 = vmatpush1.msra.mxu0 0.0
  %2769 = vmatprep.subr.mxu0 0.0
  %2770 = vmatpush1.msra.mxu0 0.0
  %2771 = vmatprep.subr.mxu0 0.0
  %2772 = vmatpush1.msra.mxu0 0.0
  %2773 = vmatprep.subr.mxu0 0.0
  %2774 = vmatpush1.msra.mxu0 0.0
  %2775 = vmatprep.subr.mxu0 0.0
  %2776 = vmatpush1.msra.mxu0 0.0
  %2777 = vmatprep.subr.mxu0 0.0
  %2778 = vmatpush1.msra.mxu0 0.0
  %2779 = vmatprep.subr.mxu0 0.0
  %2780 = vmatpush1.msra.mxu0 0.0
  %2781 = vmatprep.subr.mxu0 0.0
  %2782 = vmatpush1.msra.mxu0 0.0
  %2783 = vmatprep.subr.mxu0 0.0
  %2784 = vmatpush1.msra.mxu0 0.0
  %2785 = vmatprep.subr.mxu0 0.0
  %2786 = vmatpush1.msra.mxu0 0.0
  %2787 = vmatprep.subr.mxu0 0.0
  %2788 = vmatpush1.msra.mxu0 0.0
  %2789 = vmatprep.subr.mxu0 0.0
  %2790 = vmatpush1.msra.mxu0 0.0
  %2791 = vmatprep.subr.mxu0 0.0
  %2792 = vmatpush1.msra.mxu0 0.0
  %2793 = vmatprep.subr.mxu0 0.0
  %2794 = vmatpush1.msra.mxu0 0.0
  %2795 = vmatprep.subr.mxu0 0.0
  %2796 = vmatpush1.msra.mxu0 0.0
  %2797 = vmatprep.subr.mxu0 0.0
  %2798 = vmatpush1.msra.mxu0 0.0
  %2799 = vmatprep.mubr.f32.mxu0 0.0
  %2800 = vmatmul.mubr.f32.gmra.mrb[0].mxu0 %v2656
  %v2801 = vpop.f32.mrb[0].mxu0
  %v2802 = vadd.f32 0.0, %v2801
  %v2803 = vpop.f32.mrb[0].mxu0
  %2804 = vdwg.mxu0
  %v2806 = vsel %vm2654, %v2653, 0
  %v2809 = vsel %vm2658, %v2026, 0
  %2811 = vmatprep.subr.mxu0 0.0
  %2812 = vmatpush1.msra.mxu0 %v2809
  %2813 = vmatprep.subr.mxu0 0.0
  %2814 = vmatpush1.msra.mxu0 0.0
  %2815 = vmatprep.subr.mxu0 0.0
  %2816 = vmatpush1.msra.mxu0 0.0
  %2817 = vmatprep.subr.mxu0 0.0
  %2818 = vmatpush1.msra.mxu0 0.0
  %2819 = vmatprep.subr.mxu0 0.0
  %2820 = vmatpush1.msra.mxu0 0.0
  %2821 = vmatprep.subr.mxu0 0.0
  %2822 = vmatpush1.msra.mxu0 0.0
  %2823 = vmatprep.subr.mxu0 0.0
  %2824 = vmatpush1.msra.mxu0 0.0
  %2825 = vmatprep.subr.mxu0 0.0
  %2826 = vmatpush1.msra.mxu0 0.0
  %2827 = vmatprep.subr.mxu0 0.0
  %2828 = vmatpush1.msra.mxu0 0.0
  %2829 = vmatprep.subr.mxu0 0.0
  %2830 = vmatpush1.msra.mxu0 0.0
  %2831 = vmatprep.subr.mxu0 0.0
  %2832 = vmatpush1.msra.mxu0 0.0
  %2833 = vmatprep.subr.mxu0 0.0
  %2834 = vmatpush1.msra.mxu0 0.0
  %2835 = vmatprep.subr.mxu0 0.0
  %2836 = vmatpush1.msra.mxu0 0.0
  %2837 = vmatprep.subr.mxu0 0.0
  %2838 = vmatpush1.msra.mxu0 0.0
  %2839 = vmatprep.subr.mxu0 0.0
  %2840 = vmatpush1.msra.mxu0 0.0
  %2841 = vmatprep.subr.mxu0 0.0
  %2842 = vmatpush1.msra.mxu0 0.0
  %2843 = vmatprep.subr.mxu0 0.0
  %2844 = vmatpush1.msra.mxu0 0.0
  %2845 = vmatprep.subr.mxu0 0.0
  %2846 = vmatpush1.msra.mxu0 0.0
  %2847 = vmatprep.subr.mxu0 0.0
  %2848 = vmatpush1.msra.mxu0 0.0
  %2849 = vmatprep.subr.mxu0 0.0
  %2850 = vmatpush1.msra.mxu0 0.0
  %2851 = vmatprep.subr.mxu0 0.0
  %2852 = vmatpush1.msra.mxu0 0.0
  %2853 = vmatprep.subr.mxu0 0.0
  %2854 = vmatpush1.msra.mxu0 0.0
  %2855 = vmatprep.subr.mxu0 0.0
  %2856 = vmatpush1.msra.mxu0 0.0
  %2857 = vmatprep.subr.mxu0 0.0
  %2858 = vmatpush1.msra.mxu0 0.0
  %2859 = vmatprep.subr.mxu0 0.0
  %2860 = vmatpush1.msra.mxu0 0.0
  %2861 = vmatprep.subr.mxu0 0.0
  %2862 = vmatpush1.msra.mxu0 0.0
  %2863 = vmatprep.subr.mxu0 0.0
  %2864 = vmatpush1.msra.mxu0 0.0
  %2865 = vmatprep.subr.mxu0 0.0
  %2866 = vmatpush1.msra.mxu0 0.0
  %2867 = vmatprep.subr.mxu0 0.0
  %2868 = vmatpush1.msra.mxu0 0.0
  %2869 = vmatprep.subr.mxu0 0.0
  %2870 = vmatpush1.msra.mxu0 0.0
  %2871 = vmatprep.subr.mxu0 0.0
  %2872 = vmatpush1.msra.mxu0 0.0
  %2873 = vmatprep.subr.mxu0 0.0
  %2874 = vmatpush1.msra.mxu0 0.0
  %2875 = vmatprep.mubr.f32.mxu0 0.0
  %2876 = vmatmul.mubr.f32.gmra.mrb[0].mxu0 %v2806
  %v2877 = vpop.f32.mrb[0].mxu0
  %v2878 = vadd.f32 0.0, %v2877
  %v2879 = vpop.f32.mrb[0].mxu0
  %2880 = vdwg.mxu0
  %vm2882 = vcmask 1041408
  %v2883 = vrot.slane %v2387, 6
  %v2884 = vrot.slane %v2388, 6
  %v2885 = vsel %vm2882, %v2883, %v2884
  %2886 = vrot.lane.b32.xlu0 %v2885, 96
  %v2887 = vpop.permute.xlu0 %2886
  %v2888 = vsel %vm2658, %v2887, 0
  %2890 = vmatprep.subr.mxu0 0.0
  %2891 = vmatpush1.msra.mxu0 %v2888
  %2892 = vmatprep.subr.mxu0 0.0
  %2893 = vmatpush1.msra.mxu0 0.0
  %2894 = vmatprep.subr.mxu0 0.0
  %2895 = vmatpush1.msra.mxu0 0.0
  %2896 = vmatprep.subr.mxu0 0.0
  %2897 = vmatpush1.msra.mxu0 0.0
  %2898 = vmatprep.subr.mxu0 0.0
  %2899 = vmatpush1.msra.mxu0 0.0
  %2900 = vmatprep.subr.mxu0 0.0
  %2901 = vmatpush1.msra.mxu0 0.0
  %2902 = vmatprep.subr.mxu0 0.0
  %2903 = vmatpush1.msra.mxu0 0.0
  %2904 = vmatprep.subr.mxu0 0.0
  %2905 = vmatpush1.msra.mxu0 0.0
  %2906 = vmatprep.subr.mxu0 0.0
  %2907 = vmatpush1.msra.mxu0 0.0
  %2908 = vmatprep.subr.mxu0 0.0
  %2909 = vmatpush1.msra.mxu0 0.0
  %2910 = vmatprep.subr.mxu0 0.0
  %2911 = vmatpush1.msra.mxu0 0.0
  %2912 = vmatprep.subr.mxu0 0.0
  %2913 = vmatpush1.msra.mxu0 0.0
  %2914 = vmatprep.subr.mxu0 0.0
  %2915 = vmatpush1.msra.mxu0 0.0
  %2916 = vmatprep.subr.mxu0 0.0
  %2917 = vmatpush1.msra.mxu0 0.0
  %2918 = vmatprep.subr.mxu0 0.0
  %2919 = vmatpush1.msra.mxu0 0.0
  %2920 = vmatprep.subr.mxu0 0.0
  %2921 = vmatpush1.msra.mxu0 0.0
  %2922 = vmatprep.subr.mxu0 0.0
  %2923 = vmatpush1.msra.mxu0 0.0
  %2924 = vmatprep.subr.mxu0 0.0
  %2925 = vmatpush1.msra.mxu0 0.0
  %2926 = vmatprep.subr.mxu0 0.0
  %2927 = vmatpush1.msra.mxu0 0.0
  %2928 = vmatprep.subr.mxu0 0.0
  %2929 = vmatpush1.msra.mxu0 0.0
  %2930 = vmatprep.subr.mxu0 0.0
  %2931 = vmatpush1.msra.mxu0 0.0
  %2932 = vmatprep.subr.mxu0 0.0
  %2933 = vmatpush1.msra.mxu0 0.0
  %2934 = vmatprep.subr.mxu0 0.0
  %2935 = vmatpush1.msra.mxu0 0.0
  %2936 = vmatprep.subr.mxu0 0.0
  %2937 = vmatpush1.msra.mxu0 0.0
  %2938 = vmatprep.subr.mxu0 0.0
  %2939 = vmatpush1.msra.mxu0 0.0
  %2940 = vmatprep.subr.mxu0 0.0
  %2941 = vmatpush1.msra.mxu0 0.0
  %2942 = vmatprep.subr.mxu0 0.0
  %2943 = vmatpush1.msra.mxu0 0.0
  %2944 = vmatprep.subr.mxu0 0.0
  %2945 = vmatpush1.msra.mxu0 0.0
  %2946 = vmatprep.subr.mxu0 0.0
  %2947 = vmatpush1.msra.mxu0 0.0
  %2948 = vmatprep.subr.mxu0 0.0
  %2949 = vmatpush1.msra.mxu0 0.0
  %2950 = vmatprep.subr.mxu0 0.0
  %2951 = vmatpush1.msra.mxu0 0.0
  %2952 = vmatprep.subr.mxu0 0.0
  %2953 = vmatpush1.msra.mxu0 0.0
  %2954 = vmatprep.mubr.f32.mxu0 0.0
  %2955 = vmatmul.mubr.f32.gmra.mrb[0].mxu0 %v2806
  %v2956 = vpop.f32.mrb[0].mxu0
  %v2957 = vadd.f32 0.0, %v2956
  %v2958 = vpop.f32.mrb[0].mxu0
  %2959 = vdwg.mxu0
  %2961 = vrot.lane.b32.xlu0 %v2802, 32
  %v2962 = vpop.permute.xlu0 %2961
  %2965 = vrot.lane.b32.xlu0 %v2651, 64
  %v2966 = vpop.permute.xlu0 %2965
  %2969 = vrot.lane.b32.xlu0 %v2878, 96
  %v2970 = vpop.permute.xlu0 %2969
  %v2972 = vrot.slane %v2651, 4
  %v2974 = vsel %vm39, %v2729, %v2962
  %v2975 = vsel %vm2131, %v2974, %v2966
  %vm2976 = vcmask 785408
  %v2977 = vsel %vm2976, %v2975, %v2970
  %v2978 = vsel %vm39, %v2957, %v2972
  %v2979 = vld [vmem:[%s1 + $0x1c8] sm:$0xff]
  %v2980 = vld [vmem:[%s1 + $0x1d0] sm:$0xff]
  %v2981 = vld [vmem:[%s1 + $0x1d8] sm:$0xff]
  %v2982 = vld [vmem:[%s1 + $0x1e0] sm:$0xff]
  %v2983 = vld [vmem:[%s1 + $0x1e8] sm:$0xff]
  %v2984 = vld [vmem:[%s1 + $0x1f0] sm:$0xff]
  %v2985 = vld [vmem:[%s1 + $0x1f8] sm:$0xff]
  %v2986 = vld [vmem:[%s1 + $0x200] sm:$0xff]
  %v2987 = vld [vmem:[%s1 + $0x208] sm:$0xff]
  %v2988 = vld [vmem:[%s1 + $0x210] sm:$0xff]
  %v2989 = vld [vmem:[%s1 + $0x218] sm:$0xff]
  %v2990 = vld [vmem:[%s1 + $0x220] sm:$0xff]
  %v2991 = vld [vmem:[%s1 + $0x228] sm:$0xff]
  %v2992 = vld [vmem:[%s1 + $0x230] sm:$0xff]
  %v2993 = vld [vmem:[%s1 + $0x238] sm:$0xff]
  %v2994 = vld [vmem:[%s1 + $0x240] sm:$0xff]
  %v2995 = vld [vmem:[%s1 + $0x248] sm:$0xff]
  %v2996 = vld [vmem:[%s1 + $0x250] sm:$0xff]
  %v2997 = vld [vmem:[%s1 + $0x258] sm:$0xff]
  %v2998 = vld [vmem:[%s1 + $0x260] sm:$0xff]
  %v2999 = vld [vmem:[%s1 + $0x268] sm:$0xff]
  %v3000 = vld [vmem:[%s1 + $0x270] sm:$0xff]
  %v3001 = vld [vmem:[%s1 + $0x278] sm:$0xff]
  %v3002 = vld [vmem:[%s1 + $0x280] sm:$0xff]
  %v3003 = vld [vmem:[%s1 + $0x288] sm:$0x1]
  %v3004 = vlaneseq
  %v3005 = vshrl.u32 %v3004, 7
  %v3006 = vsub.s32 0, %v3005
  %v3007 = vrot.slane %v3003, %v3006
  %v3009 = vsel %vm2131, %v2978, 0
  %3011 = vmatprep.subr.mxu0 0.0
  %3012 = vmatpush1.msra.mxu0 %v2979
  %3013 = vmatprep.subr.mxu0 0.0
  %3014 = vmatpush1.msra.mxu0 %v2980
  %3015 = vmatprep.subr.mxu0 0.0
  %3016 = vmatpush1.msra.mxu0 %v2981
  %3017 = vmatprep.subr.mxu0 0.0
  %3018 = vmatpush1.msra.mxu0 %v2982
  %3019 = vmatprep.subr.mxu0 0.0
  %3020 = vmatpush1.msra.mxu0 %v2983
  %3021 = vmatprep.subr.mxu0 0.0
  %3022 = vmatpush1.msra.mxu0 %v2984
  %3023 = vmatprep.subr.mxu0 0.0
  %3024 = vmatpush1.msra.mxu0 %v2985
  %3025 = vmatprep.subr.mxu0 0.0
  %3026 = vmatpush1.msra.mxu0 %v2986
  %3027 = vmatprep.subr.mxu0 0.0
  %3028 = vmatpush1.msra.mxu0 %v2987
  %3029 = vmatprep.subr.mxu0 0.0
  %3030 = vmatpush1.msra.mxu0 %v2988
  %3031 = vmatprep.subr.mxu0 0.0
  %3032 = vmatpush1.msra.mxu0 %v2989
  %3033 = vmatprep.subr.mxu0 0.0
  %3034 = vmatpush1.msra.mxu0 %v2990
  %3035 = vmatprep.subr.mxu0 0.0
  %3036 = vmatpush1.msra.mxu0 %v2991
  %3037 = vmatprep.subr.mxu0 0.0
  %3038 = vmatpush1.msra.mxu0 %v2992
  %3039 = vmatprep.subr.mxu0 0.0
  %3040 = vmatpush1.msra.mxu0 %v2993
  %3041 = vmatprep.subr.mxu0 0.0
  %3042 = vmatpush1.msra.mxu0 %v2994
  %3043 = vmatprep.subr.mxu0 0.0
  %3044 = vmatpush1.msra.mxu0 %v2995
  %3045 = vmatprep.subr.mxu0 0.0
  %3046 = vmatpush1.msra.mxu0 %v2996
  %3047 = vmatprep.subr.mxu0 0.0
  %3048 = vmatpush1.msra.mxu0 %v2997
  %3049 = vmatprep.subr.mxu0 0.0
  %3050 = vmatpush1.msra.mxu0 %v2998
  %3051 = vmatprep.subr.mxu0 0.0
  %3052 = vmatpush1.msra.mxu0 %v2999
  %3053 = vmatprep.subr.mxu0 0.0
  %3054 = vmatpush1.msra.mxu0 %v3000
  %3055 = vmatprep.subr.mxu0 0.0
  %3056 = vmatpush1.msra.mxu0 %v3001
  %3057 = vmatprep.subr.mxu0 0.0
  %3058 = vmatpush1.msra.mxu0 %v3002
  %3059 = vmatprep.subr.mxu0 0.0
  %3060 = vmatpush1.msra.mxu0 0.0
  %3061 = vmatprep.subr.mxu0 0.0
  %3062 = vmatpush1.msra.mxu0 0.0
  %3063 = vmatprep.subr.mxu0 0.0
  %3064 = vmatpush1.msra.mxu0 0.0
  %3065 = vmatprep.subr.mxu0 0.0
  %3066 = vmatpush1.msra.mxu0 0.0
  %3067 = vmatprep.subr.mxu0 0.0
  %3068 = vmatpush1.msra.mxu0 0.0
  %3069 = vmatprep.subr.mxu0 0.0
  %3070 = vmatpush1.msra.mxu0 0.0
  %3071 = vmatprep.subr.mxu0 0.0
  %3072 = vmatpush1.msra.mxu0 0.0
  %3073 = vmatprep.subr.mxu0 0.0
  %3074 = vmatpush1.msra.mxu0 0.0
  %3075 = vmatprep.mubr.f32.mxu0 %v3009
  %3076 = vmatmul.mubr.f32.gmra.mrb[0].mxu0 %v2977
  %v3077 = vpop.f32.mrb[0].mxu0
  %v3078 = vadd.f32 %v3007, %v3077
  %v3079 = vpop.f32.mrb[0].mxu0
  %3080 = vdwg.mxu0
  %v3081 = vmax.f32 %v3078, 0.0
  %v3082 = vld [vmem:[%s1 + $0x290] sm:$0xff]
  %v3083 = vld [vmem:[%s1 + $0x298] sm:$0xff]
  %v3084 = vld [vmem:[%s1 + $0x2a0] sm:$0xff]
  %v3085 = vld [vmem:[%s1 + $0x2a8] sm:$0xff]
  %v3086 = vld [vmem:[%s1 + $0x2b0] sm:$0xff]
  %v3087 = vld [vmem:[%s1 + $0x2b8] sm:$0xff]
  %v3088 = vld [vmem:[%s1 + $0x2c0] sm:$0xff]
  %v3089 = vld [vmem:[%s1 + $0x2c8] sm:$0xff]
  %v3090 = vld [vmem:[%s1 + $0x2d0] sm:$0xff]
  %v3091 = vld [vmem:[%s1 + $0x2d8] sm:$0xff]
  %v3092 = vld [vmem:[%s1 + $0x2e0] sm:$0xff]
  %v3093 = vld [vmem:[%s1 + $0x2e8] sm:$0xff]
  %v3094 = vld [vmem:[%s1 + $0x2f0] sm:$0xff]
  %v3095 = vld [vmem:[%s1 + $0x2f8] sm:$0xff]
  %v3096 = vld [vmem:[%s1 + $0x300] sm:$0xff]
  %v3097 = vld [vmem:[%s1 + $0x308] sm:$0xff]
  %v3098 = vld [vmem:[%s1 + $0x310] sm:$0x1]
  %v3099 = vlaneseq
  %v3100 = vshrl.u32 %v3099, 7
  %v3101 = vsub.s32 0, %v3100
  %v3102 = vrot.slane %v3098, %v3101
  %3103 = vmatprep.subr.mxu0 0.0
  %3104 = vmatpush1.msra.mxu0 %v3082
  %3105 = vmatprep.subr.mxu0 0.0
  %3106 = vmatpush1.msra.mxu0 %v3083
  %3107 = vmatprep.subr.mxu0 0.0
  %3108 = vmatpush1.msra.mxu0 %v3084
  %3109 = vmatprep.subr.mxu0 0.0
  %3110 = vmatpush1.msra.mxu0 %v3085
  %3111 = vmatprep.subr.mxu0 0.0
  %3112 = vmatpush1.msra.mxu0 %v3086
  %3113 = vmatprep.subr.mxu0 0.0
  %3114 = vmatpush1.msra.mxu0 %v3087
  %3115 = vmatprep.subr.mxu0 0.0
  %3116 = vmatpush1.msra.mxu0 %v3088
  %3117 = vmatprep.subr.mxu0 0.0
  %3118 = vmatpush1.msra.mxu0 %v3089
  %3119 = vmatprep.subr.mxu0 0.0
  %3120 = vmatpush1.msra.mxu0 %v3090
  %3121 = vmatprep.subr.mxu0 0.0
  %3122 = vmatpush1.msra.mxu0 %v3091
  %3123 = vmatprep.subr.mxu0 0.0
  %3124 = vmatpush1.msra.mxu0 %v3092
  %3125 = vmatprep.subr.mxu0 0.0
  %3126 = vmatpush1.msra.mxu0 %v3093
  %3127 = vmatprep.subr.mxu0 0.0
  %3128 = vmatpush1.msra.mxu0 %v3094
  %3129 = vmatprep.subr.mxu0 0.0
  %3130 = vmatpush1.msra.mxu0 %v3095
  %3131 = vmatprep.subr.mxu0 0.0
  %3132 = vmatpush1.msra.mxu0 %v3096
  %3133 = vmatprep.subr.mxu0 0.0
  %3134 = vmatpush1.msra.mxu0 %v3097
  %3135 = vmatprep.subr.mxu0 0.0
  %3136 = vmatpush1.msra.mxu0 0.0
  %3137 = vmatprep.subr.mxu0 0.0
  %3138 = vmatpush1.msra.mxu0 0.0
  %3139 = vmatprep.subr.mxu0 0.0
  %3140 = vmatpush1.msra.mxu0 0.0
  %3141 = vmatprep.subr.mxu0 0.0
  %3142 = vmatpush1.msra.mxu0 0.0
  %3143 = vmatprep.subr.mxu0 0.0
  %3144 = vmatpush1.msra.mxu0 0.0
  %3145 = vmatprep.subr.mxu0 0.0
  %3146 = vmatpush1.msra.mxu0 0.0
  %3147 = vmatprep.subr.mxu0 0.0
  %3148 = vmatpush1.msra.mxu0 0.0
  %3149 = vmatprep.subr.mxu0 0.0
  %3150 = vmatpush1.msra.mxu0 0.0
  %3151 = vmatprep.subr.mxu0 0.0
  %3152 = vmatpush1.msra.mxu0 0.0
  %3153 = vmatprep.subr.mxu0 0.0
  %3154 = vmatpush1.msra.mxu0 0.0
  %3155 = vmatprep.subr.mxu0 0.0
  %3156 = vmatpush1.msra.mxu0 0.0
  %3157 = vmatprep.subr.mxu0 0.0
  %3158 = vmatpush1.msra.mxu0 0.0
  %3159 = vmatprep.subr.mxu0 0.0
  %3160 = vmatpush1.msra.mxu0 0.0
  %3161 = vmatprep.subr.mxu0 0.0
  %3162 = vmatpush1.msra.mxu0 0.0
  %3163 = vmatprep.subr.mxu0 0.0
  %3164 = vmatpush1.msra.mxu0 0.0
  %3165 = vmatprep.subr.mxu0 0.0
  %3166 = vmatpush1.msra.mxu0 0.0
  %3167 = vmatprep.mubr.f32.mxu0 0.0
  %3168 = vmatmul.mubr.f32.gmra.mrb[0].mxu0 %v3081
  %v3169 = vpop.f32.mrb[0].mxu0
  %v3170 = vadd.f32 %v3102, %v3169
  %v3171 = vpop.f32.mrb[0].mxu0
  %3172 = vdwg.mxu0
  %v3173 = vmax.f32 %v3170, 0.0
  %v3174 = vld [vmem:[%s1 + $0x318] sm:$0xff]
  %v3175 = vld [vmem:[%s1 + $0x320] sm:$0xff]
  %v3176 = vld [vmem:[%s1 + $0x328] sm:$0xff]
  %v3177 = vld [vmem:[%s1 + $0x330] sm:$0xff]
  %v3178 = vld [vmem:[%s1 + $0x338] sm:$0xff]
  %v3179 = vld [vmem:[%s1 + $0x340] sm:$0xff]
  %v3180 = vld [vmem:[%s1 + $0x348] sm:$0xff]
  %v3181 = vld [vmem:[%s1 + $0x350] sm:$0xff]
  %v3182 = vld [vmem:[%s1 + $0x358] sm:$0xff]
  %v3183 = vld [vmem:[%s1 + $0x360] sm:$0xff]
  %v3184 = vld [vmem:[%s1 + $0x368] sm:$0xff]
  %v3185 = vld [vmem:[%s1 + $0x370] sm:$0xff]
  %v3186 = vld [vmem:[%s1 + $0x378] sm:$0xff]
  %v3187 = vld [vmem:[%s1 + $0x380] sm:$0xff]
  %v3188 = vld [vmem:[%s1 + $0x388] sm:$0xff]
  %v3189 = vld [vmem:[%s1 + $0x390] sm:$0xff]
  %v3190 = vld [vmem:[%s1 + $0x398] sm:$0x1]
  %v3191 = vlaneseq
  %v3192 = vshrl.u32 %v3191, 7
  %v3193 = vsub.s32 0, %v3192
  %v3194 = vrot.slane %v3190, %v3193
  %3195 = vmatprep.subr.mxu0 0.0
  %3196 = vmatpush1.msra.mxu0 %v3174
  %3197 = vmatprep.subr.mxu0 0.0
  %3198 = vmatpush1.msra.mxu0 %v3175
  %3199 = vmatprep.subr.mxu0 0.0
  %3200 = vmatpush1.msra.mxu0 %v3176
  %3201 = vmatprep.subr.mxu0 0.0
  %3202 = vmatpush1.msra.mxu0 %v3177
  %3203 = vmatprep.subr.mxu0 0.0
  %3204 = vmatpush1.msra.mxu0 %v3178
  %3205 = vmatprep.subr.mxu0 0.0
  %3206 = vmatpush1.msra.mxu0 %v3179
  %3207 = vmatprep.subr.mxu0 0.0
  %3208 = vmatpush1.msra.mxu0 %v3180
  %3209 = vmatprep.subr.mxu0 0.0
  %3210 = vmatpush1.msra.mxu0 %v3181
  %3211 = vmatprep.subr.mxu0 0.0
  %3212 = vmatpush1.msra.mxu0 %v3182
  %3213 = vmatprep.subr.mxu0 0.0
  %3214 = vmatpush1.msra.mxu0 %v3183
  %3215 = vmatprep.subr.mxu0 0.0
  %3216 = vmatpush1.msra.mxu0 %v3184
  %3217 = vmatprep.subr.mxu0 0.0
  %3218 = vmatpush1.msra.mxu0 %v3185
  %3219 = vmatprep.subr.mxu0 0.0
  %3220 = vmatpush1.msra.mxu0 %v3186
  %3221 = vmatprep.subr.mxu0 0.0
  %3222 = vmatpush1.msra.mxu0 %v3187
  %3223 = vmatprep.subr.mxu0 0.0
  %3224 = vmatpush1.msra.mxu0 %v3188
  %3225 = vmatprep.subr.mxu0 0.0
  %3226 = vmatpush1.msra.mxu0 %v3189
  %3227 = vmatprep.subr.mxu0 0.0
  %3228 = vmatpush1.msra.mxu0 0.0
  %3229 = vmatprep.subr.mxu0 0.0
  %3230 = vmatpush1.msra.mxu0 0.0
  %3231 = vmatprep.subr.mxu0 0.0
  %3232 = vmatpush1.msra.mxu0 0.0
  %3233 = vmatprep.subr.mxu0 0.0
  %3234 = vmatpush1.msra.mxu0 0.0
  %3235 = vmatprep.subr.mxu0 0.0
  %3236 = vmatpush1.msra.mxu0 0.0
  %3237 = vmatprep.subr.mxu0 0.0
  %3238 = vmatpush1.msra.mxu0 0.0
  %3239 = vmatprep.subr.mxu0 0.0
  %3240 = vmatpush1.msra.mxu0 0.0
  %3241 = vmatprep.subr.mxu0 0.0
  %3242 = vmatpush1.msra.mxu0 0.0
  %3243 = vmatprep.subr.mxu0 0.0
  %3244 = vmatpush1.msra.mxu0 0.0
  %3245 = vmatprep.subr.mxu0 0.0
  %3246 = vmatpush1.msra.mxu0 0.0
  %3247 = vmatprep.subr.mxu0 0.0
  %3248 = vmatpush1.msra.mxu0 0.0
  %3249 = vmatprep.subr.mxu0 0.0
  %3250 = vmatpush1.msra.mxu0 0.0
  %3251 = vmatprep.subr.mxu0 0.0
  %3252 = vmatpush1.msra.mxu0 0.0
  %3253 = vmatprep.subr.mxu0 0.0
  %3254 = vmatpush1.msra.mxu0 0.0
  %3255 = vmatprep.subr.mxu0 0.0
  %3256 = vmatpush1.msra.mxu0 0.0
  %3257 = vmatprep.subr.mxu0 0.0
  %3258 = vmatpush1.msra.mxu0 0.0
  %3259 = vmatprep.mubr.f32.mxu0 0.0
  %3260 = vmatmul.mubr.f32.gmra.mrb[0].mxu0 %v3173
  %v3261 = vpop.f32.mrb[0].mxu0
  %v3262 = vadd.f32 %v3194, %v3261
  %v3263 = vpop.f32.mrb[0].mxu0
  %3264 = vdwg.mxu0
  %v3265 = vmax.f32 %v3262, 0.0
  %v3266 = vld [vmem:[%s1 + $0x3a0] sm:$0xff]
  %v3267 = vld [vmem:[%s1 + $0x3a8] sm:$0xff]
  %v3268 = vld [vmem:[%s1 + $0x3b0] sm:$0xff]
  %v3269 = vld [vmem:[%s1 + $0x3b8] sm:$0xff]
  %v3270 = vld [vmem:[%s1 + $0x3c0] sm:$0xff]
  %v3271 = vld [vmem:[%s1 + $0x3c8] sm:$0xff]
  %v3272 = vld [vmem:[%s1 + $0x3d0] sm:$0xff]
  %v3273 = vld [vmem:[%s1 + $0x3d8] sm:$0xff]
  %v3274 = vld [vmem:[%s1 + $0x3e0] sm:$0xff]
  %v3275 = vld [vmem:[%s1 + $0x3e8] sm:$0xff]
  %v3276 = vld [vmem:[%s1 + $0x3f0] sm:$0xff]
  %v3277 = vld [vmem:[%s1 + $0x3f8] sm:$0xff]
  %v3278 = vld [vmem:[%s1 + $0x400] sm:$0xff]
  %v3279 = vld [vmem:[%s1 + $0x408] sm:$0xff]
  %v3280 = vld [vmem:[%s1 + $0x410] sm:$0xff]
  %v3281 = vld [vmem:[%s1 + $0x418] sm:$0xff]
  %v3282 = vld [vmem:[%s1 + $0x420] sm:$0x1]
  %v3283 = vlaneseq
  %v3284 = vshrl.u32 %v3283, 7
  %v3285 = vsub.s32 0, %v3284
  %v3286 = vrot.slane %v3282, %v3285
  %3287 = vmatprep.subr.mxu0 0.0
  %3288 = vmatpush1.msra.mxu0 %v3266
  %3289 = vmatprep.subr.mxu0 0.0
  %3290 = vmatpush1.msra.mxu0 %v3267
  %3291 = vmatprep.subr.mxu0 0.0
  %3292 = vmatpush1.msra.mxu0 %v3268
  %3293 = vmatprep.subr.mxu0 0.0
  %3294 = vmatpush1.msra.mxu0 %v3269
  %3295 = vmatprep.subr.mxu0 0.0
  %3296 = vmatpush1.msra.mxu0 %v3270
  %3297 = vmatprep.subr.mxu0 0.0
  %3298 = vmatpush1.msra.mxu0 %v3271
  %3299 = vmatprep.subr.mxu0 0.0
  %3300 = vmatpush1.msra.mxu0 %v3272
  %3301 = vmatprep.subr.mxu0 0.0
  %3302 = vmatpush1.msra.mxu0 %v3273
  %3303 = vmatprep.subr.mxu0 0.0
  %3304 = vmatpush1.msra.mxu0 %v3274
  %3305 = vmatprep.subr.mxu0 0.0
  %3306 = vmatpush1.msra.mxu0 %v3275
  %3307 = vmatprep.subr.mxu0 0.0
  %3308 = vmatpush1.msra.mxu0 %v3276
  %3309 = vmatprep.subr.mxu0 0.0
  %3310 = vmatpush1.msra.mxu0 %v3277
  %3311 = vmatprep.subr.mxu0 0.0
  %3312 = vmatpush1.msra.mxu0 %v3278
  %3313 = vmatprep.subr.mxu0 0.0
  %3314 = vmatpush1.msra.mxu0 %v3279
  %3315 = vmatprep.subr.mxu0 0.0
  %3316 = vmatpush1.msra.mxu0 %v3280
  %3317 = vmatprep.subr.mxu0 0.0
  %3318 = vmatpush1.msra.mxu0 %v3281
  %3319 = vmatprep.subr.mxu0 0.0
  %3320 = vmatpush1.msra.mxu0 0.0
  %3321 = vmatprep.subr.mxu0 0.0
  %3322 = vmatpush1.msra.mxu0 0.0
  %3323 = vmatprep.subr.mxu0 0.0
  %3324 = vmatpush1.msra.mxu0 0.0
  %3325 = vmatprep.subr.mxu0 0.0
  %3326 = vmatpush1.msra.mxu0 0.0
  %3327 = vmatprep.subr.mxu0 0.0
  %3328 = vmatpush1.msra.mxu0 0.0
  %3329 = vmatprep.subr.mxu0 0.0
  %3330 = vmatpush1.msra.mxu0 0.0
  %3331 = vmatprep.subr.mxu0 0.0
  %3332 = vmatpush1.msra.mxu0 0.0
  %3333 = vmatprep.subr.mxu0 0.0
  %3334 = vmatpush1.msra.mxu0 0.0
  %3335 = vmatprep.subr.mxu0 0.0
  %3336 = vmatpush1.msra.mxu0 0.0
  %3337 = vmatprep.subr.mxu0 0.0
  %3338 = vmatpush1.msra.mxu0 0.0
  %3339 = vmatprep.subr.mxu0 0.0
  %3340 = vmatpush1.msra.mxu0 0.0
  %3341 = vmatprep.subr.mxu0 0.0
  %3342 = vmatpush1.msra.mxu0 0.0
  %3343 = vmatprep.subr.mxu0 0.0
  %3344 = vmatpush1.msra.mxu0 0.0
  %3345 = vmatprep.subr.mxu0 0.0
  %3346 = vmatpush1.msra.mxu0 0.0
  %3347 = vmatprep.subr.mxu0 0.0
  %3348 = vmatpush1.msra.mxu0 0.0
  %3349 = vmatprep.subr.mxu0 0.0
  %3350 = vmatpush1.msra.mxu0 0.0
  %3351 = vmatprep.mubr.f32.mxu0 0.0
  %3352 = vmatmul.mubr.f32.gmra.mrb[0].mxu0 %v3265
  %v3353 = vpop.f32.mrb[0].mxu0
  %v3354 = vadd.f32 %v3286, %v3353
  %v3355 = vpop.f32.mrb[0].mxu0
  %3356 = vdwg.mxu0
  %v3357 = vsub.f32 0.0, %v3354
  %v3358 = vmul.f32 %v3357, 1.442695
  %v3359 = vpow.pop %v3358
  %v3360 = vadd.f32 %v3359, 1.0
  %v3361 = vrcp.pop %v3360
  %v3362 = vmul.f32 1.0, %v3361
  %vm3363 = vcmask 11264
  %3364 = vst.msk [vmem:[%s3] sm:$0xf] %vm3363, %v3362
  // Predicated region
  $region14: #{deepera_forward.1} parent=0 // pred_check
    _
  $region15: #{deepera_forward.1} parent=0 // pred_check_branch
    %3366 = sbr.rel (0) target = $region17
  $region16: #{deepera_forward.1} parent=0 // pred_region
    _
  $region17: #{deepera_forward.1} parent=0 // pred_fallthru
    _
  // Predicated region
  $region18: #{deepera_forward.1} parent=0 // pred_check
    _
  $region19: #{deepera_forward.1} parent=0 // pred_check_branch
    %3368 = sbr.rel (0) target = $region21
  $region20: #{deepera_forward.1} parent=0 // pred_region
    _
  $region21: #{deepera_forward.1} parent=0 // pred_fallthru
    _

</llo_original>
